<compile_context>
chip_gen: v7x
topology: tpu7x:2x2x1
jax: 0.10.0
libtpu: 0.0.40
codegen_flags: <defaults>
</compile_context>

<pallas_src>
import functools
import math

import jax
import jax.numpy as jnp
from jax import lax
from jax.experimental import pallas as pl
from jax.experimental.pallas import tpu as pltpu

EPS = 1e-5
LANE = 128                      # pad channel dims to a multiple of this
MXU_DTYPE = jnp.bfloat16        # MXU operand dtype (f32 accumulation kept)
VMEM_LIMIT = 32 * 1024 * 1024   # explicit scoped-VMEM budget (fits v5e/v6e/v7x)
TM_ROWS = 1024                  # row tile for the elementwise epilogue passes


# ----------------------------------------------------------------------------
# Pallas kernels
# ----------------------------------------------------------------------------

def _make_conv_kernel(stride, ho, wo, has_proj):
    """3x3 conv (pad=1) on one NHWC image + per-image BN sum/sum_sq stats.

    The conv is 9 accumulating MXU matmuls over shifted taps of the
    (spatially pre-padded, phase-decomposed) input block -- no im2col array
    is ever materialized.  If `has_proj`, the 1x1 projection-shortcut matmul
    is fused in (it reuses the already-loaded center tap).
    """
    nph = stride * stride
    m_img = ho * wo

    def kernel(*refs):
        phase_refs = refs[:nph]
        w_ref = refs[nph]                                   # (9, Cin_p, Cout_p)
        if has_proj:
            ws_ref = refs[nph + 1]                          # (Cin_p, Cout_p)
            h_ref, st_ref, r_ref, sts_ref = refs[nph + 2:]
        else:
            h_ref, st_ref = refs[nph + 1:]

        acc = None
        center = None
        for kh in range(3):
            for kw in range(3):
                ph, pw = kh % stride, kw % stride
                oh, ow = kh // stride, kw // stride
                tap = phase_refs[ph * stride + pw][oh:oh + ho, ow:ow + wo, :]
                tap = tap.reshape(m_img, tap.shape[-1]).astype(MXU_DTYPE)
                if has_proj and kh == 1 and kw == 1:
                    center = tap          # == strided x: the 1x1-conv input
                d = jnp.dot(tap, w_ref[kh * 3 + kw],
                            preferred_element_type=jnp.float32)
                acc = d if acc is None else acc + d

        h_ref[...] = acc
        st_ref[...] = jnp.concatenate(
            [jnp.sum(acc, axis=0, keepdims=True),
             jnp.sum(acc * acc, axis=0, keepdims=True)], axis=0)

        if has_proj:
            r = jnp.dot(center, ws_ref[...],
                        preferred_element_type=jnp.float32)
            r_ref[...] = r
            sts_ref[...] = jnp.concatenate(
                [jnp.sum(r, axis=0, keepdims=True),
                 jnp.sum(r * r, axis=0, keepdims=True)], axis=0)

    return kernel


def _bn_relu_kernel(h_ref, ac_ref, o_ref):
    # Folded BN as one FMA (a = g*rsqrt(var+eps), c = b - mean*a) + ReLU.
    o_ref[...] = jnp.maximum(h_ref[...] * ac_ref[0:1, :] + ac_ref[1:2, :], 0.0)


def _bn_add_relu_id_kernel(h_ref, ac_ref, res_ref, o_ref):
    # Folded BN2 + identity-shortcut add + ReLU.
    o_ref[...] = jnp.maximum(
        h_ref[...] * ac_ref[0:1, :] + ac_ref[1:2, :] + res_ref[...], 0.0)


def _bn_add_relu_proj_kernel(h_ref, ac_ref, r_ref, acs_ref, o_ref):
    # Folded BN2 + folded shortcut-BN + residual add + ReLU.
    y = h_ref[...] * ac_ref[0:1, :] + ac_ref[1:2, :]
    y = y + r_ref[...] * acs_ref[0:1, :] + acs_ref[1:2, :]
    o_ref[...] = jnp.maximum(y, 0.0)


# ----------------------------------------------------------------------------
# pallas_call wrappers
# ----------------------------------------------------------------------------

def _conv_bn_stats(phases, w9, ws_mat, stride, ho, wo):
    """Conv+stats kernel over a (batch,) grid; weights stay resident in VMEM."""
    n = phases[0].shape[0]
    m_img = ho * wo
    kdim = w9.shape[1]
    cop = w9.shape[-1]
    has_proj = ws_mat is not None

    in_specs = [pl.BlockSpec((None,) + tuple(p.shape[1:]),
                             lambda i: (i, 0, 0, 0)) for p in phases]
    in_specs.append(pl.BlockSpec(tuple(w9.shape), lambda i: (0, 0, 0)))
    inputs = list(phases) + [w9]

    out_shapes = [jax.ShapeDtypeStruct((n, m_img, cop), jnp.float32),
                  jax.ShapeDtypeStruct((n, 2, cop), jnp.float32)]
    out_specs = [pl.BlockSpec((None, m_img, cop), lambda i: (i, 0, 0)),
                 pl.BlockSpec((None, 2, cop), lambda i: (i, 0, 0))]

    flops = 2 * n * m_img * 9 * kdim * cop
    if has_proj:
        csp = ws_mat.shape[-1]
        in_specs.append(pl.BlockSpec(tuple(ws_mat.shape), lambda i: (0, 0)))
        inputs.append(ws_mat)
        out_shapes += [jax.ShapeDtypeStruct((n, m_img, csp), jnp.float32),
                       jax.ShapeDtypeStruct((n, 2, csp), jnp.float32)]
        out_specs += [pl.BlockSpec((None, m_img, csp), lambda i: (i, 0, 0)),
                      pl.BlockSpec((None, 2, csp), lambda i: (i, 0, 0))]
        flops += 2 * n * m_img * ws_mat.shape[0] * csp

    in_bytes = sum(int(a.size) * a.dtype.itemsize for a in inputs)
    out_bytes = sum(4 * math.prod(s.shape) for s in out_shapes)

    return pl.pallas_call(
        _make_conv_kernel(stride, ho, wo, has_proj),
        grid=(n,),
        in_specs=in_specs,
        out_specs=tuple(out_specs),
        out_shape=tuple(out_shapes),
        compiler_params=pltpu.CompilerParams(
            dimension_semantics=("parallel",),
            vmem_limit_bytes=VMEM_LIMIT),
        cost_estimate=pl.CostEstimate(flops=int(flops), transcendentals=0,
                                      bytes_accessed=int(in_bytes + out_bytes)),
    )(*inputs)


def _tiled_epilogue(kernel, args, m, c):
    """Tiled lane-dense elementwise epilogue over (m, c).

    args: list of (array, resident?).  Big (m, c) slabs get (TM, c) row tiles;
    tiny (2, c) folded-BN vectors stay resident across the grid.
    """
    tm = min(TM_ROWS, m)
    in_specs = []
    for arr, resident in args:
        if resident:
            in_specs.append(pl.BlockSpec(tuple(arr.shape), lambda i: (0, 0)))
        else:
            in_specs.append(pl.BlockSpec((tm, c), lambda i: (i, 0)))
    in_bytes = sum(int(a.size) * a.dtype.itemsize for a, _ in args)
    return pl.pallas_call(
        kernel,
        grid=(pl.cdiv(m, tm),),
        in_specs=in_specs,
        out_specs=pl.BlockSpec((tm, c), lambda i: (i, 0)),
        out_shape=jax.ShapeDtypeStruct((m, c), jnp.float32),
        compiler_params=pltpu.CompilerParams(
            dimension_semantics=("parallel",),
            vmem_limit_bytes=VMEM_LIMIT),
        cost_estimate=pl.CostEstimate(flops=4 * m * c, transcendentals=0,
                                      bytes_accessed=int(in_bytes + 4 * m * c)),
    )(*[a for a, _ in args])


# ----------------------------------------------------------------------------
# Layout glue (padding / stride phases) + tiny O(C) BN finalize
# ----------------------------------------------------------------------------

def _rup(x, m=LANE):
    return ((x + m - 1) // m) * m


def _pad_last(a, size):
    pad = [(0, 0)] * a.ndim
    pad[-1] = (0, size - a.shape[-1])
    return jnp.pad(a, pad)


def _pad_w3x3(w, cinp, coutp):
    w = jnp.pad(w, ((0, 0), (0, 0),
                    (0, cinp - w.shape[2]), (0, coutp - w.shape[3])))
    return w.reshape(9, cinp, coutp)


def _pad_w1x1(w, cinp, coutp):
    return jnp.pad(w, ((0, cinp - w.shape[0]), (0, coutp - w.shape[1])))


def _bn_fold(stats_per_img, g, b, count):
    # stats_per_img: (N, 2, C) per-image [sum, sum_sq].  Tiny O(C) finalize:
    # fold BN into one FMA (a = g*rsqrt(var+eps), c = b - mean*a).
    s = jnp.sum(stats_per_img, axis=0)
    mean = s[0] / count
    var = jnp.maximum(s[1] / count - mean * mean, 0.0)
    a = g * lax.rsqrt(var + EPS)
    return jnp.stack([a, b - mean * a], axis=0)            # (2, C)


# ----------------------------------------------------------------------------
# ResidualBlock forward
# ----------------------------------------------------------------------------

@functools.partial(jax.jit, static_argnums=(2,))
def residual_block(x_nchw, params, stride):
    x = jnp.transpose(x_nchw, (0, 2, 3, 1)).astype(jnp.float32)  # NCHW -> NHWC
    n, h, w, cin = x.shape
    w1, g1, b1 = params["w1"], params["g1"], params["b1"]
    w2, g2, b2 = params["w2"], params["g2"], params["b2"]
    cmid, cout = w1.shape[-1], w2.shape[-1]
    has_proj = (stride != 1) or (cin != cout)

    cinp, cmidp, coutp = _rup(cin), _rup(cmid), _rup(cout)
    ho = (h - 1) // stride + 1
    wo = (w - 1) // stride + 1
    mtot = n * ho * wo

    # layout glue: lane-dense channel pad, zero halo, stride -> s*s phases
    # (the phases together hold x exactly once -- no 9x im2col blow-up).
    x_cp = _pad_last(x, cinp)
    xp = jnp.pad(x_cp, ((0, 0), (1, 1), (1, 1), (0, 0)))
    phases1 = [xp[:, ph::stride, pw::stride, :]
               for ph in range(stride) for pw in range(stride)]

    w1p = _pad_w3x3(w1, cinp, cmidp).astype(MXU_DTYPE)
    w2p = _pad_w3x3(w2, cmidp, coutp).astype(MXU_DTYPE)
    wsp = (_pad_w1x1(params["ws"], cinp, coutp).astype(MXU_DTYPE)
           if has_proj else None)

    # -- pass 1: conv1 + BN1 stats (+ fused 1x1 shortcut conv + its stats) --
    # TODO(synk): for very large feature maps, additionally tile this grid
    # over output-row blocks (with halo) instead of whole images per step.
    outs = _conv_bn_stats(phases1, w1p, wsp, stride, ho, wo)
    if has_proj:
        h1_raw, st1, r_raw, sts = outs
    else:
        h1_raw, st1 = outs

    # -- pass 2: y1 = relu(bn1(conv1)) as a single FMA, tiled over M --
    ac1 = _bn_fold(st1, _pad_last(g1, cmidp), _pad_last(b1, cmidp), mtot)
    h1 = _tiled_epilogue(_bn_relu_kernel,
                         [(h1_raw.reshape(mtot, cmidp), False), (ac1, True)],
                         mtot, cmidp)

    # -- pass 3: conv2 (stride 1) + BN2 stats --
    h1p = jnp.pad(h1.reshape(n, ho, wo, cmidp),
                  ((0, 0), (1, 1), (1, 1), (0, 0)))        # zero halo (glue)
    h2_raw, st2 = _conv_bn_stats([h1p], w2p, None, 1, ho, wo)
    ac2 = _bn_fold(st2, _pad_last(g2, coutp), _pad_last(b2, coutp), mtot)

    # -- pass 4: out = relu(bn2(conv2) + shortcut), tiled over M --
    if has_proj:
        acs = _bn_fold(sts, _pad_last(params["gs"], coutp),
                       _pad_last(params["bs"], coutp), mtot)
        out2d = _tiled_epilogue(
            _bn_add_relu_proj_kernel,
            [(h2_raw.reshape(mtot, coutp), False), (ac2, True),
             (r_raw.reshape(mtot, coutp), False), (acs, True)],
            mtot, coutp)
    else:
        out2d = _tiled_epilogue(
            _bn_add_relu_id_kernel,
            [(h2_raw.reshape(mtot, coutp), False), (ac2, True),
             (x_cp.reshape(mtot, coutp), False)],
            mtot, coutp)

    out = out2d.reshape(n, ho, wo, coutp)[..., :cout]
    return jnp.transpose(out, (0, 3, 1, 2))                # back to NCHW


# ----------------------------------------------------------------------------
# Pure-JAX reference (for self-check)
# ----------------------------------------------------------------------------

def ref_residual_block(x_nchw, params, stride, cast_dtype=None):
    """Reference.  If cast_dtype is set, conv operands are rounded to that
    dtype first (matching the kernel's bf16 MXU operands, f32 accumulation)."""
    x = jnp.transpose(x_nchw, (0, 2, 3, 1)).astype(jnp.float32)

    def qc(a):
        return a.astype(cast_dtype).astype(jnp.float32) if cast_dtype else a

    def conv(a, wgt, s, pad):
        return lax.conv_general_dilated(
            qc(a), qc(wgt), (s, s), [(pad, pad), (pad, pad)],
            dimension_numbers=("NHWC", "HWIO", "NHWC"),
            precision=lax.Precision.HIGHEST)

    def bn(a, g, b):
        mean = a.mean(axis=(0, 1, 2), keepdims=True)
        var = ((a - mean) ** 2).mean(axis=(0, 1, 2), keepdims=True)
        return (a - mean) / jnp.sqrt(var + EPS) * g + b

    cin, cout = x.shape[-1], params["w2"].shape[-1]
    hh = jax.nn.relu(bn(conv(x, params["w1"], stride, 1),
                        params["g1"], params["b1"]))
    hh = bn(conv(hh, params["w2"], 1, 1), params["g2"], params["b2"])
    if stride != 1 or cin != cout:
        r = bn(conv(x, params["ws"].reshape(1, 1, cin, cout), stride, 0),
               params["gs"], params["bs"])
    else:
        r = x
    return jnp.transpose(jax.nn.relu(hh + r), (0, 3, 1, 2))


# ----------------------------------------------------------------------------
# Deterministic parameter init
# ----------------------------------------------------------------------------

def init_params(key, cin, cout, stride):
    ks = jax.random.split(key, 9)
    s1 = 1.0 / (9 * cin) ** 0.5
    s2 = 1.0 / (9 * cout) ** 0.5
    params = {
        "w1": jax.random.uniform(ks[0], (3, 3, cin, cout), jnp.float32, -s1, s1),
        "g1": jax.random.uniform(ks[1], (cout,), jnp.float32, 0.5, 1.5),
        "b1": jax.random.normal(ks[2], (cout,), jnp.float32) * 0.1,
        "w2": jax.random.uniform(ks[3], (3, 3, cout, cout), jnp.float32, -s2, s2),
        "g2": jax.random.uniform(ks[4], (cout,), jnp.float32, 0.5, 1.5),
        "b2": jax.random.normal(ks[5], (cout,), jnp.float32) * 0.1,
    }
    if stride != 1 or cin != cout:
        ss = 1.0 / cin ** 0.5
        params["ws"] = jax.random.uniform(ks[6], (cin, cout), jnp.float32, -ss, ss)
        params["gs"] = jax.random.uniform(ks[7], (cout,), jnp.float32, 0.5, 1.5)
        params["bs"] = jax.random.normal(ks[8], (cout,), jnp.float32) * 0.1
    return params
    # TODO(synk): BatchNorm2d running_mean/running_var buffer updates are a
    # training-time side effect with no output-visible effect; not reproduced.


if __name__ == "__main__":
    key = jax.random.PRNGKey(0)
    k_x, k_p, k_x2, k_p2 = jax.random.split(key, 4)

    # Case 1: projection shortcut (stride 2, channel change).
    N, CIN, COUT, H, W, STRIDE = 2, 4, 8, 16, 16, 2
    x = jax.random.normal(k_x, (N, CIN, H, W), jnp.float32)
    params = init_params(k_p, CIN, COUT, STRIDE)

    out = jax.block_until_ready(residual_block(x, params, STRIDE))
    assert out.shape == (N, COUT, H // STRIDE, W // STRIDE)
    # Tight check vs a reference that matches the kernel's bf16 MXU operands.
    ref_m = ref_residual_block(x, params, STRIDE, cast_dtype=MXU_DTYPE)
    assert jnp.allclose(out, ref_m, atol=1e-2, rtol=1e-2), (
        float(jnp.max(jnp.abs(out - ref_m))))
    # Loose sanity check vs exact-f32 math (slack covers bf16 quantization).
    ref_f = ref_residual_block(x, params, STRIDE)
    assert jnp.allclose(out, ref_f, atol=7e-2, rtol=7e-2), (
        float(jnp.max(jnp.abs(out - ref_f))))

    # Case 2: identity shortcut (stride 1, same channels).
    N2, C2, H2, W2 = 2, 8, 16, 16
    x2 = jax.random.normal(k_x2, (N2, C2, H2, W2), jnp.float32)
    params2 = init_params(k_p2, C2, C2, 1)

    out2 = jax.block_until_ready(residual_block(x2, params2, 1))
    assert out2.shape == (N2, C2, H2, W2)
    ref2_m = ref_residual_block(x2, params2, 1, cast_dtype=MXU_DTYPE)
    assert jnp.allclose(out2, ref2_m, atol=1e-2, rtol=1e-2), (
        float(jnp.max(jnp.abs(out2 - ref2_m))))
    ref2_f = ref_residual_block(x2, params2, 1)
    assert jnp.allclose(out2, ref2_f, atol=7e-2, rtol=7e-2), (
        float(jnp.max(jnp.abs(out2 - ref2_f))))

    print("KERNEL_OK")
</pallas_src>

<mosaic_0001>
module attributes {stable_mosaic.version = 11 : i64} {
  func.func @_bn_relu_kernel(%arg0: i32, %arg1: memref<128x128xf32, #tpu.memory_space<vmem>>, %arg2: memref<2x128xf32, #tpu.memory_space<vmem>>, %arg3: memref<128x128xf32, #tpu.memory_space<vmem>>) attributes {dimension_semantics = [#tpu.dimension_semantics<parallel>], iteration_bounds = array<i64: 1>, scalar_prefetch = 0 : i64, scratch_operands = 0 : i64, tpu.core_type = #tpu.core_type<tc>, window_params = [{transform_indices = @transform_0, window_bounds = array<i64: 128, 128>}, {pipeline_mode = #tpu.pipeline_mode<synchronous>, transform_indices = @transform_1, window_bounds = array<i64: 2, 128>}, {transform_indices = @transform_2, window_bounds = array<i64: 128, 128>}]} {
    %c0 = arith.constant 0 : index
    %c0_0 = arith.constant 0 : index
    %0 = vector.load %arg1[%c0, %c0_0] : memref<128x128xf32, #tpu.memory_space<vmem>>, vector<128x128xf32>
    %c0_1 = arith.constant 0 : index
    %c0_2 = arith.constant 0 : index
    %1 = vector.load %arg2[%c0_1, %c0_2] : memref<2x128xf32, #tpu.memory_space<vmem>>, vector<1x128xf32>
    %2 = vector.broadcast %1 : vector<1x128xf32> to vector<128x128xf32>
    %3 = arith.mulf %0, %2 : vector<128x128xf32>
    %c1 = arith.constant 1 : index
    %c0_3 = arith.constant 0 : index
    %4 = vector.load %arg2[%c1, %c0_3] : memref<2x128xf32, #tpu.memory_space<vmem>>, vector<1x128xf32>
    %5 = vector.broadcast %4 : vector<1x128xf32> to vector<128x128xf32>
    %6 = arith.addf %3, %5 : vector<128x128xf32>
    %cst = arith.constant 0.000000e+00 : f32
    %7 = vector.broadcast %cst : f32 to vector<128x128xf32>
    %8 = arith.maximumf %6, %7 : vector<128x128xf32>
    %c0_4 = arith.constant 0 : index
    %c0_5 = arith.constant 0 : index
    %9 = vector.load %arg3[%c0_4, %c0_5] : memref<128x128xf32, #tpu.memory_space<vmem>>, vector<128x128xf32>
    tpu.vector_store %arg3[%c0_4, %c0_5], %8 {strides = array<i32>} : memref<128x128xf32, #tpu.memory_space<vmem>>, vector<128x128xf32>,
    return
  }
  func.func @transform_0(%arg0: i32) -> (i32, i32) {
    %c0_i32 = arith.constant 0 : i32
    %c0_i32_0 = arith.constant 0 : i32
    return %arg0, %c0_i32 : i32, i32
  }
  func.func @transform_1(%arg0: i32) -> (i32, i32) {
    %c0_i32 = arith.constant 0 : i32
    %c0_i32_0 = arith.constant 0 : i32
    %c0_i32_1 = arith.constant 0 : i32
    return %c0_i32, %c0_i32_0 : i32, i32
  }
  func.func @transform_2(%arg0: i32) -> (i32, i32) {
    %c0_i32 = arith.constant 0 : i32
    %c0_i32_0 = arith.constant 0 : i32
    return %arg0, %c0_i32 : i32, i32
  }
}

module attributes {stable_mosaic.version = 11 : i64} {
  func.func @kernel(%arg0: i32, %arg1: memref<1x9x9x128xf32, #tpu.memory_space<vmem>>, %arg2: memref<1x9x9x128xf32, #tpu.memory_space<vmem>>, %arg3: memref<1x9x9x128xf32, #tpu.memory_space<vmem>>, %arg4: memref<1x9x9x128xf32, #tpu.memory_space<vmem>>, %arg5: memref<9x128x128xbf16, #tpu.memory_space<vmem>>, %arg6: memref<128x128xbf16, #tpu.memory_space<vmem>>, %arg7: memref<1x64x128xf32, #tpu.memory_space<vmem>>, %arg8: memref<1x2x128xf32, #tpu.memory_space<vmem>>, %arg9: memref<1x64x128xf32, #tpu.memory_space<vmem>>, %arg10: memref<1x2x128xf32, #tpu.memory_space<vmem>>) attributes {dimension_semantics = [#tpu.dimension_semantics<parallel>], iteration_bounds = array<i64: 2>, scalar_prefetch = 0 : i64, scratch_operands = 0 : i64, tpu.core_type = #tpu.core_type<tc>, window_params = [{transform_indices = @transform_0, window_bounds = array<i64: 1, 9, 9, 128>}, {transform_indices = @transform_1, window_bounds = array<i64: 1, 9, 9, 128>}, {transform_indices = @transform_2, window_bounds = array<i64: 1, 9, 9, 128>}, {transform_indices = @transform_3, window_bounds = array<i64: 1, 9, 9, 128>}, {pipeline_mode = #tpu.pipeline_mode<synchronous>, transform_indices = @transform_4, window_bounds = array<i64: 9, 128, 128>}, {pipeline_mode = #tpu.pipeline_mode<synchronous>, transform_indices = @transform_5, window_bounds = array<i64: 128, 128>}, {transform_indices = @transform_6, window_bounds = array<i64: 1, 64, 128>}, {transform_indices = @transform_7, window_bounds = array<i64: 1, 2, 128>}, {transform_indices = @transform_8, window_bounds = array<i64: 1, 64, 128>}, {transform_indices = @transform_9, window_bounds = array<i64: 1, 2, 128>}]} {
    %c0 = arith.constant 0 : index
    %c0_0 = arith.constant 0 : index
    %c0_1 = arith.constant 0 : index
    %c0_2 = arith.constant 0 : index
    %0 = vector.load %arg1[%c0, %c0_0, %c0_1, %c0_2] : memref<1x9x9x128xf32, #tpu.memory_space<vmem>>, vector<1x8x8x128xf32>
    %1 = vector.shape_cast %0 : vector<1x8x8x128xf32> to vector<8x8x128xf32>
    %2 = vector.shape_cast %1 : vector<8x8x128xf32> to vector<64x128xf32>
    %3 = arith.truncf %2 : vector<64x128xf32> to vector<64x128xbf16>
    %c0_3 = arith.constant 0 : index
    %c0_4 = arith.constant 0 : index
    %c0_5 = arith.constant 0 : index
    %4 = vector.load %arg5[%c0_3, %c0_4, %c0_5] : memref<9x128x128xbf16, #tpu.memory_space<vmem>>, vector<1x128x128xbf16>
    %5 = vector.shape_cast %4 : vector<1x128x128xbf16> to vector<128x128xbf16>
    %cst = arith.constant dense<0.000000e+00> : vector<64x128xf32>
    %6 = tpu.matmul %3, %5, %cst {dimension_numbers = #tpu.dot_dimension_numbers<[1], [0], [0], [1], [0, 0, 1, 1], [], []>} : vector<64x128xbf16>, vector<128x128xbf16>, vector<64x128xf32> -> vector<64x128xf32>
    %c0_6 = arith.constant 0 : index
    %c0_7 = arith.constant 0 : index
    %c0_8 = arith.constant 0 : index
    %c0_9 = arith.constant 0 : index
    %7 = vector.load %arg2[%c0_6, %c0_7, %c0_8, %c0_9] : memref<1x9x9x128xf32, #tpu.memory_space<vmem>>, vector<1x8x8x128xf32>
    %8 = vector.shape_cast %7 : vector<1x8x8x128xf32> to vector<8x8x128xf32>
    %9 = vector.shape_cast %8 : vector<8x8x128xf32> to vector<64x128xf32>
    %10 = arith.truncf %9 : vector<64x128xf32> to vector<64x128xbf16>
    %c1 = arith.constant 1 : index
    %c0_10 = arith.constant 0 : index
    %c0_11 = arith.constant 0 : index
    %11 = vector.load %arg5[%c1, %c0_10, %c0_11] : memref<9x128x128xbf16, #tpu.memory_space<vmem>>, vector<1x128x128xbf16>
    %12 = vector.shape_cast %11 : vector<1x128x128xbf16> to vector<128x128xbf16>
    %cst_12 = arith.constant dense<0.000000e+00> : vector<64x128xf32>
    %13 = tpu.matmul %10, %12, %cst_12 {dimension_numbers = #tpu.dot_dimension_numbers<[1], [0], [0], [1], [0, 0, 1, 1], [], []>} : vector<64x128xbf16>, vector<128x128xbf16>, vector<64x128xf32> -> vector<64x128xf32>
    %14 = arith.addf %6, %13 : vector<64x128xf32>
    %c0_13 = arith.constant 0 : index
    %c0_14 = arith.constant 0 : index
    %c1_15 = arith.constant 1 : index
    %c0_16 = arith.constant 0 : index
    %15 = vector.load %arg1[%c0_13, %c0_14, %c1_15, %c0_16] : memref<1x9x9x128xf32, #tpu.memory_space<vmem>>, vector<1x8x8x128xf32>
    %16 = vector.shape_cast %15 : vector<1x8x8x128xf32> to vector<8x8x128xf32>
    %17 = vector.shape_cast %16 : vector<8x8x128xf32> to vector<64x128xf32>
    %18 = arith.truncf %17 : vector<64x128xf32> to vector<64x128xbf16>
    %c2 = arith.constant 2 : index
    %c0_17 = arith.constant 0 : index
    %c0_18 = arith.constant 0 : index
    %19 = vector.load %arg5[%c2, %c0_17, %c0_18] : memref<9x128x128xbf16, #tpu.memory_space<vmem>>, vector<1x128x128xbf16>
    %20 = vector.shape_cast %19 : vector<1x128x128xbf16> to vector<128x128xbf16>
    %cst_19 = arith.constant dense<0.000000e+00> : vector<64x128xf32>
    %21 = tpu.matmul %18, %20, %cst_19 {dimension_numbers = #tpu.dot_dimension_numbers<[1], [0], [0], [1], [0, 0, 1, 1], [], []>} : vector<64x128xbf16>, vector<128x128xbf16>, vector<64x128xf32> -> vector<64x128xf32>
    %22 = arith.addf %14, %21 : vector<64x128xf32>
    %c0_20 = arith.constant 0 : index
    %c0_21 = arith.constant 0 : index
    %c0_22 = arith.constant 0 : index
    %c0_23 = arith.constant 0 : index
    %23 = vector.load %arg3[%c0_20, %c0_21, %c0_22, %c0_23] : memref<1x9x9x128xf32, #tpu.memory_space<vmem>>, vector<1x8x8x128xf32>
    %24 = vector.shape_cast %23 : vector<1x8x8x128xf32> to vector<8x8x128xf32>
    %25 = vector.shape_cast %24 : vector<8x8x128xf32> to vector<64x128xf32>
    %26 = arith.truncf %25 : vector<64x128xf32> to vector<64x128xbf16>
    %c3 = arith.constant 3 : index
    %c0_24 = arith.constant 0 : index
    %c0_25 = arith.constant 0 : index
    %27 = vector.load %arg5[%c3, %c0_24, %c0_25] : memref<9x128x128xbf16, #tpu.memory_space<vmem>>, vector<1x128x128xbf16>
    %28 = vector.shape_cast %27 : vector<1x128x128xbf16> to vector<128x128xbf16>
    %cst_26 = arith.constant dense<0.000000e+00> : vector<64x128xf32>
    %29 = tpu.matmul %26, %28, %cst_26 {dimension_numbers = #tpu.dot_dimension_numbers<[1], [0], [0], [1], [0, 0, 1, 1], [], []>} : vector<64x128xbf16>, vector<128x128xbf16>, vector<64x128xf32> -> vector<64x128xf32>
    %30 = arith.addf %22, %29 : vector<64x128xf32>
    %c0_27 = arith.constant 0 : index
    %c0_28 = arith.constant 0 : index
    %c0_29 = arith.constant 0 : index
    %c0_30 = arith.constant 0 : index
    %31 = vector.load %arg4[%c0_27, %c0_28, %c0_29, %c0_30] : memref<1x9x9x128xf32, #tpu.memory_space<vmem>>, vector<1x8x8x128xf32>
    %32 = vector.shape_cast %31 : vector<1x8x8x128xf32> to vector<8x8x128xf32>
    %33 = vector.shape_cast %32 : vector<8x8x128xf32> to vector<64x128xf32>
    %34 = arith.truncf %33 : vector<64x128xf32> to vector<64x128xbf16>
    %c4 = arith.constant 4 : index
    %c0_31 = arith.constant 0 : index
    %c0_32 = arith.constant 0 : index
    %35 = vector.load %arg5[%c4, %c0_31, %c0_32] : memref<9x128x128xbf16, #tpu.memory_space<vmem>>, vector<1x128x128xbf16>
    %36 = vector.shape_cast %35 : vector<1x128x128xbf16> to vector<128x128xbf16>
    %cst_33 = arith.constant dense<0.000000e+00> : vector<64x128xf32>
    %37 = tpu.matmul %34, %36, %cst_33 {dimension_numbers = #tpu.dot_dimension_numbers<[1], [0], [0], [1], [0, 0, 1, 1], [], []>} : vector<64x128xbf16>, vector<128x128xbf16>, vector<64x128xf32> -> vector<64x128xf32>
    %38 = arith.addf %30, %37 : vector<64x128xf32>
    %c0_34 = arith.constant 0 : index
    %c0_35 = arith.constant 0 : index
    %c1_36 = arith.constant 1 : index
    %c0_37 = arith.constant 0 : index
    %39 = vector.load %arg3[%c0_34, %c0_35, %c1_36, %c0_37] : memref<1x9x9x128xf32, #tpu.memory_space<vmem>>, vector<1x8x8x128xf32>
    %40 = vector.shape_cast %39 : vector<1x8x8x128xf32> to vector<8x8x128xf32>
    %41 = vector.shape_cast %40 : vector<8x8x128xf32> to vector<64x128xf32>
    %42 = arith.truncf %41 : vector<64x128xf32> to vector<64x128xbf16>
    %c5 = arith.constant 5 : index
    %c0_38 = arith.constant 0 : index
    %c0_39 = arith.constant 0 : index
    %43 = vector.load %arg5[%c5, %c0_38, %c0_39] : memref<9x128x128xbf16, #tpu.memory_space<vmem>>, vector<1x128x128xbf16>
    %44 = vector.shape_cast %43 : vector<1x128x128xbf16> to vector<128x128xbf16>
    %cst_40 = arith.constant dense<0.000000e+00> : vector<64x128xf32>
    %45 = tpu.matmul %42, %44, %cst_40 {dimension_numbers = #tpu.dot_dimension_numbers<[1], [0], [0], [1], [0, 0, 1, 1], [], []>} : vector<64x128xbf16>, vector<128x128xbf16>, vector<64x128xf32> -> vector<64x128xf32>
    %46 = arith.addf %38, %45 : vector<64x128xf32>
    %c0_41 = arith.constant 0 : index
    %c1_42 = arith.constant 1 : index
    %c0_43 = arith.constant 0 : index
    %c0_44 = arith.constant 0 : index
    %47 = vector.load %arg1[%c0_41, %c1_42, %c0_43, %c0_44] : memref<1x9x9x128xf32, #tpu.memory_space<vmem>>, vector<1x8x8x128xf32>
    %48 = vector.shape_cast %47 : vector<1x8x8x128xf32> to vector<8x8x128xf32>
    %49 = vector.shape_cast %48 : vector<8x8x128xf32> to vector<64x128xf32>
    %50 = arith.truncf %49 : vector<64x128xf32> to vector<64x128xbf16>
    %c6 = arith.constant 6 : index
    %c0_45 = arith.constant 0 : index
    %c0_46 = arith.constant 0 : index
    %51 = vector.load %arg5[%c6, %c0_45, %c0_46] : memref<9x128x128xbf16, #tpu.memory_space<vmem>>, vector<1x128x128xbf16>
    %52 = vector.shape_cast %51 : vector<1x128x128xbf16> to vector<128x128xbf16>
    %cst_47 = arith.constant dense<0.000000e+00> : vector<64x128xf32>
    %53 = tpu.matmul %50, %52, %cst_47 {dimension_numbers = #tpu.dot_dimension_numbers<[1], [0], [0], [1], [0, 0, 1, 1], [], []>} : vector<64x128xbf16>, vector<128x128xbf16>, vector<64x128xf32> -> vector<64x128xf32>
    %54 = arith.addf %46, %53 : vector<64x128xf32>
    %c0_48 = arith.constant 0 : index
    %c1_49 = arith.constant 1 : index
    %c0_50 = arith.constant 0 : index
    %c0_51 = arith.constant 0 : index
    %55 = vector.load %arg2[%c0_48, %c1_49, %c0_50, %c0_51] : memref<1x9x9x128xf32, #tpu.memory_space<vmem>>, vector<1x8x8x128xf32>
    %56 = vector.shape_cast %55 : vector<1x8x8x128xf32> to vector<8x8x128xf32>
    %57 = vector.shape_cast %56 : vector<8x8x128xf32> to vector<64x128xf32>
    %58 = arith.truncf %57 : vector<64x128xf32> to vector<64x128xbf16>
    %c7 = arith.constant 7 : index
    %c0_52 = arith.constant 0 : index
    %c0_53 = arith.constant 0 : index
    %59 = vector.load %arg5[%c7, %c0_52, %c0_53] : memref<9x128x128xbf16, #tpu.memory_space<vmem>>, vector<1x128x128xbf16>
    %60 = vector.shape_cast %59 : vector<1x128x128xbf16> to vector<128x128xbf16>
    %cst_54 = arith.constant dense<0.000000e+00> : vector<64x128xf32>
    %61 = tpu.matmul %58, %60, %cst_54 {dimension_numbers = #tpu.dot_dimension_numbers<[1], [0], [0], [1], [0, 0, 1, 1], [], []>} : vector<64x128xbf16>, vector<128x128xbf16>, vector<64x128xf32> -> vector<64x128xf32>
    %62 = arith.addf %54, %61 : vector<64x128xf32>
    %c0_55 = arith.constant 0 : index
    %c1_56 = arith.constant 1 : index
    %c1_57 = arith.constant 1 : index
    %c0_58 = arith.constant 0 : index
    %63 = vector.load %arg1[%c0_55, %c1_56, %c1_57, %c0_58] : memref<1x9x9x128xf32, #tpu.memory_space<vmem>>, vector<1x8x8x128xf32>
    %64 = vector.shape_cast %63 : vector<1x8x8x128xf32> to vector<8x8x128xf32>
    %65 = vector.shape_cast %64 : vector<8x8x128xf32> to vector<64x128xf32>
    %66 = arith.truncf %65 : vector<64x128xf32> to vector<64x128xbf16>
    %c8 = arith.constant 8 : index
    %c0_59 = arith.constant 0 : index
    %c0_60 = arith.constant 0 : index
    %67 = vector.load %arg5[%c8, %c0_59, %c0_60] : memref<9x128x128xbf16, #tpu.memory_space<vmem>>, vector<1x128x128xbf16>
    %68 = vector.shape_cast %67 : vector<1x128x128xbf16> to vector<128x128xbf16>
    %cst_61 = arith.constant dense<0.000000e+00> : vector<64x128xf32>
    %69 = tpu.matmul %66, %68, %cst_61 {dimension_numbers = #tpu.dot_dimension_numbers<[1], [0], [0], [1], [0, 0, 1, 1], [], []>} : vector<64x128xbf16>, vector<128x128xbf16>, vector<64x128xf32> -> vector<64x128xf32>
    %70 = arith.addf %62, %69 : vector<64x128xf32>
    %c0_62 = arith.constant 0 : index
    %c0_63 = arith.constant 0 : index
    %c0_64 = arith.constant 0 : index
    %71 = vector.load %arg7[%c0_62, %c0_63, %c0_64] : memref<1x64x128xf32, #tpu.memory_space<vmem>>, vector<1x64x128xf32>
    %72 = vector.shape_cast %71 : vector<1x64x128xf32> to vector<64x128xf32>
    %73 = vector.shape_cast %70 : vector<64x128xf32> to vector<1x64x128xf32>
    tpu.vector_store %arg7[%c0_62, %c0_63, %c0_64], %73 {strides = array<i32>} : memref<1x64x128xf32, #tpu.memory_space<vmem>>, vector<1x64x128xf32>,
    %cst_65 = arith.constant dense<0.000000e+00> : vector<128xf32>
    %74 = vector.multi_reduction <add>, %70, %cst_65 [0] : vector<64x128xf32> to vector<128xf32>
    %75 = vector.shape_cast %74 : vector<128xf32> to vector<1x128xf32>
    %76 = arith.mulf %70, %70 : vector<64x128xf32>
    %cst_66 = arith.constant dense<0.000000e+00> : vector<128xf32>
    %77 = vector.multi_reduction <add>, %76, %cst_66 [0] : vector<64x128xf32> to vector<128xf32>
    %78 = vector.shape_cast %77 : vector<128xf32> to vector<1x128xf32>
    %79 = tpu.concatenate %75, %78 in 0 : vector<1x128xf32>, vector<1x128xf32> -> vector<2x128xf32>
    %c0_67 = arith.constant 0 : index
    %c0_68 = arith.constant 0 : index
    %c0_69 = arith.constant 0 : index
    %80 = vector.load %arg8[%c0_67, %c0_68, %c0_69] : memref<1x2x128xf32, #tpu.memory_space<vmem>>, vector<1x2x128xf32>
    %81 = vector.shape_cast %80 : vector<1x2x128xf32> to vector<2x128xf32>
    %82 = vector.shape_cast %79 : vector<2x128xf32> to vector<1x2x128xf32>
    tpu.vector_store %arg8[%c0_67, %c0_68, %c0_69], %82 {strides = array<i32>} : memref<1x2x128xf32, #tpu.memory_space<vmem>>, vector<1x2x128xf32>,
    %c0_70 = arith.constant 0 : index
    %c0_71 = arith.constant 0 : index
    %83 = vector.load %arg6[%c0_70, %c0_71] : memref<128x128xbf16, #tpu.memory_space<vmem>>, vector<128x128xbf16>
    %cst_72 = arith.constant dense<0.000000e+00> : vector<64x128xf32>
    %84 = tpu.matmul %34, %83, %cst_72 {dimension_numbers = #tpu.dot_dimension_numbers<[1], [0], [0], [1], [0, 0, 1, 1], [], []>} : vector<64x128xbf16>, vector<128x128xbf16>, vector<64x128xf32> -> vector<64x128xf32>
    %c0_73 = arith.constant 0 : index
    %c0_74 = arith.constant 0 : index
    %c0_75 = arith.constant 0 : index
    %85 = vector.load %arg9[%c0_73, %c0_74, %c0_75] : memref<1x64x128xf32, #tpu.memory_space<vmem>>, vector<1x64x128xf32>
    %86 = vector.shape_cast %85 : vector<1x64x128xf32> to vector<64x128xf32>
    %87 = vector.shape_cast %84 : vector<64x128xf32> to vector<1x64x128xf32>
    tpu.vector_store %arg9[%c0_73, %c0_74, %c0_75], %87 {strides = array<i32>} : memref<1x64x128xf32, #tpu.memory_space<vmem>>, vector<1x64x128xf32>,
    %cst_76 = arith.constant dense<0.000000e+00> : vector<128xf32>
    %88 = vector.multi_reduction <add>, %84, %cst_76 [0] : vector<64x128xf32> to vector<128xf32>
    %89 = vector.shape_cast %88 : vector<128xf32> to vector<1x128xf32>
    %90 = arith.mulf %84, %84 : vector<64x128xf32>
    %cst_77 = arith.constant dense<0.000000e+00> : vector<128xf32>
    %91 = vector.multi_reduction <add>, %90, %cst_77 [0] : vector<64x128xf32> to vector<128xf32>
    %92 = vector.shape_cast %91 : vector<128xf32> to vector<1x128xf32>
    %93 = tpu.concatenate %89, %92 in 0 : vector<1x128xf32>, vector<1x128xf32> -> vector<2x128xf32>
    %c0_78 = arith.constant 0 : index
    %c0_79 = arith.constant 0 : index
    %c0_80 = arith.constant 0 : index
    %94 = vector.load %arg10[%c0_78, %c0_79, %c0_80] : memref<1x2x128xf32, #tpu.memory_space<vmem>>, vector<1x2x128xf32>
    %95 = vector.shape_cast %94 : vector<1x2x128xf32> to vector<2x128xf32>
    %96 = vector.shape_cast %93 : vector<2x128xf32> to vector<1x2x128xf32>
    tpu.vector_store %arg10[%c0_78, %c0_79, %c0_80], %96 {strides = array<i32>} : memref<1x2x128xf32, #tpu.memory_space<vmem>>, vector<1x2x128xf32>,
    return
  }
  func.func @transform_0(%arg0: i32) -> (i32, i32, i32, i32) {
    %c0_i32 = arith.constant 0 : i32
    %c0_i32_0 = arith.constant 0 : i32
    %c0_i32_1 = arith.constant 0 : i32
    %c0_i32_2 = arith.constant 0 : i32
    return %arg0, %c0_i32, %c0_i32_0, %c0_i32_1 : i32, i32, i32, i32
  }
  func.func @transform_1(%arg0: i32) -> (i32, i32, i32, i32) {
    %c0_i32 = arith.constant 0 : i32
    %c0_i32_0 = arith.constant 0 : i32
    %c0_i32_1 = arith.constant 0 : i32
    %c0_i32_2 = arith.constant 0 : i32
    return %arg0, %c0_i32, %c0_i32_0, %c0_i32_1 : i32, i32, i32, i32
  }
  func.func @transform_2(%arg0: i32) -> (i32, i32, i32, i32) {
    %c0_i32 = arith.constant 0 : i32
    %c0_i32_0 = arith.constant 0 : i32
    %c0_i32_1 = arith.constant 0 : i32
    %c0_i32_2 = arith.constant 0 : i32
    return %arg0, %c0_i32, %c0_i32_0, %c0_i32_1 : i32, i32, i32, i32
  }
  func.func @transform_3(%arg0: i32) -> (i32, i32, i32, i32) {
    %c0_i32 = arith.constant 0 : i32
    %c0_i32_0 = arith.constant 0 : i32
    %c0_i32_1 = arith.constant 0 : i32
    %c0_i32_2 = arith.constant 0 : i32
    return %arg0, %c0_i32, %c0_i32_0, %c0_i32_1 : i32, i32, i32, i32
  }
  func.func @transform_4(%arg0: i32) -> (i32, i32, i32) {
    %c0_i32 = arith.constant 0 : i32
    %c0_i32_0 = arith.constant 0 : i32
    %c0_i32_1 = arith.constant 0 : i32
    %c0_i32_2 = arith.constant 0 : i32
    return %c0_i32, %c0_i32_0, %c0_i32_1 : i32, i32, i32
  }
  func.func @transform_5(%arg0: i32) -> (i32, i32) {
    %c0_i32 = arith.constant 0 : i32
    %c0_i32_0 = arith.constant 0 : i32
    %c0_i32_1 = arith.constant 0 : i32
    return %c0_i32, %c0_i32_0 : i32, i32
  }
  func.func @transform_6(%arg0: i32) -> (i32, i32, i32) {
    %c0_i32 = arith.constant 0 : i32
    %c0_i32_0 = arith.constant 0 : i32
    %c0_i32_1 = arith.constant 0 : i32
    return %arg0, %c0_i32, %c0_i32_0 : i32, i32, i32
  }
  func.func @transform_7(%arg0: i32) -> (i32, i32, i32) {
    %c0_i32 = arith.constant 0 : i32
    %c0_i32_0 = arith.constant 0 : i32
    %c0_i32_1 = arith.constant 0 : i32
    return %arg0, %c0_i32, %c0_i32_0 : i32, i32, i32
  }
  func.func @transform_8(%arg0: i32) -> (i32, i32, i32) {
    %c0_i32 = arith.constant 0 : i32
    %c0_i32_0 = arith.constant 0 : i32
    %c0_i32_1 = arith.constant 0 : i32
    return %arg0, %c0_i32, %c0_i32_0 : i32, i32, i32
  }
  func.func @transform_9(%arg0: i32) -> (i32, i32, i32) {
    %c0_i32 = arith.constant 0 : i32
    %c0_i32_0 = arith.constant 0 : i32
    %c0_i32_1 = arith.constant 0 : i32
    return %arg0, %c0_i32, %c0_i32_0 : i32, i32, i32
  }
}

module attributes {stable_mosaic.version = 11 : i64} {
  func.func @_bn_add_relu_proj_kernel(%arg0: i32, %arg1: memref<128x128xf32, #tpu.memory_space<vmem>>, %arg2: memref<2x128xf32, #tpu.memory_space<vmem>>, %arg3: memref<128x128xf32, #tpu.memory_space<vmem>>, %arg4: memref<2x128xf32, #tpu.memory_space<vmem>>, %arg5: memref<128x128xf32, #tpu.memory_space<vmem>>) attributes {dimension_semantics = [#tpu.dimension_semantics<parallel>], iteration_bounds = array<i64: 1>, scalar_prefetch = 0 : i64, scratch_operands = 0 : i64, tpu.core_type = #tpu.core_type<tc>, window_params = [{transform_indices = @transform_0, window_bounds = array<i64: 128, 128>}, {pipeline_mode = #tpu.pipeline_mode<synchronous>, transform_indices = @transform_1, window_bounds = array<i64: 2, 128>}, {transform_indices = @transform_2, window_bounds = array<i64: 128, 128>}, {pipeline_mode = #tpu.pipeline_mode<synchronous>, transform_indices = @transform_3, window_bounds = array<i64: 2, 128>}, {transform_indices = @transform_4, window_bounds = array<i64: 128, 128>}]} {
    %c0 = arith.constant 0 : index
    %c0_0 = arith.constant 0 : index
    %0 = vector.load %arg1[%c0, %c0_0] : memref<128x128xf32, #tpu.memory_space<vmem>>, vector<128x128xf32>
    %c0_1 = arith.constant 0 : index
    %c0_2 = arith.constant 0 : index
    %1 = vector.load %arg2[%c0_1, %c0_2] : memref<2x128xf32, #tpu.memory_space<vmem>>, vector<1x128xf32>
    %2 = vector.broadcast %1 : vector<1x128xf32> to vector<128x128xf32>
    %3 = arith.mulf %0, %2 : vector<128x128xf32>
    %c1 = arith.constant 1 : index
    %c0_3 = arith.constant 0 : index
    %4 = vector.load %arg2[%c1, %c0_3] : memref<2x128xf32, #tpu.memory_space<vmem>>, vector<1x128xf32>
    %5 = vector.broadcast %4 : vector<1x128xf32> to vector<128x128xf32>
    %6 = arith.addf %3, %5 : vector<128x128xf32>
    %c0_4 = arith.constant 0 : index
    %c0_5 = arith.constant 0 : index
    %7 = vector.load %arg3[%c0_4, %c0_5] : memref<128x128xf32, #tpu.memory_space<vmem>>, vector<128x128xf32>
    %c0_6 = arith.constant 0 : index
    %c0_7 = arith.constant 0 : index
    %8 = vector.load %arg4[%c0_6, %c0_7] : memref<2x128xf32, #tpu.memory_space<vmem>>, vector<1x128xf32>
    %9 = vector.broadcast %8 : vector<1x128xf32> to vector<128x128xf32>
    %10 = arith.mulf %7, %9 : vector<128x128xf32>
    %11 = arith.addf %6, %10 : vector<128x128xf32>
    %c1_8 = arith.constant 1 : index
    %c0_9 = arith.constant 0 : index
    %12 = vector.load %arg4[%c1_8, %c0_9] : memref<2x128xf32, #tpu.memory_space<vmem>>, vector<1x128xf32>
    %13 = vector.broadcast %12 : vector<1x128xf32> to vector<128x128xf32>
    %14 = arith.addf %11, %13 : vector<128x128xf32>
    %cst = arith.constant 0.000000e+00 : f32
    %15 = vector.broadcast %cst : f32 to vector<128x128xf32>
    %16 = arith.maximumf %14, %15 : vector<128x128xf32>
    %c0_10 = arith.constant 0 : index
    %c0_11 = arith.constant 0 : index
    %17 = vector.load %arg5[%c0_10, %c0_11] : memref<128x128xf32, #tpu.memory_space<vmem>>, vector<128x128xf32>
    tpu.vector_store %arg5[%c0_10, %c0_11], %16 {strides = array<i32>} : memref<128x128xf32, #tpu.memory_space<vmem>>, vector<128x128xf32>,
    return
  }
  func.func @transform_0(%arg0: i32) -> (i32, i32) {
    %c0_i32 = arith.constant 0 : i32
    %c0_i32_0 = arith.constant 0 : i32
    return %arg0, %c0_i32 : i32, i32
  }
  func.func @transform_1(%arg0: i32) -> (i32, i32) {
    %c0_i32 = arith.constant 0 : i32
    %c0_i32_0 = arith.constant 0 : i32
    %c0_i32_1 = arith.constant 0 : i32
    return %c0_i32, %c0_i32_0 : i32, i32
  }
  func.func @transform_2(%arg0: i32) -> (i32, i32) {
    %c0_i32 = arith.constant 0 : i32
    %c0_i32_0 = arith.constant 0 : i32
    return %arg0, %c0_i32 : i32, i32
  }
  func.func @transform_3(%arg0: i32) -> (i32, i32) {
    %c0_i32 = arith.constant 0 : i32
    %c0_i32_0 = arith.constant 0 : i32
    %c0_i32_1 = arith.constant 0 : i32
    return %c0_i32, %c0_i32_0 : i32, i32
  }
  func.func @transform_4(%arg0: i32) -> (i32, i32) {
    %c0_i32 = arith.constant 0 : i32
    %c0_i32_0 = arith.constant 0 : i32
    return %arg0, %c0_i32 : i32, i32
  }
}

module attributes {stable_mosaic.version = 11 : i64} {
  func.func @kernel(%arg0: i32, %arg1: memref<1x10x10x128xf32, #tpu.memory_space<vmem>>, %arg2: memref<9x128x128xbf16, #tpu.memory_space<vmem>>, %arg3: memref<1x64x128xf32, #tpu.memory_space<vmem>>, %arg4: memref<1x2x128xf32, #tpu.memory_space<vmem>>) attributes {dimension_semantics = [#tpu.dimension_semantics<parallel>], iteration_bounds = array<i64: 2>, scalar_prefetch = 0 : i64, scratch_operands = 0 : i64, tpu.core_type = #tpu.core_type<tc>, window_params = [{transform_indices = @transform_0, window_bounds = array<i64: 1, 10, 10, 128>}, {pipeline_mode = #tpu.pipeline_mode<synchronous>, transform_indices = @transform_1, window_bounds = array<i64: 9, 128, 128>}, {transform_indices = @transform_2, window_bounds = array<i64: 1, 64, 128>}, {transform_indices = @transform_3, window_bounds = array<i64: 1, 2, 128>}]} {
    %c0 = arith.constant 0 : index
    %c0_0 = arith.constant 0 : index
    %c0_1 = arith.constant 0 : index
    %c0_2 = arith.constant 0 : index
    %0 = vector.load %arg1[%c0, %c0_0, %c0_1, %c0_2] : memref<1x10x10x128xf32, #tpu.memory_space<vmem>>, vector<1x8x8x128xf32>
    %1 = vector.shape_cast %0 : vector<1x8x8x128xf32> to vector<8x8x128xf32>
    %2 = vector.shape_cast %1 : vector<8x8x128xf32> to vector<64x128xf32>
    %3 = arith.truncf %2 : vector<64x128xf32> to vector<64x128xbf16>
    %c0_3 = arith.constant 0 : index
    %c0_4 = arith.constant 0 : index
    %c0_5 = arith.constant 0 : index
    %4 = vector.load %arg2[%c0_3, %c0_4, %c0_5] : memref<9x128x128xbf16, #tpu.memory_space<vmem>>, vector<1x128x128xbf16>
    %5 = vector.shape_cast %4 : vector<1x128x128xbf16> to vector<128x128xbf16>
    %cst = arith.constant dense<0.000000e+00> : vector<64x128xf32>
    %6 = tpu.matmul %3, %5, %cst {dimension_numbers = #tpu.dot_dimension_numbers<[1], [0], [0], [1], [0, 0, 1, 1], [], []>} : vector<64x128xbf16>, vector<128x128xbf16>, vector<64x128xf32> -> vector<64x128xf32>
    %c0_6 = arith.constant 0 : index
    %c0_7 = arith.constant 0 : index
    %c1 = arith.constant 1 : index
    %c0_8 = arith.constant 0 : index
    %7 = vector.load %arg1[%c0_6, %c0_7, %c1, %c0_8] : memref<1x10x10x128xf32, #tpu.memory_space<vmem>>, vector<1x8x8x128xf32>
    %8 = vector.shape_cast %7 : vector<1x8x8x128xf32> to vector<8x8x128xf32>
    %9 = vector.shape_cast %8 : vector<8x8x128xf32> to vector<64x128xf32>
    %10 = arith.truncf %9 : vector<64x128xf32> to vector<64x128xbf16>
    %c1_9 = arith.constant 1 : index
    %c0_10 = arith.constant 0 : index
    %c0_11 = arith.constant 0 : index
    %11 = vector.load %arg2[%c1_9, %c0_10, %c0_11] : memref<9x128x128xbf16, #tpu.memory_space<vmem>>, vector<1x128x128xbf16>
    %12 = vector.shape_cast %11 : vector<1x128x128xbf16> to vector<128x128xbf16>
    %cst_12 = arith.constant dense<0.000000e+00> : vector<64x128xf32>
    %13 = tpu.matmul %10, %12, %cst_12 {dimension_numbers = #tpu.dot_dimension_numbers<[1], [0], [0], [1], [0, 0, 1, 1], [], []>} : vector<64x128xbf16>, vector<128x128xbf16>, vector<64x128xf32> -> vector<64x128xf32>
    %14 = arith.addf %6, %13 : vector<64x128xf32>
    %c0_13 = arith.constant 0 : index
    %c0_14 = arith.constant 0 : index
    %c2 = arith.constant 2 : index
    %c0_15 = arith.constant 0 : index
    %15 = vector.load %arg1[%c0_13, %c0_14, %c2, %c0_15] : memref<1x10x10x128xf32, #tpu.memory_space<vmem>>, vector<1x8x8x128xf32>
    %16 = vector.shape_cast %15 : vector<1x8x8x128xf32> to vector<8x8x128xf32>
    %17 = vector.shape_cast %16 : vector<8x8x128xf32> to vector<64x128xf32>
    %18 = arith.truncf %17 : vector<64x128xf32> to vector<64x128xbf16>
    %c2_16 = arith.constant 2 : index
    %c0_17 = arith.constant 0 : index
    %c0_18 = arith.constant 0 : index
    %19 = vector.load %arg2[%c2_16, %c0_17, %c0_18] : memref<9x128x128xbf16, #tpu.memory_space<vmem>>, vector<1x128x128xbf16>
    %20 = vector.shape_cast %19 : vector<1x128x128xbf16> to vector<128x128xbf16>
    %cst_19 = arith.constant dense<0.000000e+00> : vector<64x128xf32>
    %21 = tpu.matmul %18, %20, %cst_19 {dimension_numbers = #tpu.dot_dimension_numbers<[1], [0], [0], [1], [0, 0, 1, 1], [], []>} : vector<64x128xbf16>, vector<128x128xbf16>, vector<64x128xf32> -> vector<64x128xf32>
    %22 = arith.addf %14, %21 : vector<64x128xf32>
    %c0_20 = arith.constant 0 : index
    %c1_21 = arith.constant 1 : index
    %c0_22 = arith.constant 0 : index
    %c0_23 = arith.constant 0 : index
    %23 = vector.load %arg1[%c0_20, %c1_21, %c0_22, %c0_23] : memref<1x10x10x128xf32, #tpu.memory_space<vmem>>, vector<1x8x8x128xf32>
    %24 = vector.shape_cast %23 : vector<1x8x8x128xf32> to vector<8x8x128xf32>
    %25 = vector.shape_cast %24 : vector<8x8x128xf32> to vector<64x128xf32>
    %26 = arith.truncf %25 : vector<64x128xf32> to vector<64x128xbf16>
    %c3 = arith.constant 3 : index
    %c0_24 = arith.constant 0 : index
    %c0_25 = arith.constant 0 : index
    %27 = vector.load %arg2[%c3, %c0_24, %c0_25] : memref<9x128x128xbf16, #tpu.memory_space<vmem>>, vector<1x128x128xbf16>
    %28 = vector.shape_cast %27 : vector<1x128x128xbf16> to vector<128x128xbf16>
    %cst_26 = arith.constant dense<0.000000e+00> : vector<64x128xf32>
    %29 = tpu.matmul %26, %28, %cst_26 {dimension_numbers = #tpu.dot_dimension_numbers<[1], [0], [0], [1], [0, 0, 1, 1], [], []>} : vector<64x128xbf16>, vector<128x128xbf16>, vector<64x128xf32> -> vector<64x128xf32>
    %30 = arith.addf %22, %29 : vector<64x128xf32>
    %c0_27 = arith.constant 0 : index
    %c1_28 = arith.constant 1 : index
    %c1_29 = arith.constant 1 : index
    %c0_30 = arith.constant 0 : index
    %31 = vector.load %arg1[%c0_27, %c1_28, %c1_29, %c0_30] : memref<1x10x10x128xf32, #tpu.memory_space<vmem>>, vector<1x8x8x128xf32>
    %32 = vector.shape_cast %31 : vector<1x8x8x128xf32> to vector<8x8x128xf32>
    %33 = vector.shape_cast %32 : vector<8x8x128xf32> to vector<64x128xf32>
    %34 = arith.truncf %33 : vector<64x128xf32> to vector<64x128xbf16>
    %c4 = arith.constant 4 : index
    %c0_31 = arith.constant 0 : index
    %c0_32 = arith.constant 0 : index
    %35 = vector.load %arg2[%c4, %c0_31, %c0_32] : memref<9x128x128xbf16, #tpu.memory_space<vmem>>, vector<1x128x128xbf16>
    %36 = vector.shape_cast %35 : vector<1x128x128xbf16> to vector<128x128xbf16>
    %cst_33 = arith.constant dense<0.000000e+00> : vector<64x128xf32>
    %37 = tpu.matmul %34, %36, %cst_33 {dimension_numbers = #tpu.dot_dimension_numbers<[1], [0], [0], [1], [0, 0, 1, 1], [], []>} : vector<64x128xbf16>, vector<128x128xbf16>, vector<64x128xf32> -> vector<64x128xf32>
    %38 = arith.addf %30, %37 : vector<64x128xf32>
    %c0_34 = arith.constant 0 : index
    %c1_35 = arith.constant 1 : index
    %c2_36 = arith.constant 2 : index
    %c0_37 = arith.constant 0 : index
    %39 = vector.load %arg1[%c0_34, %c1_35, %c2_36, %c0_37] : memref<1x10x10x128xf32, #tpu.memory_space<vmem>>, vector<1x8x8x128xf32>
    %40 = vector.shape_cast %39 : vector<1x8x8x128xf32> to vector<8x8x128xf32>
    %41 = vector.shape_cast %40 : vector<8x8x128xf32> to vector<64x128xf32>
    %42 = arith.truncf %41 : vector<64x128xf32> to vector<64x128xbf16>
    %c5 = arith.constant 5 : index
    %c0_38 = arith.constant 0 : index
    %c0_39 = arith.constant 0 : index
    %43 = vector.load %arg2[%c5, %c0_38, %c0_39] : memref<9x128x128xbf16, #tpu.memory_space<vmem>>, vector<1x128x128xbf16>
    %44 = vector.shape_cast %43 : vector<1x128x128xbf16> to vector<128x128xbf16>
    %cst_40 = arith.constant dense<0.000000e+00> : vector<64x128xf32>
    %45 = tpu.matmul %42, %44, %cst_40 {dimension_numbers = #tpu.dot_dimension_numbers<[1], [0], [0], [1], [0, 0, 1, 1], [], []>} : vector<64x128xbf16>, vector<128x128xbf16>, vector<64x128xf32> -> vector<64x128xf32>
    %46 = arith.addf %38, %45 : vector<64x128xf32>
    %c0_41 = arith.constant 0 : index
    %c2_42 = arith.constant 2 : index
    %c0_43 = arith.constant 0 : index
    %c0_44 = arith.constant 0 : index
    %47 = vector.load %arg1[%c0_41, %c2_42, %c0_43, %c0_44] : memref<1x10x10x128xf32, #tpu.memory_space<vmem>>, vector<1x8x8x128xf32>
    %48 = vector.shape_cast %47 : vector<1x8x8x128xf32> to vector<8x8x128xf32>
    %49 = vector.shape_cast %48 : vector<8x8x128xf32> to vector<64x128xf32>
    %50 = arith.truncf %49 : vector<64x128xf32> to vector<64x128xbf16>
    %c6 = arith.constant 6 : index
    %c0_45 = arith.constant 0 : index
    %c0_46 = arith.constant 0 : index
    %51 = vector.load %arg2[%c6, %c0_45, %c0_46] : memref<9x128x128xbf16, #tpu.memory_space<vmem>>, vector<1x128x128xbf16>
    %52 = vector.shape_cast %51 : vector<1x128x128xbf16> to vector<128x128xbf16>
    %cst_47 = arith.constant dense<0.000000e+00> : vector<64x128xf32>
    %53 = tpu.matmul %50, %52, %cst_47 {dimension_numbers = #tpu.dot_dimension_numbers<[1], [0], [0], [1], [0, 0, 1, 1], [], []>} : vector<64x128xbf16>, vector<128x128xbf16>, vector<64x128xf32> -> vector<64x128xf32>
    %54 = arith.addf %46, %53 : vector<64x128xf32>
    %c0_48 = arith.constant 0 : index
    %c2_49 = arith.constant 2 : index
    %c1_50 = arith.constant 1 : index
    %c0_51 = arith.constant 0 : index
    %55 = vector.load %arg1[%c0_48, %c2_49, %c1_50, %c0_51] : memref<1x10x10x128xf32, #tpu.memory_space<vmem>>, vector<1x8x8x128xf32>
    %56 = vector.shape_cast %55 : vector<1x8x8x128xf32> to vector<8x8x128xf32>
    %57 = vector.shape_cast %56 : vector<8x8x128xf32> to vector<64x128xf32>
    %58 = arith.truncf %57 : vector<64x128xf32> to vector<64x128xbf16>
    %c7 = arith.constant 7 : index
    %c0_52 = arith.constant 0 : index
    %c0_53 = arith.constant 0 : index
    %59 = vector.load %arg2[%c7, %c0_52, %c0_53] : memref<9x128x128xbf16, #tpu.memory_space<vmem>>, vector<1x128x128xbf16>
    %60 = vector.shape_cast %59 : vector<1x128x128xbf16> to vector<128x128xbf16>
    %cst_54 = arith.constant dense<0.000000e+00> : vector<64x128xf32>
    %61 = tpu.matmul %58, %60, %cst_54 {dimension_numbers = #tpu.dot_dimension_numbers<[1], [0], [0], [1], [0, 0, 1, 1], [], []>} : vector<64x128xbf16>, vector<128x128xbf16>, vector<64x128xf32> -> vector<64x128xf32>
    %62 = arith.addf %54, %61 : vector<64x128xf32>
    %c0_55 = arith.constant 0 : index
    %c2_56 = arith.constant 2 : index
    %c2_57 = arith.constant 2 : index
    %c0_58 = arith.constant 0 : index
    %63 = vector.load %arg1[%c0_55, %c2_56, %c2_57, %c0_58] : memref<1x10x10x128xf32, #tpu.memory_space<vmem>>, vector<1x8x8x128xf32>
    %64 = vector.shape_cast %63 : vector<1x8x8x128xf32> to vector<8x8x128xf32>
    %65 = vector.shape_cast %64 : vector<8x8x128xf32> to vector<64x128xf32>
    %66 = arith.truncf %65 : vector<64x128xf32> to vector<64x128xbf16>
    %c8 = arith.constant 8 : index
    %c0_59 = arith.constant 0 : index
    %c0_60 = arith.constant 0 : index
    %67 = vector.load %arg2[%c8, %c0_59, %c0_60] : memref<9x128x128xbf16, #tpu.memory_space<vmem>>, vector<1x128x128xbf16>
    %68 = vector.shape_cast %67 : vector<1x128x128xbf16> to vector<128x128xbf16>
    %cst_61 = arith.constant dense<0.000000e+00> : vector<64x128xf32>
    %69 = tpu.matmul %66, %68, %cst_61 {dimension_numbers = #tpu.dot_dimension_numbers<[1], [0], [0], [1], [0, 0, 1, 1], [], []>} : vector<64x128xbf16>, vector<128x128xbf16>, vector<64x128xf32> -> vector<64x128xf32>
    %70 = arith.addf %62, %69 : vector<64x128xf32>
    %c0_62 = arith.constant 0 : index
    %c0_63 = arith.constant 0 : index
    %c0_64 = arith.constant 0 : index
    %71 = vector.load %arg3[%c0_62, %c0_63, %c0_64] : memref<1x64x128xf32, #tpu.memory_space<vmem>>, vector<1x64x128xf32>
    %72 = vector.shape_cast %71 : vector<1x64x128xf32> to vector<64x128xf32>
    %73 = vector.shape_cast %70 : vector<64x128xf32> to vector<1x64x128xf32>
    tpu.vector_store %arg3[%c0_62, %c0_63, %c0_64], %73 {strides = array<i32>} : memref<1x64x128xf32, #tpu.memory_space<vmem>>, vector<1x64x128xf32>,
    %cst_65 = arith.constant dense<0.000000e+00> : vector<128xf32>
    %74 = vector.multi_reduction <add>, %70, %cst_65 [0] : vector<64x128xf32> to vector<128xf32>
    %75 = vector.shape_cast %74 : vector<128xf32> to vector<1x128xf32>
    %76 = arith.mulf %70, %70 : vector<64x128xf32>
    %cst_66 = arith.constant dense<0.000000e+00> : vector<128xf32>
    %77 = vector.multi_reduction <add>, %76, %cst_66 [0] : vector<64x128xf32> to vector<128xf32>
    %78 = vector.shape_cast %77 : vector<128xf32> to vector<1x128xf32>
    %79 = tpu.concatenate %75, %78 in 0 : vector<1x128xf32>, vector<1x128xf32> -> vector<2x128xf32>
    %c0_67 = arith.constant 0 : index
    %c0_68 = arith.constant 0 : index
    %c0_69 = arith.constant 0 : index
    %80 = vector.load %arg4[%c0_67, %c0_68, %c0_69] : memref<1x2x128xf32, #tpu.memory_space<vmem>>, vector<1x2x128xf32>
    %81 = vector.shape_cast %80 : vector<1x2x128xf32> to vector<2x128xf32>
    %82 = vector.shape_cast %79 : vector<2x128xf32> to vector<1x2x128xf32>
    tpu.vector_store %arg4[%c0_67, %c0_68, %c0_69], %82 {strides = array<i32>} : memref<1x2x128xf32, #tpu.memory_space<vmem>>, vector<1x2x128xf32>,
    return
  }
  func.func @transform_0(%arg0: i32) -> (i32, i32, i32, i32) {
    %c0_i32 = arith.constant 0 : i32
    %c0_i32_0 = arith.constant 0 : i32
    %c0_i32_1 = arith.constant 0 : i32
    %c0_i32_2 = arith.constant 0 : i32
    return %arg0, %c0_i32, %c0_i32_0, %c0_i32_1 : i32, i32, i32, i32
  }
  func.func @transform_1(%arg0: i32) -> (i32, i32, i32) {
    %c0_i32 = arith.constant 0 : i32
    %c0_i32_0 = arith.constant 0 : i32
    %c0_i32_1 = arith.constant 0 : i32
    %c0_i32_2 = arith.constant 0 : i32
    return %c0_i32, %c0_i32_0, %c0_i32_1 : i32, i32, i32
  }
  func.func @transform_2(%arg0: i32) -> (i32, i32, i32) {
    %c0_i32 = arith.constant 0 : i32
    %c0_i32_0 = arith.constant 0 : i32
    %c0_i32_1 = arith.constant 0 : i32
    return %arg0, %c0_i32, %c0_i32_0 : i32, i32, i32
  }
  func.func @transform_3(%arg0: i32) -> (i32, i32, i32) {
    %c0_i32 = arith.constant 0 : i32
    %c0_i32_0 = arith.constant 0 : i32
    %c0_i32_1 = arith.constant 0 : i32
    return %arg0, %c0_i32, %c0_i32_0 : i32, i32, i32
  }
}

</mosaic_0001>

<llo_original>
// kernel: residual_block.5
$region0: #{residual_block.5}
  #allocation0 [shape = 'u32[]', space=smem, size = 0x4, offset = 0x4, fixed_abs, tag = 'smem constant byte address 0x4 - core index']
  #allocation1 [shape = 'u32[144,128]{1,0:T(1,128)}', space=vmem, size = 0x12000, scoped, tag = 'internal scratch']
  %s0 = inlined_call_operand.vmem [shape: f32[128,128], index: 0, kind: input, shape index: {}]
  %s1 = inlined_call_operand.vmem [shape: f32[2,128], index: 1, kind: input, shape index: {}]
  %s2 = inlined_call_operand.vmem [shape: f32[128,128], index: 2, kind: output, shape index: {}]
  %s3 = sld [smem:[#allocation0]]
  $region18: #{residual_block.5} parent=0
    _
  %s5 = ssub.s32 1, %s3
  %s6 = scalar_select 0, %s5, %s3
  // Predicated region
  $region2: #{residual_block.5} parent=0 // pred_check
    _
  $region3: #{residual_block.5} parent=0 // pred_check_branch
    %8 = sbr.rel (0) target = $region5
  $region4: #{residual_block.5} parent=0 // pred_region
    _
  $region5: #{residual_block.5} parent=0 // pred_fallthru
    _
  // Predicated region
  $region6: #{residual_block.5} parent=0 // pred_check
    _
  $region7: #{residual_block.5} parent=0 // pred_check_branch
    %10 = sbr.rel (0) target = $region9
  $region8: #{residual_block.5} parent=0 // pred_region
    _
  $region9: #{residual_block.5} parent=0 // pred_fallthru
    _
  %v11 = vld [vmem:[%s0] sm:$0xff]
  %v12 = vld [vmem:[%s0 + $0x8] sm:$0xff]
  %v13 = vld [vmem:[%s0 + $0x10] sm:$0xff]
  %v14 = vld [vmem:[%s0 + $0x18] sm:$0xff]
  %v15 = vld [vmem:[%s0 + $0x20] sm:$0xff]
  %v16 = vld [vmem:[%s0 + $0x28] sm:$0xff]
  %v17 = vld [vmem:[%s0 + $0x30] sm:$0xff]
  %v18 = vld [vmem:[%s0 + $0x38] sm:$0xff]
  %v19 = vld [vmem:[%s0 + $0x40] sm:$0xff]
  %v20 = vld [vmem:[%s0 + $0x48] sm:$0xff]
  %v21 = vld [vmem:[%s0 + $0x50] sm:$0xff]
  %v22 = vld [vmem:[%s0 + $0x58] sm:$0xff]
  %v23 = vld [vmem:[%s0 + $0x60] sm:$0xff]
  %v24 = vld [vmem:[%s0 + $0x68] sm:$0xff]
  %v25 = vld [vmem:[%s0 + $0x70] sm:$0xff]
  %v26 = vld [vmem:[%s0 + $0x78] sm:$0xff]
  %v27 = vld [vmem:[%s1] sm:$0x1]
  %v28 = vlaneseq
  %v29 = vshrl.u32 %v28, 7
  %v30 = vsub.s32 0, %v29
  %v31 = vrot.slane %v27, %v30
  %v32 = vmul.f32 %v11, %v31
  %v33 = vmul.f32 %v12, %v31
  %v34 = vmul.f32 %v13, %v31
  %v35 = vmul.f32 %v14, %v31
  %v36 = vmul.f32 %v15, %v31
  %v37 = vmul.f32 %v16, %v31
  %v38 = vmul.f32 %v17, %v31
  %v39 = vmul.f32 %v18, %v31
  %v40 = vmul.f32 %v19, %v31
  %v41 = vmul.f32 %v20, %v31
  %v42 = vmul.f32 %v21, %v31
  %v43 = vmul.f32 %v22, %v31
  %v44 = vmul.f32 %v23, %v31
  %v45 = vmul.f32 %v24, %v31
  %v46 = vmul.f32 %v25, %v31
  %v47 = vmul.f32 %v26, %v31
  %v48 = vld [vmem:[%s1 + $0x1] sm:$0x1]
  %v49 = vlaneseq
  %v50 = vshrl.u32 %v49, 7
  %v51 = vsub.s32 0, %v50
  %v52 = vrot.slane %v48, %v51
  %v53 = vadd.f32 %v32, %v52
  %v54 = vadd.f32 %v33, %v52
  %v55 = vadd.f32 %v34, %v52
  %v56 = vadd.f32 %v35, %v52
  %v57 = vadd.f32 %v36, %v52
  %v58 = vadd.f32 %v37, %v52
  %v59 = vadd.f32 %v38, %v52
  %v60 = vadd.f32 %v39, %v52
  %v61 = vadd.f32 %v40, %v52
  %v62 = vadd.f32 %v41, %v52
  %v63 = vadd.f32 %v42, %v52
  %v64 = vadd.f32 %v43, %v52
  %v65 = vadd.f32 %v44, %v52
  %v66 = vadd.f32 %v45, %v52
  %v67 = vadd.f32 %v46, %v52
  %v68 = vadd.f32 %v47, %v52
  %v69 = vmax.f32 %v53, 0.0
  %v70 = vmax.f32 %v54, 0.0
  %v71 = vmax.f32 %v55, 0.0
  %v72 = vmax.f32 %v56, 0.0
  %v73 = vmax.f32 %v57, 0.0
  %v74 = vmax.f32 %v58, 0.0
  %v75 = vmax.f32 %v59, 0.0
  %v76 = vmax.f32 %v60, 0.0
  %v77 = vmax.f32 %v61, 0.0
  %v78 = vmax.f32 %v62, 0.0
  %v79 = vmax.f32 %v63, 0.0
  %v80 = vmax.f32 %v64, 0.0
  %v81 = vmax.f32 %v65, 0.0
  %v82 = vmax.f32 %v66, 0.0
  %v83 = vmax.f32 %v67, 0.0
  %v84 = vmax.f32 %v68, 0.0
  %85 = vst [vmem:[%s2] sm:$0xff] %v69
  %86 = vst [vmem:[%s2 + $0x8] sm:$0xff] %v70
  %87 = vst [vmem:[%s2 + $0x10] sm:$0xff] %v71
  %88 = vst [vmem:[%s2 + $0x18] sm:$0xff] %v72
  %89 = vst [vmem:[%s2 + $0x20] sm:$0xff] %v73
  %90 = vst [vmem:[%s2 + $0x28] sm:$0xff] %v74
  %91 = vst [vmem:[%s2 + $0x30] sm:$0xff] %v75
  %92 = vst [vmem:[%s2 + $0x38] sm:$0xff] %v76
  %93 = vst [vmem:[%s2 + $0x40] sm:$0xff] %v77
  %94 = vst [vmem:[%s2 + $0x48] sm:$0xff] %v78
  %95 = vst [vmem:[%s2 + $0x50] sm:$0xff] %v79
  %96 = vst [vmem:[%s2 + $0x58] sm:$0xff] %v80
  %97 = vst [vmem:[%s2 + $0x60] sm:$0xff] %v81
  %98 = vst [vmem:[%s2 + $0x68] sm:$0xff] %v82
  %99 = vst [vmem:[%s2 + $0x70] sm:$0xff] %v83
  %100 = vst [vmem:[%s2 + $0x78] sm:$0xff] %v84
  // Predicated region
  $region10: #{residual_block.5} parent=0 // pred_check
    _
  $region11: #{residual_block.5} parent=0 // pred_check_branch
    %102 = sbr.rel (0) target = $region13
  $region12: #{residual_block.5} parent=0 // pred_region
    _
  $region13: #{residual_block.5} parent=0 // pred_fallthru
    _
  // Predicated region
  $region14: #{residual_block.5} parent=0 // pred_check
    _
  $region15: #{residual_block.5} parent=0 // pred_check_branch
    %104 = sbr.rel (0) target = $region17
  $region16: #{residual_block.5} parent=0 // pred_region
    _
  $region17: #{residual_block.5} parent=0 // pred_fallthru
    _

// kernel: residual_block.7
$region0: #{residual_block.7}
  #allocation0 [shape = 'u32[]', space=smem, size = 0x4, offset = 0x4, fixed_abs, tag = 'smem constant byte address 0x4 - core index']
  #allocation1 [shape = 'u32[144,128]{1,0:T(1,128)}', space=vmem, size = 0x12000, scoped, tag = 'internal scratch']
  %s0 = inlined_call_operand.vmem [shape: f32[128,128], index: 0, kind: input, shape index: {}]
  %s1 = inlined_call_operand.vmem [shape: f32[2,128], index: 1, kind: input, shape index: {}]
  %s2 = inlined_call_operand.vmem [shape: f32[128,128], index: 2, kind: input, shape index: {}]
  %s3 = inlined_call_operand.vmem [shape: f32[2,128], index: 3, kind: input, shape index: {}]
  %s4 = inlined_call_operand.vmem [shape: f32[128,128], index: 4, kind: output, shape index: {}]
  %s5 = sld [smem:[#allocation0]]
  $region26: #{residual_block.7} parent=0
    _
  %s7 = ssub.s32 1, %s5
  %s8 = scalar_select 0, %s7, %s5
  // Predicated region
  $region2: #{residual_block.7} parent=0 // pred_check
    _
  $region3: #{residual_block.7} parent=0 // pred_check_branch
    %10 = sbr.rel (0) target = $region5
  $region4: #{residual_block.7} parent=0 // pred_region
    _
  $region5: #{residual_block.7} parent=0 // pred_fallthru
    _
  // Predicated region
  $region6: #{residual_block.7} parent=0 // pred_check
    _
  $region7: #{residual_block.7} parent=0 // pred_check_branch
    %12 = sbr.rel (0) target = $region9
  $region8: #{residual_block.7} parent=0 // pred_region
    _
  $region9: #{residual_block.7} parent=0 // pred_fallthru
    _
  // Predicated region
  $region10: #{residual_block.7} parent=0 // pred_check
    _
  $region11: #{residual_block.7} parent=0 // pred_check_branch
    %14 = sbr.rel (0) target = $region13
  $region12: #{residual_block.7} parent=0 // pred_region
    _
  $region13: #{residual_block.7} parent=0 // pred_fallthru
    _
  // Predicated region
  $region14: #{residual_block.7} parent=0 // pred_check
    _
  $region15: #{residual_block.7} parent=0 // pred_check_branch
    %16 = sbr.rel (0) target = $region17
  $region16: #{residual_block.7} parent=0 // pred_region
    _
  $region17: #{residual_block.7} parent=0 // pred_fallthru
    _
  %v17 = vld [vmem:[%s0] sm:$0xff]
  %v18 = vld [vmem:[%s0 + $0x8] sm:$0xff]
  %v19 = vld [vmem:[%s0 + $0x10] sm:$0xff]
  %v20 = vld [vmem:[%s0 + $0x18] sm:$0xff]
  %v21 = vld [vmem:[%s0 + $0x20] sm:$0xff]
  %v22 = vld [vmem:[%s0 + $0x28] sm:$0xff]
  %v23 = vld [vmem:[%s0 + $0x30] sm:$0xff]
  %v24 = vld [vmem:[%s0 + $0x38] sm:$0xff]
  %v25 = vld [vmem:[%s0 + $0x40] sm:$0xff]
  %v26 = vld [vmem:[%s0 + $0x48] sm:$0xff]
  %v27 = vld [vmem:[%s0 + $0x50] sm:$0xff]
  %v28 = vld [vmem:[%s0 + $0x58] sm:$0xff]
  %v29 = vld [vmem:[%s0 + $0x60] sm:$0xff]
  %v30 = vld [vmem:[%s0 + $0x68] sm:$0xff]
  %v31 = vld [vmem:[%s0 + $0x70] sm:$0xff]
  %v32 = vld [vmem:[%s0 + $0x78] sm:$0xff]
  %v33 = vld [vmem:[%s1] sm:$0x1]
  %v34 = vlaneseq
  %v35 = vshrl.u32 %v34, 7
  %v36 = vsub.s32 0, %v35
  %v37 = vrot.slane %v33, %v36
  %v38 = vmul.f32 %v17, %v37
  %v39 = vmul.f32 %v18, %v37
  %v40 = vmul.f32 %v19, %v37
  %v41 = vmul.f32 %v20, %v37
  %v42 = vmul.f32 %v21, %v37
  %v43 = vmul.f32 %v22, %v37
  %v44 = vmul.f32 %v23, %v37
  %v45 = vmul.f32 %v24, %v37
  %v46 = vmul.f32 %v25, %v37
  %v47 = vmul.f32 %v26, %v37
  %v48 = vmul.f32 %v27, %v37
  %v49 = vmul.f32 %v28, %v37
  %v50 = vmul.f32 %v29, %v37
  %v51 = vmul.f32 %v30, %v37
  %v52 = vmul.f32 %v31, %v37
  %v53 = vmul.f32 %v32, %v37
  %v54 = vld [vmem:[%s1 + $0x1] sm:$0x1]
  %v55 = vlaneseq
  %v56 = vshrl.u32 %v55, 7
  %v57 = vsub.s32 0, %v56
  %v58 = vrot.slane %v54, %v57
  %v59 = vadd.f32 %v38, %v58
  %v60 = vadd.f32 %v39, %v58
  %v61 = vadd.f32 %v40, %v58
  %v62 = vadd.f32 %v41, %v58
  %v63 = vadd.f32 %v42, %v58
  %v64 = vadd.f32 %v43, %v58
  %v65 = vadd.f32 %v44, %v58
  %v66 = vadd.f32 %v45, %v58
  %v67 = vadd.f32 %v46, %v58
  %v68 = vadd.f32 %v47, %v58
  %v69 = vadd.f32 %v48, %v58
  %v70 = vadd.f32 %v49, %v58
  %v71 = vadd.f32 %v50, %v58
  %v72 = vadd.f32 %v51, %v58
  %v73 = vadd.f32 %v52, %v58
  %v74 = vadd.f32 %v53, %v58
  %v75 = vld [vmem:[%s2] sm:$0xff]
  %v76 = vld [vmem:[%s2 + $0x8] sm:$0xff]
  %v77 = vld [vmem:[%s2 + $0x10] sm:$0xff]
  %v78 = vld [vmem:[%s2 + $0x18] sm:$0xff]
  %v79 = vld [vmem:[%s2 + $0x20] sm:$0xff]
  %v80 = vld [vmem:[%s2 + $0x28] sm:$0xff]
  %v81 = vld [vmem:[%s2 + $0x30] sm:$0xff]
  %v82 = vld [vmem:[%s2 + $0x38] sm:$0xff]
  %v83 = vld [vmem:[%s2 + $0x40] sm:$0xff]
  %v84 = vld [vmem:[%s2 + $0x48] sm:$0xff]
  %v85 = vld [vmem:[%s2 + $0x50] sm:$0xff]
  %v86 = vld [vmem:[%s2 + $0x58] sm:$0xff]
  %v87 = vld [vmem:[%s2 + $0x60] sm:$0xff]
  %v88 = vld [vmem:[%s2 + $0x68] sm:$0xff]
  %v89 = vld [vmem:[%s2 + $0x70] sm:$0xff]
  %v90 = vld [vmem:[%s2 + $0x78] sm:$0xff]
  %v91 = vld [vmem:[%s3] sm:$0x1]
  %v92 = vlaneseq
  %v93 = vshrl.u32 %v92, 7
  %v94 = vsub.s32 0, %v93
  %v95 = vrot.slane %v91, %v94
  %v96 = vmul.f32 %v75, %v95
  %v97 = vmul.f32 %v76, %v95
  %v98 = vmul.f32 %v77, %v95
  %v99 = vmul.f32 %v78, %v95
  %v100 = vmul.f32 %v79, %v95
  %v101 = vmul.f32 %v80, %v95
  %v102 = vmul.f32 %v81, %v95
  %v103 = vmul.f32 %v82, %v95
  %v104 = vmul.f32 %v83, %v95
  %v105 = vmul.f32 %v84, %v95
  %v106 = vmul.f32 %v85, %v95
  %v107 = vmul.f32 %v86, %v95
  %v108 = vmul.f32 %v87, %v95
  %v109 = vmul.f32 %v88, %v95
  %v110 = vmul.f32 %v89, %v95
  %v111 = vmul.f32 %v90, %v95
  %v112 = vadd.f32 %v59, %v96
  %v113 = vadd.f32 %v60, %v97
  %v114 = vadd.f32 %v61, %v98
  %v115 = vadd.f32 %v62, %v99
  %v116 = vadd.f32 %v63, %v100
  %v117 = vadd.f32 %v64, %v101
  %v118 = vadd.f32 %v65, %v102
  %v119 = vadd.f32 %v66, %v103
  %v120 = vadd.f32 %v67, %v104
  %v121 = vadd.f32 %v68, %v105
  %v122 = vadd.f32 %v69, %v106
  %v123 = vadd.f32 %v70, %v107
  %v124 = vadd.f32 %v71, %v108
  %v125 = vadd.f32 %v72, %v109
  %v126 = vadd.f32 %v73, %v110
  %v127 = vadd.f32 %v74, %v111
  %v128 = vld [vmem:[%s3 + $0x1] sm:$0x1]
  %v129 = vlaneseq
  %v130 = vshrl.u32 %v129, 7
  %v131 = vsub.s32 0, %v130
  %v132 = vrot.slane %v128, %v131
  %v133 = vadd.f32 %v112, %v132
  %v134 = vadd.f32 %v113, %v132
  %v135 = vadd.f32 %v114, %v132
  %v136 = vadd.f32 %v115, %v132
  %v137 = vadd.f32 %v116, %v132
  %v138 = vadd.f32 %v117, %v132
  %v139 = vadd.f32 %v118, %v132
  %v140 = vadd.f32 %v119, %v132
  %v141 = vadd.f32 %v120, %v132
  %v142 = vadd.f32 %v121, %v132
  %v143 = vadd.f32 %v122, %v132
  %v144 = vadd.f32 %v123, %v132
  %v145 = vadd.f32 %v124, %v132
  %v146 = vadd.f32 %v125, %v132
  %v147 = vadd.f32 %v126, %v132
  %v148 = vadd.f32 %v127, %v132
  %v149 = vmax.f32 %v133, 0.0
  %v150 = vmax.f32 %v134, 0.0
  %v151 = vmax.f32 %v135, 0.0
  %v152 = vmax.f32 %v136, 0.0
  %v153 = vmax.f32 %v137, 0.0
  %v154 = vmax.f32 %v138, 0.0
  %v155 = vmax.f32 %v139, 0.0
  %v156 = vmax.f32 %v140, 0.0
  %v157 = vmax.f32 %v141, 0.0
  %v158 = vmax.f32 %v142, 0.0
  %v159 = vmax.f32 %v143, 0.0
  %v160 = vmax.f32 %v144, 0.0
  %v161 = vmax.f32 %v145, 0.0
  %v162 = vmax.f32 %v146, 0.0
  %v163 = vmax.f32 %v147, 0.0
  %v164 = vmax.f32 %v148, 0.0
  %165 = vst [vmem:[%s4] sm:$0xff] %v149
  %166 = vst [vmem:[%s4 + $0x8] sm:$0xff] %v150
  %167 = vst [vmem:[%s4 + $0x10] sm:$0xff] %v151
  %168 = vst [vmem:[%s4 + $0x18] sm:$0xff] %v152
  %169 = vst [vmem:[%s4 + $0x20] sm:$0xff] %v153
  %170 = vst [vmem:[%s4 + $0x28] sm:$0xff] %v154
  %171 = vst [vmem:[%s4 + $0x30] sm:$0xff] %v155
  %172 = vst [vmem:[%s4 + $0x38] sm:$0xff] %v156
  %173 = vst [vmem:[%s4 + $0x40] sm:$0xff] %v157
  %174 = vst [vmem:[%s4 + $0x48] sm:$0xff] %v158
  %175 = vst [vmem:[%s4 + $0x50] sm:$0xff] %v159
  %176 = vst [vmem:[%s4 + $0x58] sm:$0xff] %v160
  %177 = vst [vmem:[%s4 + $0x60] sm:$0xff] %v161
  %178 = vst [vmem:[%s4 + $0x68] sm:$0xff] %v162
  %179 = vst [vmem:[%s4 + $0x70] sm:$0xff] %v163
  %180 = vst [vmem:[%s4 + $0x78] sm:$0xff] %v164
  // Predicated region
  $region18: #{residual_block.7} parent=0 // pred_check
    _
  $region19: #{residual_block.7} parent=0 // pred_check_branch
    %182 = sbr.rel (0) target = $region21
  $region20: #{residual_block.7} parent=0 // pred_region
    _
  $region21: #{residual_block.7} parent=0 // pred_fallthru
    _
  // Predicated region
  $region22: #{residual_block.7} parent=0 // pred_check
    _
  $region23: #{residual_block.7} parent=0 // pred_check_branch
    %184 = sbr.rel (0) target = $region25
  $region24: #{residual_block.7} parent=0 // pred_region
    _
  $region25: #{residual_block.7} parent=0 // pred_fallthru
    _

// kernel: residual_block.6
$region0: #{residual_block.6}
  #allocation0 [shape = 'u32[]', space=smem, size = 0x4, offset = 0x4, fixed_abs, tag = 'smem constant byte address 0x4 - core index']
  #allocation1 [shape = 'u32[144,128]{1,0:T(1,128)}', space=vmem, size = 0x12000, scoped, tag = 'internal scratch']
  %s0 = inlined_call_operand.vmem [shape: f32[2,10,10,128], index: 0, kind: input, shape index: {}]
  %s1 = inlined_call_operand.vmem [shape: bf16[9,128,128], index: 1, kind: input, shape index: {}]
  %s2 = inlined_call_operand.vmem [shape: f32[2,64,128], index: 2, kind: output, shape index: {0}]
  %s3 = inlined_call_operand.vmem [shape: f32[2,2,128], index: 3, kind: output, shape index: {1}]
  %4 = xla_tuple %s2, %s3
  %s5 = sld [smem:[#allocation0]]
  $region49: #{residual_block.6} parent=0
    _
  %s7 = ssub.s32 1, %s5
  %s8 = scalar_select 0, %s7, %s5
  loop: start=0, step=1, limit=4
  $region2: #{residual_block.6} parent=0 // loop_pre_header
    _
  $region3: #{residual_block.6} parent=0 // loop_header
    %s10 = sphi 0, %s14
    %p11 = scmp.ge.s32.totalorder %s10, 4
    %s20 = sphi 0, %s22
    %s23 = sphi 0, %s20
    %s24 = sphi 0, %s23
    %s40 = sphi 0, %s24
    %s44 = sphi 0, %s44
    %s46 = sphi 0, %s44
    %s47 = sphi 0, %s46
    %s61 = sphi 0, %s47
    %s67 = sphi 0, %s69
    %s70 = sphi 0, %s67
    %s71 = sphi 0, %s70
    %s87 = sphi 0, %s71
    %s93 = sphi 0, %s95
    %s96 = sphi 0, %s93
    %s97 = sphi 0, %s96
    %s113 = sphi 0, %s97
  $region4: #{residual_block.6} parent=0 // loop_header_branch
    %13 = sbr.rel (%p11) target = $region8
  $region5: #{residual_block.6} parent=0 // loop_body
    %s15 = ssub.s32 %s10, 1
    %s16 = ssub.s32 %s10, 2
    %s17 = sadd.s32 %s10, 1
    %s18 = ssub.s32 %s10, %s17
    %p19 = scmp.eq.s32.totalorder %s18, 0
    %s21 = sadd.s32 %s20, 1
    %s22 = scalar_select %p19, %s20, %s21
    %p25 = pneg %p19
    %p26 = scmp.eq.s32.totalorder %s10, 1
    %p27 = por %p25, %p26
    %p28 = scmp.ne.s32.totalorder %s20, %s23
    %p29 = scmp.eq.s32.totalorder %s10, 0
    %p30 = por %p28, %p29
    %p31 = scmp.ne.s32.totalorder %s20, %s23
    %p32 = scmp.eq.s32.totalorder %s15, 1
    %p33 = por %p31, %p32
    %p34 = scmp.ne.s32.totalorder %s23, %s24
    %p35 = scmp.eq.s32.totalorder %s15, 0
    %p36 = por %p34, %p35
    %p37 = scmp.ne.s32.totalorder %s23, %s24
    %p38 = scmp.eq.s32.totalorder %s16, 1
    %p39 = por %p37, %p38
    %p41 = scmp.ne.s32.totalorder %s24, %s40
    %p42 = scmp.eq.s32.totalorder %s16, 0
    %p43 = por %p41, %p42
    %s45 = sadd.s32 %s44, 1
    %p48 = scmp.eq.s32.totalorder %s10, 1
    %p49 = scmp.ne.s32.totalorder %s44, %s46
    %p50 = scmp.eq.s32.totalorder %s10, 0
    %p51 = por %p49, %p50
    %p52 = scmp.ne.s32.totalorder %s44, %s46
    %p53 = scmp.eq.s32.totalorder %s15, 1
    %p54 = por %p52, %p53
    %p55 = scmp.ne.s32.totalorder %s46, %s47
    %p56 = scmp.eq.s32.totalorder %s15, 0
    %p57 = por %p55, %p56
    %p58 = scmp.ne.s32.totalorder %s46, %s47
    %p59 = scmp.eq.s32.totalorder %s16, 1
    %p60 = por %p58, %p59
    %p62 = scmp.ne.s32.totalorder %s47, %s61
    %p63 = scmp.eq.s32.totalorder %s16, 0
    %p64 = por %p62, %p63
    %s65 = ssub.s32 %s10, %s17
    %p66 = scmp.eq.s32.totalorder %s65, 0
    %s68 = sadd.s32 %s67, 1
    %s69 = scalar_select %p66, %s67, %s68
    %p72 = pneg %p66
    %p73 = scmp.eq.s32.totalorder %s10, 1
    %p74 = por %p72, %p73
    %p75 = scmp.ne.s32.totalorder %s67, %s70
    %p76 = scmp.eq.s32.totalorder %s10, 0
    %p77 = por %p75, %p76
    %p78 = scmp.ne.s32.totalorder %s67, %s70
    %p79 = scmp.eq.s32.totalorder %s15, 1
    %p80 = por %p78, %p79
    %p81 = scmp.ne.s32.totalorder %s70, %s71
    %p82 = scmp.eq.s32.totalorder %s15, 0
    %p83 = por %p81, %p82
    %p84 = scmp.ne.s32.totalorder %s70, %s71
    %p85 = scmp.eq.s32.totalorder %s16, 1
    %p86 = por %p84, %p85
    %p88 = scmp.ne.s32.totalorder %s71, %s87
    %p89 = scmp.eq.s32.totalorder %s16, 0
    %p90 = por %p88, %p89
    %s91 = ssub.s32 %s10, %s17
    %p92 = scmp.eq.s32.totalorder %s91, 0
    %s94 = sadd.s32 %s93, 1
    %s95 = scalar_select %p92, %s93, %s94
    %p98 = pneg %p92
    %p99 = scmp.eq.s32.totalorder %s10, 1
    %p100 = por %p98, %p99
    %p101 = scmp.ne.s32.totalorder %s93, %s96
    %p102 = scmp.eq.s32.totalorder %s10, 0
    %p103 = por %p101, %p102
    %p104 = scmp.ne.s32.totalorder %s93, %s96
    %p105 = scmp.eq.s32.totalorder %s15, 1
    %p106 = por %p104, %p105
    %p107 = scmp.ne.s32.totalorder %s96, %s97
    %p108 = scmp.eq.s32.totalorder %s15, 0
    %p109 = por %p107, %p108
    %p110 = scmp.ne.s32.totalorder %s96, %s97
    %p111 = scmp.eq.s32.totalorder %s16, 1
    %p112 = por %p110, %p111
    %p114 = scmp.ne.s32.totalorder %s97, %s113
    %p115 = scmp.eq.s32.totalorder %s16, 0
    %p116 = por %p114, %p115
    %p117 = scmp.le.s32.totalorder 1, %s10
    %p118 = scmp.lt.s32.totalorder %s10, 3
    %p119 = pnand %p117, %p118
    %p120 = pneg %p119
    // Predicated region
    $region9: #{residual_block.6} parent=5 // pred_check
      _
    $region10: #{residual_block.6} parent=5 // pred_check_branch
      %122 = sbr.rel (%p119) target = $region12
    $region11: #{residual_block.6} parent=5 // pred_region
      %s123 = ssub.s32 %s10, 1
      // Predicated region
      $region13: #{residual_block.6} parent=11 // pred_check
        %p124 = pneg %p57
      $region14: #{residual_block.6} parent=11 // pred_check_branch
        %126 = sbr.rel (%p124) target = $region16
      $region15: #{residual_block.6} parent=11 // pred_region
        _
      $region16: #{residual_block.6} parent=11 // pred_fallthru
        _
    $region12: #{residual_block.6} parent=5 // pred_fallthru
      _
    %p127 = scmp.lt.s32.totalorder %s10, 2
    // Predicated region
    $region17: #{residual_block.6} parent=5 // pred_check
      %p128 = pneg %p127
    $region18: #{residual_block.6} parent=5 // pred_check_branch
      %130 = sbr.rel (%p128) target = $region20
    $region19: #{residual_block.6} parent=5 // pred_region
      // Predicated region
      $region21: #{residual_block.6} parent=19 // pred_check
        %p131 = pneg %p30
      $region22: #{residual_block.6} parent=19 // pred_check_branch
        %133 = sbr.rel (%p131) target = $region24
      $region23: #{residual_block.6} parent=19 // pred_region
        %p134 = scmp.lt.s32.totalorder %s10, 1
        %s135 = scalar_select %p134, %s10, 1
        %s136 = smul.addr %s135, 20
        %s137 = smul.addr %s136, 8
        %s138 = scalar_lea.vmem %s0, %s137
      $region24: #{residual_block.6} parent=19 // pred_fallthru
        _
    $region20: #{residual_block.6} parent=5 // pred_fallthru
      _
    %p139 = scmp.le.s32.totalorder 1, %s10
    %p140 = scmp.lt.s32.totalorder %s10, 3
    %p141 = pnand %p139, %p140
    %p142 = pneg %p141
    // Predicated region
    $region25: #{residual_block.6} parent=5 // pred_check
      _
    $region26: #{residual_block.6} parent=5 // pred_check_branch
      %144 = sbr.rel (%p141) target = $region28
    $region27: #{residual_block.6} parent=5 // pred_region
      %s145 = ssub.s32 %s10, 1
      %p146 = scmp.lt.s32.totalorder %s15, 1
      %s147 = scalar_select %p146, %s15, 1
      %s148 = smul.addr %s147, 20
      %s149 = smul.addr %s148, 8
      %s150 = scalar_lea.vmem %s0, %s149
      %p151 = pneg %p36
      %p152 = pneg %p33
      %p153 = pneg %p57
      %p154 = pneg %p54
      %p155 = pneg %p83
      %p156 = pneg %p80
      %p157 = scmp.lt.s32.totalorder %s15, 1
      %s158 = scalar_select %p157, %s15, 1
      %s159 = smul.addr %s158, 8
      %s160 = smul.addr %s159, 8
      %s161 = scalar_lea.vmem %s2, %s160
      %p162 = pneg %p109
      %p163 = pneg %p106
      %p164 = scmp.lt.s32.totalorder %s15, 1
      %s165 = scalar_select %p164, %s15, 1
      %s166 = smul.addr %s165, 2
      %s167 = scalar_lea.vmem %s3, %s166
      %p168 = scmp.lt.s32.totalorder %s15, 1
      %s169 = scalar_select %p168, %s15, 1
      %s170 = smul.addr %s169, 20
      %s171 = smul.addr %s170, 8
      %s172 = scalar_lea.vmem %s0, %s171
      %p173 = scmp.lt.s32.totalorder %s15, 1
      %s174 = scalar_select %p173, %s15, 1
      %s175 = smul.addr %s174, 8
      %s176 = smul.addr %s175, 8
      %s177 = scalar_lea.vmem %s2, %s176
      %p178 = scmp.lt.s32.totalorder %s15, 1
      %s179 = scalar_select %p178, %s15, 1
      %s180 = smul.addr %s179, 2
      %s181 = scalar_lea.vmem %s3, %s180
      %v183 = vld [vmem:[%s172] sm:$0xff]
      %v184 = vld [vmem:[%s172 + $0x10] sm:$0xff]
      %v185 = vld [vmem:[%s172 + $0x20] sm:$0xff]
      %v186 = vld [vmem:[%s172 + $0x30] sm:$0xff]
      %v187 = vld [vmem:[%s172 + $0x40] sm:$0xff]
      %v188 = vld [vmem:[%s172 + $0x50] sm:$0xff]
      %v189 = vld [vmem:[%s172 + $0x60] sm:$0xff]
      %v190 = vld [vmem:[%s172 + $0x70] sm:$0xff]
      %v191 = vpack.c.bf16 %v184, %v183
      %v192 = vpack.c.bf16 %v186, %v185
      %v193 = vpack.c.bf16 %v188, %v187
      %v194 = vpack.c.bf16 %v190, %v189
      %v195 = vld [vmem:[%s1] sm:$0xf]
      %v196 = vld [vmem:[%s1 + $0x4] sm:$0xf]
      %v197 = vld [vmem:[%s1 + $0x8] sm:$0xf]
      %v198 = vld [vmem:[%s1 + $0xc] sm:$0xf]
      %v199 = vld [vmem:[%s1 + $0x10] sm:$0xf]
      %v200 = vld [vmem:[%s1 + $0x14] sm:$0xf]
      %v201 = vld [vmem:[%s1 + $0x18] sm:$0xf]
      %v202 = vld [vmem:[%s1 + $0x1c] sm:$0xf]
      %v203 = vld [vmem:[%s1 + $0x20] sm:$0xf]
      %v204 = vld [vmem:[%s1 + $0x24] sm:$0xf]
      %v205 = vld [vmem:[%s1 + $0x28] sm:$0xf]
      %v206 = vld [vmem:[%s1 + $0x2c] sm:$0xf]
      %v207 = vld [vmem:[%s1 + $0x30] sm:$0xf]
      %v208 = vld [vmem:[%s1 + $0x34] sm:$0xf]
      %v209 = vld [vmem:[%s1 + $0x38] sm:$0xf]
      %v210 = vld [vmem:[%s1 + $0x3c] sm:$0xf]
      %v211 = vld [vmem:[%s172 + $0x1] sm:$0xff]
      %v212 = vld [vmem:[%s172 + $0x11] sm:$0xff]
      %v213 = vld [vmem:[%s172 + $0x21] sm:$0xff]
      %v214 = vld [vmem:[%s172 + $0x31] sm:$0xff]
      %v215 = vld [vmem:[%s172 + $0x41] sm:$0xff]
      %v216 = vld [vmem:[%s172 + $0x51] sm:$0xff]
      %v217 = vld [vmem:[%s172 + $0x61] sm:$0xff]
      %v218 = vld [vmem:[%s172 + $0x71] sm:$0xff]
      %v219 = vpack.c.bf16 %v212, %v211
      %v220 = vpack.c.bf16 %v214, %v213
      %v221 = vpack.c.bf16 %v216, %v215
      %v222 = vpack.c.bf16 %v218, %v217
      %s223 = scalar_lea.vmem %s1, 64
      %v224 = vld [vmem:[%s223] sm:$0xf]
      %v225 = vld [vmem:[%s223 + $0x4] sm:$0xf]
      %v226 = vld [vmem:[%s223 + $0x8] sm:$0xf]
      %v227 = vld [vmem:[%s223 + $0xc] sm:$0xf]
      %v228 = vld [vmem:[%s223 + $0x10] sm:$0xf]
      %v229 = vld [vmem:[%s223 + $0x14] sm:$0xf]
      %v230 = vld [vmem:[%s223 + $0x18] sm:$0xf]
      %v231 = vld [vmem:[%s223 + $0x1c] sm:$0xf]
      %v232 = vld [vmem:[%s223 + $0x20] sm:$0xf]
      %v233 = vld [vmem:[%s223 + $0x24] sm:$0xf]
      %v234 = vld [vmem:[%s223 + $0x28] sm:$0xf]
      %v235 = vld [vmem:[%s223 + $0x2c] sm:$0xf]
      %v236 = vld [vmem:[%s223 + $0x30] sm:$0xf]
      %v237 = vld [vmem:[%s223 + $0x34] sm:$0xf]
      %v238 = vld [vmem:[%s223 + $0x38] sm:$0xf]
      %v239 = vld [vmem:[%s223 + $0x3c] sm:$0xf]
      %v256 = vunpack.c.l.b16 %v224
      %v257 = vunpack.c.l.b16 %v225
      %v258 = vunpack.c.l.b16 %v226
      %v259 = vunpack.c.l.b16 %v227
      %v260 = vunpack.c.l.b16 %v228
      %v261 = vunpack.c.l.b16 %v229
      %v262 = vunpack.c.l.b16 %v230
      %v263 = vunpack.c.l.b16 %v231
      %v264 = vunpack.c.l.b16 %v232
      %v265 = vunpack.c.l.b16 %v233
      %v266 = vunpack.c.l.b16 %v234
      %v267 = vunpack.c.l.b16 %v235
      %v268 = vunpack.c.l.b16 %v236
      %v269 = vunpack.c.l.b16 %v237
      %v270 = vunpack.c.l.b16 %v238
      %v271 = vunpack.c.l.b16 %v239
      %v272 = vpack.c.b16 %v257, %v256
      %v273 = vpack.c.b16 %v259, %v258
      %v274 = vpack.c.b16 %v261, %v260
      %v275 = vpack.c.b16 %v263, %v262
      %v276 = vpack.c.b16 %v265, %v264
      %v277 = vpack.c.b16 %v267, %v266
      %v278 = vpack.c.b16 %v269, %v268
      %v279 = vpack.c.b16 %v271, %v270
      %288 = vmatprep.subr.bf16.mxu0 0
      %289 = vmatpush1.bf16.msra.mxu0 %v272
      %290 = vmatprep.subr.bf16.mxu0 0
      %291 = vmatpush1.bf16.msra.mxu0 %v273
      %292 = vmatprep.subr.bf16.mxu0 0
      %293 = vmatpush1.bf16.msra.mxu0 %v274
      %294 = vmatprep.subr.bf16.mxu0 0
      %295 = vmatpush1.bf16.msra.mxu0 %v275
      %296 = vmatprep.subr.bf16.mxu0 0
      %297 = vmatpush1.bf16.msra.mxu0 %v276
      %298 = vmatprep.subr.bf16.mxu0 0
      %299 = vmatpush1.bf16.msra.mxu0 %v277
      %300 = vmatprep.subr.bf16.mxu0 0
      %301 = vmatpush1.bf16.msra.mxu0 %v278
      %302 = vmatprep.subr.bf16.mxu0 0
      %303 = vmatpush1.bf16.msra.mxu0 %v279
      %304 = vmatprep.subr.bf16.mxu0 0
      %305 = vmatpush1.bf16.msra.mxu0 0
      %306 = vmatprep.subr.bf16.mxu0 0
      %307 = vmatpush1.bf16.msra.mxu0 0
      %308 = vmatprep.subr.bf16.mxu0 0
      %309 = vmatpush1.bf16.msra.mxu0 0
      %310 = vmatprep.subr.bf16.mxu0 0
      %311 = vmatpush1.bf16.msra.mxu0 0
      %312 = vmatprep.subr.bf16.mxu0 0
      %313 = vmatpush1.bf16.msra.mxu0 0
      %314 = vmatprep.subr.bf16.mxu0 0
      %315 = vmatpush1.bf16.msra.mxu0 0
      %316 = vmatprep.subr.bf16.mxu0 0
      %317 = vmatpush1.bf16.msra.mxu0 0
      %318 = vmatprep.subr.bf16.mxu0 0
      %319 = vmatpush1.bf16.msra.mxu0 0
      %320 = vmatprep.mubr.bf16.mxu0 0
      %321 = vmatmul.mubr.bf16.gmra.mrb[0].mxu0 %v219
      %v322 = vpop.f32.mrb[0].mxu0
      %v323 = vadd.f32 0.0, %v322
      %v324 = vpop.f32.mrb[0].mxu0
      %v325 = vpop.f32.mrb[0].mxu0
      %v326 = vadd.f32 0.0, %v325
      %v327 = vpop.f32.mrb[0].mxu0
      %328 = vmatprep.mubr.bf16.mxu0 0
      %329 = vmatmul.mubr.bf16.gmra.mrb[0].mxu0 %v220
      %v330 = vpop.f32.mrb[0].mxu0
      %v331 = vadd.f32 0.0, %v330
      %v332 = vpop.f32.mrb[0].mxu0
      %v333 = vpop.f32.mrb[0].mxu0
      %v334 = vadd.f32 0.0, %v333
      %v335 = vpop.f32.mrb[0].mxu0
      %336 = vmatprep.mubr.bf16.mxu0 0
      %337 = vmatmul.mubr.bf16.gmra.mrb[0].mxu0 %v221
      %v338 = vpop.f32.mrb[0].mxu0
      %v339 = vadd.f32 0.0, %v338
      %v340 = vpop.f32.mrb[0].mxu0
      %v341 = vpop.f32.mrb[0].mxu0
      %v342 = vadd.f32 0.0, %v341
      %v343 = vpop.f32.mrb[0].mxu0
      %344 = vmatprep.mubr.bf16.mxu0 0
      %345 = vmatmul.mubr.bf16.gmra.mrb[0].mxu0 %v222
      %v346 = vpop.f32.mrb[0].mxu0
      %v347 = vadd.f32 0.0, %v346
      %v348 = vpop.f32.mrb[0].mxu0
      %v349 = vpop.f32.mrb[0].mxu0
      %v350 = vadd.f32 0.0, %v349
      %v351 = vpop.f32.mrb[0].mxu0
      %352 = vdwg.mxu0
      %v369 = vunpack.c.l.b16 %v195
      %v370 = vunpack.c.l.b16 %v196
      %v371 = vunpack.c.l.b16 %v197
      %v372 = vunpack.c.l.b16 %v198
      %v373 = vunpack.c.l.b16 %v199
      %v374 = vunpack.c.l.b16 %v200
      %v375 = vunpack.c.l.b16 %v201
      %v376 = vunpack.c.l.b16 %v202
      %v377 = vunpack.c.l.b16 %v203
      %v378 = vunpack.c.l.b16 %v204
      %v379 = vunpack.c.l.b16 %v205
      %v380 = vunpack.c.l.b16 %v206
      %v381 = vunpack.c.l.b16 %v207
      %v382 = vunpack.c.l.b16 %v208
      %v383 = vunpack.c.l.b16 %v209
      %v384 = vunpack.c.l.b16 %v210
      %v385 = vpack.c.b16 %v370, %v369
      %v386 = vpack.c.b16 %v372, %v371
      %v387 = vpack.c.b16 %v374, %v373
      %v388 = vpack.c.b16 %v376, %v375
      %v389 = vpack.c.b16 %v378, %v377
      %v390 = vpack.c.b16 %v380, %v379
      %v391 = vpack.c.b16 %v382, %v381
      %v392 = vpack.c.b16 %v384, %v383
      %401 = vmatprep.subr.bf16.mxu0 0
      %402 = vmatpush1.bf16.msra.mxu0 %v385
      %403 = vmatprep.subr.bf16.mxu0 0
      %404 = vmatpush1.bf16.msra.mxu0 %v386
      %405 = vmatprep.subr.bf16.mxu0 0
      %406 = vmatpush1.bf16.msra.mxu0 %v387
      %407 = vmatprep.subr.bf16.mxu0 0
      %408 = vmatpush1.bf16.msra.mxu0 %v388
      %409 = vmatprep.subr.bf16.mxu0 0
      %410 = vmatpush1.bf16.msra.mxu0 %v389
      %411 = vmatprep.subr.bf16.mxu0 0
      %412 = vmatpush1.bf16.msra.mxu0 %v390
      %413 = vmatprep.subr.bf16.mxu0 0
      %414 = vmatpush1.bf16.msra.mxu0 %v391
      %415 = vmatprep.subr.bf16.mxu0 0
      %416 = vmatpush1.bf16.msra.mxu0 %v392
      %417 = vmatprep.subr.bf16.mxu0 0
      %418 = vmatpush1.bf16.msra.mxu0 0
      %419 = vmatprep.subr.bf16.mxu0 0
      %420 = vmatpush1.bf16.msra.mxu0 0
      %421 = vmatprep.subr.bf16.mxu0 0
      %422 = vmatpush1.bf16.msra.mxu0 0
      %423 = vmatprep.subr.bf16.mxu0 0
      %424 = vmatpush1.bf16.msra.mxu0 0
      %425 = vmatprep.subr.bf16.mxu0 0
      %426 = vmatpush1.bf16.msra.mxu0 0
      %427 = vmatprep.subr.bf16.mxu0 0
      %428 = vmatpush1.bf16.msra.mxu0 0
      %429 = vmatprep.subr.bf16.mxu0 0
      %430 = vmatpush1.bf16.msra.mxu0 0
      %431 = vmatprep.subr.bf16.mxu0 0
      %432 = vmatpush1.bf16.msra.mxu0 0
      %433 = vmatprep.mubr.bf16.mxu0 0
      %434 = vmatmul.mubr.bf16.gmra.mrb[0].mxu0 %v191
      %v435 = vpop.f32.mrb[0].mxu0
      %v436 = vadd.f32 %v323, %v435
      %v437 = vpop.f32.mrb[0].mxu0
      %v438 = vpop.f32.mrb[0].mxu0
      %v439 = vadd.f32 %v326, %v438
      %v440 = vpop.f32.mrb[0].mxu0
      %441 = vmatprep.mubr.bf16.mxu0 0
      %442 = vmatmul.mubr.bf16.gmra.mrb[0].mxu0 %v192
      %v443 = vpop.f32.mrb[0].mxu0
      %v444 = vadd.f32 %v331, %v443
      %v445 = vpop.f32.mrb[0].mxu0
      %v446 = vpop.f32.mrb[0].mxu0
      %v447 = vadd.f32 %v334, %v446
      %v448 = vpop.f32.mrb[0].mxu0
      %449 = vmatprep.mubr.bf16.mxu0 0
      %450 = vmatmul.mubr.bf16.gmra.mrb[0].mxu0 %v193
      %v451 = vpop.f32.mrb[0].mxu0
      %v452 = vadd.f32 %v339, %v451
      %v453 = vpop.f32.mrb[0].mxu0
      %v454 = vpop.f32.mrb[0].mxu0
      %v455 = vadd.f32 %v342, %v454
      %v456 = vpop.f32.mrb[0].mxu0
      %457 = vmatprep.mubr.bf16.mxu0 0
      %458 = vmatmul.mubr.bf16.gmra.mrb[0].mxu0 %v194
      %v459 = vpop.f32.mrb[0].mxu0
      %v460 = vadd.f32 %v347, %v459
      %v461 = vpop.f32.mrb[0].mxu0
      %v462 = vpop.f32.mrb[0].mxu0
      %v463 = vadd.f32 %v350, %v462
      %v464 = vpop.f32.mrb[0].mxu0
      %465 = vdwg.mxu0
      %v466 = vld [vmem:[%s172 + $0x2] sm:$0xff]
      %v467 = vld [vmem:[%s172 + $0x12] sm:$0xff]
      %v468 = vld [vmem:[%s172 + $0x22] sm:$0xff]
      %v469 = vld [vmem:[%s172 + $0x32] sm:$0xff]
      %v470 = vld [vmem:[%s172 + $0x42] sm:$0xff]
      %v471 = vld [vmem:[%s172 + $0x52] sm:$0xff]
      %v472 = vld [vmem:[%s172 + $0x62] sm:$0xff]
      %v473 = vld [vmem:[%s172 + $0x72] sm:$0xff]
      %v474 = vpack.c.bf16 %v467, %v466
      %v475 = vpack.c.bf16 %v469, %v468
      %v476 = vpack.c.bf16 %v471, %v470
      %v477 = vpack.c.bf16 %v473, %v472
      %s478 = scalar_lea.vmem %s1, 128
      %v479 = vld [vmem:[%s478] sm:$0xf]
      %v480 = vld [vmem:[%s478 + $0x4] sm:$0xf]
      %v481 = vld [vmem:[%s478 + $0x8] sm:$0xf]
      %v482 = vld [vmem:[%s478 + $0xc] sm:$0xf]
      %v483 = vld [vmem:[%s478 + $0x10] sm:$0xf]
      %v484 = vld [vmem:[%s478 + $0x14] sm:$0xf]
      %v485 = vld [vmem:[%s478 + $0x18] sm:$0xf]
      %v486 = vld [vmem:[%s478 + $0x1c] sm:$0xf]
      %v487 = vld [vmem:[%s478 + $0x20] sm:$0xf]
      %v488 = vld [vmem:[%s478 + $0x24] sm:$0xf]
      %v489 = vld [vmem:[%s478 + $0x28] sm:$0xf]
      %v490 = vld [vmem:[%s478 + $0x2c] sm:$0xf]
      %v491 = vld [vmem:[%s478 + $0x30] sm:$0xf]
      %v492 = vld [vmem:[%s478 + $0x34] sm:$0xf]
      %v493 = vld [vmem:[%s478 + $0x38] sm:$0xf]
      %v494 = vld [vmem:[%s478 + $0x3c] sm:$0xf]
      %v511 = vunpack.c.l.b16 %v479
      %v512 = vunpack.c.l.b16 %v480
      %v513 = vunpack.c.l.b16 %v481
      %v514 = vunpack.c.l.b16 %v482
      %v515 = vunpack.c.l.b16 %v483
      %v516 = vunpack.c.l.b16 %v484
      %v517 = vunpack.c.l.b16 %v485
      %v518 = vunpack.c.l.b16 %v486
      %v519 = vunpack.c.l.b16 %v487
      %v520 = vunpack.c.l.b16 %v488
      %v521 = vunpack.c.l.b16 %v489
      %v522 = vunpack.c.l.b16 %v490
      %v523 = vunpack.c.l.b16 %v491
      %v524 = vunpack.c.l.b16 %v492
      %v525 = vunpack.c.l.b16 %v493
      %v526 = vunpack.c.l.b16 %v494
      %v527 = vpack.c.b16 %v512, %v511
      %v528 = vpack.c.b16 %v514, %v513
      %v529 = vpack.c.b16 %v516, %v515
      %v530 = vpack.c.b16 %v518, %v517
      %v531 = vpack.c.b16 %v520, %v519
      %v532 = vpack.c.b16 %v522, %v521
      %v533 = vpack.c.b16 %v524, %v523
      %v534 = vpack.c.b16 %v526, %v525
      %543 = vmatprep.subr.bf16.mxu0 0
      %544 = vmatpush1.bf16.msra.mxu0 %v527
      %545 = vmatprep.subr.bf16.mxu0 0
      %546 = vmatpush1.bf16.msra.mxu0 %v528
      %547 = vmatprep.subr.bf16.mxu0 0
      %548 = vmatpush1.bf16.msra.mxu0 %v529
      %549 = vmatprep.subr.bf16.mxu0 0
      %550 = vmatpush1.bf16.msra.mxu0 %v530
      %551 = vmatprep.subr.bf16.mxu0 0
      %552 = vmatpush1.bf16.msra.mxu0 %v531
      %553 = vmatprep.subr.bf16.mxu0 0
      %554 = vmatpush1.bf16.msra.mxu0 %v532
      %555 = vmatprep.subr.bf16.mxu0 0
      %556 = vmatpush1.bf16.msra.mxu0 %v533
      %557 = vmatprep.subr.bf16.mxu0 0
      %558 = vmatpush1.bf16.msra.mxu0 %v534
      %559 = vmatprep.subr.bf16.mxu0 0
      %560 = vmatpush1.bf16.msra.mxu0 0
      %561 = vmatprep.subr.bf16.mxu0 0
      %562 = vmatpush1.bf16.msra.mxu0 0
      %563 = vmatprep.subr.bf16.mxu0 0
      %564 = vmatpush1.bf16.msra.mxu0 0
      %565 = vmatprep.subr.bf16.mxu0 0
      %566 = vmatpush1.bf16.msra.mxu0 0
      %567 = vmatprep.subr.bf16.mxu0 0
      %568 = vmatpush1.bf16.msra.mxu0 0
      %569 = vmatprep.subr.bf16.mxu0 0
      %570 = vmatpush1.bf16.msra.mxu0 0
      %571 = vmatprep.subr.bf16.mxu0 0
      %572 = vmatpush1.bf16.msra.mxu0 0
      %573 = vmatprep.subr.bf16.mxu0 0
      %574 = vmatpush1.bf16.msra.mxu0 0
      %575 = vmatprep.mubr.bf16.mxu0 0
      %576 = vmatmul.mubr.bf16.gmra.mrb[0].mxu0 %v474
      %v577 = vpop.f32.mrb[0].mxu0
      %v578 = vadd.f32 0.0, %v577
      %v579 = vpop.f32.mrb[0].mxu0
      %v580 = vpop.f32.mrb[0].mxu0
      %v581 = vadd.f32 0.0, %v580
      %v582 = vpop.f32.mrb[0].mxu0
      %583 = vmatprep.mubr.bf16.mxu0 0
      %584 = vmatmul.mubr.bf16.gmra.mrb[0].mxu0 %v475
      %v585 = vpop.f32.mrb[0].mxu0
      %v586 = vadd.f32 0.0, %v585
      %v587 = vpop.f32.mrb[0].mxu0
      %v588 = vpop.f32.mrb[0].mxu0
      %v589 = vadd.f32 0.0, %v588
      %v590 = vpop.f32.mrb[0].mxu0
      %591 = vmatprep.mubr.bf16.mxu0 0
      %592 = vmatmul.mubr.bf16.gmra.mrb[0].mxu0 %v476
      %v593 = vpop.f32.mrb[0].mxu0
      %v594 = vadd.f32 0.0, %v593
      %v595 = vpop.f32.mrb[0].mxu0
      %v596 = vpop.f32.mrb[0].mxu0
      %v597 = vadd.f32 0.0, %v596
      %v598 = vpop.f32.mrb[0].mxu0
      %599 = vmatprep.mubr.bf16.mxu0 0
      %600 = vmatmul.mubr.bf16.gmra.mrb[0].mxu0 %v477
      %v601 = vpop.f32.mrb[0].mxu0
      %v602 = vadd.f32 0.0, %v601
      %v603 = vpop.f32.mrb[0].mxu0
      %v604 = vpop.f32.mrb[0].mxu0
      %v605 = vadd.f32 0.0, %v604
      %v606 = vpop.f32.mrb[0].mxu0
      %607 = vdwg.mxu0
      %v608 = vadd.f32 %v436, %v578
      %v609 = vadd.f32 %v439, %v581
      %v610 = vadd.f32 %v444, %v586
      %v611 = vadd.f32 %v447, %v589
      %v612 = vadd.f32 %v452, %v594
      %v613 = vadd.f32 %v455, %v597
      %v614 = vadd.f32 %v460, %v602
      %v615 = vadd.f32 %v463, %v605
      %s616 = scalar_lea.vmem %s172, 16
      %v617 = vld [vmem:[%s616] sm:$0xff]
      %v618 = vld [vmem:[%s616 + $0x10] sm:$0xff]
      %v619 = vld [vmem:[%s616 + $0x20] sm:$0xff]
      %v620 = vld [vmem:[%s616 + $0x30] sm:$0xff]
      %v621 = vld [vmem:[%s616 + $0x40] sm:$0xff]
      %v622 = vld [vmem:[%s616 + $0x50] sm:$0xff]
      %v623 = vld [vmem:[%s616 + $0x60] sm:$0xff]
      %v624 = vld [vmem:[%s616 + $0x70] sm:$0xff]
      %v625 = vpack.c.bf16 %v618, %v617
      %v626 = vpack.c.bf16 %v620, %v619
      %v627 = vpack.c.bf16 %v622, %v621
      %v628 = vpack.c.bf16 %v624, %v623
      %s629 = scalar_lea.vmem %s1, 192
      %v630 = vld [vmem:[%s629] sm:$0xf]
      %v631 = vld [vmem:[%s629 + $0x4] sm:$0xf]
      %v632 = vld [vmem:[%s629 + $0x8] sm:$0xf]
      %v633 = vld [vmem:[%s629 + $0xc] sm:$0xf]
      %v634 = vld [vmem:[%s629 + $0x10] sm:$0xf]
      %v635 = vld [vmem:[%s629 + $0x14] sm:$0xf]
      %v636 = vld [vmem:[%s629 + $0x18] sm:$0xf]
      %v637 = vld [vmem:[%s629 + $0x1c] sm:$0xf]
      %v638 = vld [vmem:[%s629 + $0x20] sm:$0xf]
      %v639 = vld [vmem:[%s629 + $0x24] sm:$0xf]
      %v640 = vld [vmem:[%s629 + $0x28] sm:$0xf]
      %v641 = vld [vmem:[%s629 + $0x2c] sm:$0xf]
      %v642 = vld [vmem:[%s629 + $0x30] sm:$0xf]
      %v643 = vld [vmem:[%s629 + $0x34] sm:$0xf]
      %v644 = vld [vmem:[%s629 + $0x38] sm:$0xf]
      %v645 = vld [vmem:[%s629 + $0x3c] sm:$0xf]
      %v662 = vunpack.c.l.b16 %v630
      %v663 = vunpack.c.l.b16 %v631
      %v664 = vunpack.c.l.b16 %v632
      %v665 = vunpack.c.l.b16 %v633
      %v666 = vunpack.c.l.b16 %v634
      %v667 = vunpack.c.l.b16 %v635
      %v668 = vunpack.c.l.b16 %v636
      %v669 = vunpack.c.l.b16 %v637
      %v670 = vunpack.c.l.b16 %v638
      %v671 = vunpack.c.l.b16 %v639
      %v672 = vunpack.c.l.b16 %v640
      %v673 = vunpack.c.l.b16 %v641
      %v674 = vunpack.c.l.b16 %v642
      %v675 = vunpack.c.l.b16 %v643
      %v676 = vunpack.c.l.b16 %v644
      %v677 = vunpack.c.l.b16 %v645
      %v678 = vpack.c.b16 %v663, %v662
      %v679 = vpack.c.b16 %v665, %v664
      %v680 = vpack.c.b16 %v667, %v666
      %v681 = vpack.c.b16 %v669, %v668
      %v682 = vpack.c.b16 %v671, %v670
      %v683 = vpack.c.b16 %v673, %v672
      %v684 = vpack.c.b16 %v675, %v674
      %v685 = vpack.c.b16 %v677, %v676
      %694 = vmatprep.subr.bf16.mxu0 0
      %695 = vmatpush1.bf16.msra.mxu0 %v678
      %696 = vmatprep.subr.bf16.mxu0 0
      %697 = vmatpush1.bf16.msra.mxu0 %v679
      %698 = vmatprep.subr.bf16.mxu0 0
      %699 = vmatpush1.bf16.msra.mxu0 %v680
      %700 = vmatprep.subr.bf16.mxu0 0
      %701 = vmatpush1.bf16.msra.mxu0 %v681
      %702 = vmatprep.subr.bf16.mxu0 0
      %703 = vmatpush1.bf16.msra.mxu0 %v682
      %704 = vmatprep.subr.bf16.mxu0 0
      %705 = vmatpush1.bf16.msra.mxu0 %v683
      %706 = vmatprep.subr.bf16.mxu0 0
      %707 = vmatpush1.bf16.msra.mxu0 %v684
      %708 = vmatprep.subr.bf16.mxu0 0
      %709 = vmatpush1.bf16.msra.mxu0 %v685
      %710 = vmatprep.subr.bf16.mxu0 0
      %711 = vmatpush1.bf16.msra.mxu0 0
      %712 = vmatprep.subr.bf16.mxu0 0
      %713 = vmatpush1.bf16.msra.mxu0 0
      %714 = vmatprep.subr.bf16.mxu0 0
      %715 = vmatpush1.bf16.msra.mxu0 0
      %716 = vmatprep.subr.bf16.mxu0 0
      %717 = vmatpush1.bf16.msra.mxu0 0
      %718 = vmatprep.subr.bf16.mxu0 0
      %719 = vmatpush1.bf16.msra.mxu0 0
      %720 = vmatprep.subr.bf16.mxu0 0
      %721 = vmatpush1.bf16.msra.mxu0 0
      %722 = vmatprep.subr.bf16.mxu0 0
      %723 = vmatpush1.bf16.msra.mxu0 0
      %724 = vmatprep.subr.bf16.mxu0 0
      %725 = vmatpush1.bf16.msra.mxu0 0
      %726 = vmatprep.mubr.bf16.mxu0 0
      %727 = vmatmul.mubr.bf16.gmra.mrb[0].mxu0 %v625
      %v728 = vpop.f32.mrb[0].mxu0
      %v729 = vadd.f32 0.0, %v728
      %v730 = vpop.f32.mrb[0].mxu0
      %v731 = vpop.f32.mrb[0].mxu0
      %v732 = vadd.f32 0.0, %v731
      %v733 = vpop.f32.mrb[0].mxu0
      %734 = vmatprep.mubr.bf16.mxu0 0
      %735 = vmatmul.mubr.bf16.gmra.mrb[0].mxu0 %v626
      %v736 = vpop.f32.mrb[0].mxu0
      %v737 = vadd.f32 0.0, %v736
      %v738 = vpop.f32.mrb[0].mxu0
      %v739 = vpop.f32.mrb[0].mxu0
      %v740 = vadd.f32 0.0, %v739
      %v741 = vpop.f32.mrb[0].mxu0
      %742 = vmatprep.mubr.bf16.mxu0 0
      %743 = vmatmul.mubr.bf16.gmra.mrb[0].mxu0 %v627
      %v744 = vpop.f32.mrb[0].mxu0
      %v745 = vadd.f32 0.0, %v744
      %v746 = vpop.f32.mrb[0].mxu0
      %v747 = vpop.f32.mrb[0].mxu0
      %v748 = vadd.f32 0.0, %v747
      %v749 = vpop.f32.mrb[0].mxu0
      %750 = vmatprep.mubr.bf16.mxu0 0
      %751 = vmatmul.mubr.bf16.gmra.mrb[0].mxu0 %v628
      %v752 = vpop.f32.mrb[0].mxu0
      %v753 = vadd.f32 0.0, %v752
      %v754 = vpop.f32.mrb[0].mxu0
      %v755 = vpop.f32.mrb[0].mxu0
      %v756 = vadd.f32 0.0, %v755
      %v757 = vpop.f32.mrb[0].mxu0
      %758 = vdwg.mxu0
      %v759 = vadd.f32 %v608, %v729
      %v760 = vadd.f32 %v609, %v732
      %v761 = vadd.f32 %v610, %v737
      %v762 = vadd.f32 %v611, %v740
      %v763 = vadd.f32 %v612, %v745
      %v764 = vadd.f32 %v613, %v748
      %v765 = vadd.f32 %v614, %v753
      %v766 = vadd.f32 %v615, %v756
      %v767 = vld [vmem:[%s616 + $0x1] sm:$0xff]
      %v768 = vld [vmem:[%s616 + $0x11] sm:$0xff]
      %v769 = vld [vmem:[%s616 + $0x21] sm:$0xff]
      %v770 = vld [vmem:[%s616 + $0x31] sm:$0xff]
      %v771 = vld [vmem:[%s616 + $0x41] sm:$0xff]
      %v772 = vld [vmem:[%s616 + $0x51] sm:$0xff]
      %v773 = vld [vmem:[%s616 + $0x61] sm:$0xff]
      %v774 = vld [vmem:[%s616 + $0x71] sm:$0xff]
      %v775 = vpack.c.bf16 %v768, %v767
      %v776 = vpack.c.bf16 %v770, %v769
      %v777 = vpack.c.bf16 %v772, %v771
      %v778 = vpack.c.bf16 %v774, %v773
      %s779 = scalar_lea.vmem %s1, 256
      %v780 = vld [vmem:[%s779] sm:$0xf]
      %v781 = vld [vmem:[%s779 + $0x4] sm:$0xf]
      %v782 = vld [vmem:[%s779 + $0x8] sm:$0xf]
      %v783 = vld [vmem:[%s779 + $0xc] sm:$0xf]
      %v784 = vld [vmem:[%s779 + $0x10] sm:$0xf]
      %v785 = vld [vmem:[%s779 + $0x14] sm:$0xf]
      %v786 = vld [vmem:[%s779 + $0x18] sm:$0xf]
      %v787 = vld [vmem:[%s779 + $0x1c] sm:$0xf]
      %v788 = vld [vmem:[%s779 + $0x20] sm:$0xf]
      %v789 = vld [vmem:[%s779 + $0x24] sm:$0xf]
      %v790 = vld [vmem:[%s779 + $0x28] sm:$0xf]
      %v791 = vld [vmem:[%s779 + $0x2c] sm:$0xf]
      %v792 = vld [vmem:[%s779 + $0x30] sm:$0xf]
      %v793 = vld [vmem:[%s779 + $0x34] sm:$0xf]
      %v794 = vld [vmem:[%s779 + $0x38] sm:$0xf]
      %v795 = vld [vmem:[%s779 + $0x3c] sm:$0xf]
      %v812 = vunpack.c.l.b16 %v780
      %v813 = vunpack.c.l.b16 %v781
      %v814 = vunpack.c.l.b16 %v782
      %v815 = vunpack.c.l.b16 %v783
      %v816 = vunpack.c.l.b16 %v784
      %v817 = vunpack.c.l.b16 %v785
      %v818 = vunpack.c.l.b16 %v786
      %v819 = vunpack.c.l.b16 %v787
      %v820 = vunpack.c.l.b16 %v788
      %v821 = vunpack.c.l.b16 %v789
      %v822 = vunpack.c.l.b16 %v790
      %v823 = vunpack.c.l.b16 %v791
      %v824 = vunpack.c.l.b16 %v792
      %v825 = vunpack.c.l.b16 %v793
      %v826 = vunpack.c.l.b16 %v794
      %v827 = vunpack.c.l.b16 %v795
      %v828 = vpack.c.b16 %v813, %v812
      %v829 = vpack.c.b16 %v815, %v814
      %v830 = vpack.c.b16 %v817, %v816
      %v831 = vpack.c.b16 %v819, %v818
      %v832 = vpack.c.b16 %v821, %v820
      %v833 = vpack.c.b16 %v823, %v822
      %v834 = vpack.c.b16 %v825, %v824
      %v835 = vpack.c.b16 %v827, %v826
      %844 = vmatprep.subr.bf16.mxu0 0
      %845 = vmatpush1.bf16.msra.mxu0 %v828
      %846 = vmatprep.subr.bf16.mxu0 0
      %847 = vmatpush1.bf16.msra.mxu0 %v829
      %848 = vmatprep.subr.bf16.mxu0 0
      %849 = vmatpush1.bf16.msra.mxu0 %v830
      %850 = vmatprep.subr.bf16.mxu0 0
      %851 = vmatpush1.bf16.msra.mxu0 %v831
      %852 = vmatprep.subr.bf16.mxu0 0
      %853 = vmatpush1.bf16.msra.mxu0 %v832
      %854 = vmatprep.subr.bf16.mxu0 0
      %855 = vmatpush1.bf16.msra.mxu0 %v833
      %856 = vmatprep.subr.bf16.mxu0 0
      %857 = vmatpush1.bf16.msra.mxu0 %v834
      %858 = vmatprep.subr.bf16.mxu0 0
      %859 = vmatpush1.bf16.msra.mxu0 %v835
      %860 = vmatprep.subr.bf16.mxu0 0
      %861 = vmatpush1.bf16.msra.mxu0 0
      %862 = vmatprep.subr.bf16.mxu0 0
      %863 = vmatpush1.bf16.msra.mxu0 0
      %864 = vmatprep.subr.bf16.mxu0 0
      %865 = vmatpush1.bf16.msra.mxu0 0
      %866 = vmatprep.subr.bf16.mxu0 0
      %867 = vmatpush1.bf16.msra.mxu0 0
      %868 = vmatprep.subr.bf16.mxu0 0
      %869 = vmatpush1.bf16.msra.mxu0 0
      %870 = vmatprep.subr.bf16.mxu0 0
      %871 = vmatpush1.bf16.msra.mxu0 0
      %872 = vmatprep.subr.bf16.mxu0 0
      %873 = vmatpush1.bf16.msra.mxu0 0
      %874 = vmatprep.subr.bf16.mxu0 0
      %875 = vmatpush1.bf16.msra.mxu0 0
      %876 = vmatprep.mubr.bf16.mxu0 0
      %877 = vmatmul.mubr.bf16.gmra.mrb[0].mxu0 %v775
      %v878 = vpop.f32.mrb[0].mxu0
      %v879 = vadd.f32 0.0, %v878
      %v880 = vpop.f32.mrb[0].mxu0
      %v881 = vpop.f32.mrb[0].mxu0
      %v882 = vadd.f32 0.0, %v881
      %v883 = vpop.f32.mrb[0].mxu0
      %884 = vmatprep.mubr.bf16.mxu0 0
      %885 = vmatmul.mubr.bf16.gmra.mrb[0].mxu0 %v776
      %v886 = vpop.f32.mrb[0].mxu0
      %v887 = vadd.f32 0.0, %v886
      %v888 = vpop.f32.mrb[0].mxu0
      %v889 = vpop.f32.mrb[0].mxu0
      %v890 = vadd.f32 0.0, %v889
      %v891 = vpop.f32.mrb[0].mxu0
      %892 = vmatprep.mubr.bf16.mxu0 0
      %893 = vmatmul.mubr.bf16.gmra.mrb[0].mxu0 %v777
      %v894 = vpop.f32.mrb[0].mxu0
      %v895 = vadd.f32 0.0, %v894
      %v896 = vpop.f32.mrb[0].mxu0
      %v897 = vpop.f32.mrb[0].mxu0
      %v898 = vadd.f32 0.0, %v897
      %v899 = vpop.f32.mrb[0].mxu0
      %900 = vmatprep.mubr.bf16.mxu0 0
      %901 = vmatmul.mubr.bf16.gmra.mrb[0].mxu0 %v778
      %v902 = vpop.f32.mrb[0].mxu0
      %v903 = vadd.f32 0.0, %v902
      %v904 = vpop.f32.mrb[0].mxu0
      %v905 = vpop.f32.mrb[0].mxu0
      %v906 = vadd.f32 0.0, %v905
      %v907 = vpop.f32.mrb[0].mxu0
      %908 = vdwg.mxu0
      %v909 = vadd.f32 %v759, %v879
      %v910 = vadd.f32 %v760, %v882
      %v911 = vadd.f32 %v761, %v887
      %v912 = vadd.f32 %v762, %v890
      %v913 = vadd.f32 %v763, %v895
      %v914 = vadd.f32 %v764, %v898
      %v915 = vadd.f32 %v765, %v903
      %v916 = vadd.f32 %v766, %v906
      %v917 = vld [vmem:[%s616 + $0x2] sm:$0xff]
      %v918 = vld [vmem:[%s616 + $0x12] sm:$0xff]
      %v919 = vld [vmem:[%s616 + $0x22] sm:$0xff]
      %v920 = vld [vmem:[%s616 + $0x32] sm:$0xff]
      %v921 = vld [vmem:[%s616 + $0x42] sm:$0xff]
      %v922 = vld [vmem:[%s616 + $0x52] sm:$0xff]
      %v923 = vld [vmem:[%s616 + $0x62] sm:$0xff]
      %v924 = vld [vmem:[%s616 + $0x72] sm:$0xff]
      %v925 = vpack.c.bf16 %v918, %v917
      %v926 = vpack.c.bf16 %v920, %v919
      %v927 = vpack.c.bf16 %v922, %v921
      %v928 = vpack.c.bf16 %v924, %v923
      %s929 = scalar_lea.vmem %s1, 320
      %v930 = vld [vmem:[%s929] sm:$0xf]
      %v931 = vld [vmem:[%s929 + $0x4] sm:$0xf]
      %v932 = vld [vmem:[%s929 + $0x8] sm:$0xf]
      %v933 = vld [vmem:[%s929 + $0xc] sm:$0xf]
      %v934 = vld [vmem:[%s929 + $0x10] sm:$0xf]
      %v935 = vld [vmem:[%s929 + $0x14] sm:$0xf]
      %v936 = vld [vmem:[%s929 + $0x18] sm:$0xf]
      %v937 = vld [vmem:[%s929 + $0x1c] sm:$0xf]
      %v938 = vld [vmem:[%s929 + $0x20] sm:$0xf]
      %v939 = vld [vmem:[%s929 + $0x24] sm:$0xf]
      %v940 = vld [vmem:[%s929 + $0x28] sm:$0xf]
      %v941 = vld [vmem:[%s929 + $0x2c] sm:$0xf]
      %v942 = vld [vmem:[%s929 + $0x30] sm:$0xf]
      %v943 = vld [vmem:[%s929 + $0x34] sm:$0xf]
      %v944 = vld [vmem:[%s929 + $0x38] sm:$0xf]
      %v945 = vld [vmem:[%s929 + $0x3c] sm:$0xf]
      %v962 = vunpack.c.l.b16 %v930
      %v963 = vunpack.c.l.b16 %v931
      %v964 = vunpack.c.l.b16 %v932
      %v965 = vunpack.c.l.b16 %v933
      %v966 = vunpack.c.l.b16 %v934
      %v967 = vunpack.c.l.b16 %v935
      %v968 = vunpack.c.l.b16 %v936
      %v969 = vunpack.c.l.b16 %v937
      %v970 = vunpack.c.l.b16 %v938
      %v971 = vunpack.c.l.b16 %v939
      %v972 = vunpack.c.l.b16 %v940
      %v973 = vunpack.c.l.b16 %v941
      %v974 = vunpack.c.l.b16 %v942
      %v975 = vunpack.c.l.b16 %v943
      %v976 = vunpack.c.l.b16 %v944
      %v977 = vunpack.c.l.b16 %v945
      %v978 = vpack.c.b16 %v963, %v962
      %v979 = vpack.c.b16 %v965, %v964
      %v980 = vpack.c.b16 %v967, %v966
      %v981 = vpack.c.b16 %v969, %v968
      %v982 = vpack.c.b16 %v971, %v970
      %v983 = vpack.c.b16 %v973, %v972
      %v984 = vpack.c.b16 %v975, %v974
      %v985 = vpack.c.b16 %v977, %v976
      %994 = vmatprep.subr.bf16.mxu0 0
      %995 = vmatpush1.bf16.msra.mxu0 %v978
      %996 = vmatprep.subr.bf16.mxu0 0
      %997 = vmatpush1.bf16.msra.mxu0 %v979
      %998 = vmatprep.subr.bf16.mxu0 0
      %999 = vmatpush1.bf16.msra.mxu0 %v980
      %1000 = vmatprep.subr.bf16.mxu0 0
      %1001 = vmatpush1.bf16.msra.mxu0 %v981
      %1002 = vmatprep.subr.bf16.mxu0 0
      %1003 = vmatpush1.bf16.msra.mxu0 %v982
      %1004 = vmatprep.subr.bf16.mxu0 0
      %1005 = vmatpush1.bf16.msra.mxu0 %v983
      %1006 = vmatprep.subr.bf16.mxu0 0
      %1007 = vmatpush1.bf16.msra.mxu0 %v984
      %1008 = vmatprep.subr.bf16.mxu0 0
      %1009 = vmatpush1.bf16.msra.mxu0 %v985
      %1010 = vmatprep.subr.bf16.mxu0 0
      %1011 = vmatpush1.bf16.msra.mxu0 0
      %1012 = vmatprep.subr.bf16.mxu0 0
      %1013 = vmatpush1.bf16.msra.mxu0 0
      %1014 = vmatprep.subr.bf16.mxu0 0
      %1015 = vmatpush1.bf16.msra.mxu0 0
      %1016 = vmatprep.subr.bf16.mxu0 0
      %1017 = vmatpush1.bf16.msra.mxu0 0
      %1018 = vmatprep.subr.bf16.mxu0 0
      %1019 = vmatpush1.bf16.msra.mxu0 0
      %1020 = vmatprep.subr.bf16.mxu0 0
      %1021 = vmatpush1.bf16.msra.mxu0 0
      %1022 = vmatprep.subr.bf16.mxu0 0
      %1023 = vmatpush1.bf16.msra.mxu0 0
      %1024 = vmatprep.subr.bf16.mxu0 0
      %1025 = vmatpush1.bf16.msra.mxu0 0
      %1026 = vmatprep.mubr.bf16.mxu0 0
      %1027 = vmatmul.mubr.bf16.gmra.mrb[0].mxu0 %v925
      %v1028 = vpop.f32.mrb[0].mxu0
      %v1029 = vadd.f32 0.0, %v1028
      %v1030 = vpop.f32.mrb[0].mxu0
      %v1031 = vpop.f32.mrb[0].mxu0
      %v1032 = vadd.f32 0.0, %v1031
      %v1033 = vpop.f32.mrb[0].mxu0
      %1034 = vmatprep.mubr.bf16.mxu0 0
      %1035 = vmatmul.mubr.bf16.gmra.mrb[0].mxu0 %v926
      %v1036 = vpop.f32.mrb[0].mxu0
      %v1037 = vadd.f32 0.0, %v1036
      %v1038 = vpop.f32.mrb[0].mxu0
      %v1039 = vpop.f32.mrb[0].mxu0
      %v1040 = vadd.f32 0.0, %v1039
      %v1041 = vpop.f32.mrb[0].mxu0
      %1042 = vmatprep.mubr.bf16.mxu0 0
      %1043 = vmatmul.mubr.bf16.gmra.mrb[0].mxu0 %v927
      %v1044 = vpop.f32.mrb[0].mxu0
      %v1045 = vadd.f32 0.0, %v1044
      %v1046 = vpop.f32.mrb[0].mxu0
      %v1047 = vpop.f32.mrb[0].mxu0
      %v1048 = vadd.f32 0.0, %v1047
      %v1049 = vpop.f32.mrb[0].mxu0
      %1050 = vmatprep.mubr.bf16.mxu0 0
      %1051 = vmatmul.mubr.bf16.gmra.mrb[0].mxu0 %v928
      %v1052 = vpop.f32.mrb[0].mxu0
      %v1053 = vadd.f32 0.0, %v1052
      %v1054 = vpop.f32.mrb[0].mxu0
      %v1055 = vpop.f32.mrb[0].mxu0
      %v1056 = vadd.f32 0.0, %v1055
      %v1057 = vpop.f32.mrb[0].mxu0
      %1058 = vdwg.mxu0
      %v1059 = vadd.f32 %v909, %v1029
      %v1060 = vadd.f32 %v910, %v1032
      %v1061 = vadd.f32 %v911, %v1037
      %v1062 = vadd.f32 %v912, %v1040
      %v1063 = vadd.f32 %v913, %v1045
      %v1064 = vadd.f32 %v914, %v1048
      %v1065 = vadd.f32 %v915, %v1053
      %v1066 = vadd.f32 %v916, %v1056
      %s1067 = scalar_lea.vmem %s172, 32
      %v1068 = vld [vmem:[%s1067] sm:$0xff]
      %v1069 = vld [vmem:[%s1067 + $0x10] sm:$0xff]
      %v1070 = vld [vmem:[%s1067 + $0x20] sm:$0xff]
      %v1071 = vld [vmem:[%s1067 + $0x30] sm:$0xff]
      %v1072 = vld [vmem:[%s1067 + $0x40] sm:$0xff]
      %v1073 = vld [vmem:[%s1067 + $0x50] sm:$0xff]
      %v1074 = vld [vmem:[%s1067 + $0x60] sm:$0xff]
      %v1075 = vld [vmem:[%s1067 + $0x70] sm:$0xff]
      %v1076 = vpack.c.bf16 %v1069, %v1068
      %v1077 = vpack.c.bf16 %v1071, %v1070
      %v1078 = vpack.c.bf16 %v1073, %v1072
      %v1079 = vpack.c.bf16 %v1075, %v1074
      %s1080 = scalar_lea.vmem %s1, 384
      %v1081 = vld [vmem:[%s1080] sm:$0xf]
      %v1082 = vld [vmem:[%s1080 + $0x4] sm:$0xf]
      %v1083 = vld [vmem:[%s1080 + $0x8] sm:$0xf]
      %v1084 = vld [vmem:[%s1080 + $0xc] sm:$0xf]
      %v1085 = vld [vmem:[%s1080 + $0x10] sm:$0xf]
      %v1086 = vld [vmem:[%s1080 + $0x14] sm:$0xf]
      %v1087 = vld [vmem:[%s1080 + $0x18] sm:$0xf]
      %v1088 = vld [vmem:[%s1080 + $0x1c] sm:$0xf]
      %v1089 = vld [vmem:[%s1080 + $0x20] sm:$0xf]
      %v1090 = vld [vmem:[%s1080 + $0x24] sm:$0xf]
      %v1091 = vld [vmem:[%s1080 + $0x28] sm:$0xf]
      %v1092 = vld [vmem:[%s1080 + $0x2c] sm:$0xf]
      %v1093 = vld [vmem:[%s1080 + $0x30] sm:$0xf]
      %v1094 = vld [vmem:[%s1080 + $0x34] sm:$0xf]
      %v1095 = vld [vmem:[%s1080 + $0x38] sm:$0xf]
      %v1096 = vld [vmem:[%s1080 + $0x3c] sm:$0xf]
      %v1113 = vunpack.c.l.b16 %v1081
      %v1114 = vunpack.c.l.b16 %v1082
      %v1115 = vunpack.c.l.b16 %v1083
      %v1116 = vunpack.c.l.b16 %v1084
      %v1117 = vunpack.c.l.b16 %v1085
      %v1118 = vunpack.c.l.b16 %v1086
      %v1119 = vunpack.c.l.b16 %v1087
      %v1120 = vunpack.c.l.b16 %v1088
      %v1121 = vunpack.c.l.b16 %v1089
      %v1122 = vunpack.c.l.b16 %v1090
      %v1123 = vunpack.c.l.b16 %v1091
      %v1124 = vunpack.c.l.b16 %v1092
      %v1125 = vunpack.c.l.b16 %v1093
      %v1126 = vunpack.c.l.b16 %v1094
      %v1127 = vunpack.c.l.b16 %v1095
      %v1128 = vunpack.c.l.b16 %v1096
      %v1129 = vpack.c.b16 %v1114, %v1113
      %v1130 = vpack.c.b16 %v1116, %v1115
      %v1131 = vpack.c.b16 %v1118, %v1117
      %v1132 = vpack.c.b16 %v1120, %v1119
      %v1133 = vpack.c.b16 %v1122, %v1121
      %v1134 = vpack.c.b16 %v1124, %v1123
      %v1135 = vpack.c.b16 %v1126, %v1125
      %v1136 = vpack.c.b16 %v1128, %v1127
      %1145 = vmatprep.subr.bf16.mxu0 0
      %1146 = vmatpush1.bf16.msra.mxu0 %v1129
      %1147 = vmatprep.subr.bf16.mxu0 0
      %1148 = vmatpush1.bf16.msra.mxu0 %v1130
      %1149 = vmatprep.subr.bf16.mxu0 0
      %1150 = vmatpush1.bf16.msra.mxu0 %v1131
      %1151 = vmatprep.subr.bf16.mxu0 0
      %1152 = vmatpush1.bf16.msra.mxu0 %v1132
      %1153 = vmatprep.subr.bf16.mxu0 0
      %1154 = vmatpush1.bf16.msra.mxu0 %v1133
      %1155 = vmatprep.subr.bf16.mxu0 0
      %1156 = vmatpush1.bf16.msra.mxu0 %v1134
      %1157 = vmatprep.subr.bf16.mxu0 0
      %1158 = vmatpush1.bf16.msra.mxu0 %v1135
      %1159 = vmatprep.subr.bf16.mxu0 0
      %1160 = vmatpush1.bf16.msra.mxu0 %v1136
      %1161 = vmatprep.subr.bf16.mxu0 0
      %1162 = vmatpush1.bf16.msra.mxu0 0
      %1163 = vmatprep.subr.bf16.mxu0 0
      %1164 = vmatpush1.bf16.msra.mxu0 0
      %1165 = vmatprep.subr.bf16.mxu0 0
      %1166 = vmatpush1.bf16.msra.mxu0 0
      %1167 = vmatprep.subr.bf16.mxu0 0
      %1168 = vmatpush1.bf16.msra.mxu0 0
      %1169 = vmatprep.subr.bf16.mxu0 0
      %1170 = vmatpush1.bf16.msra.mxu0 0
      %1171 = vmatprep.subr.bf16.mxu0 0
      %1172 = vmatpush1.bf16.msra.mxu0 0
      %1173 = vmatprep.subr.bf16.mxu0 0
      %1174 = vmatpush1.bf16.msra.mxu0 0
      %1175 = vmatprep.subr.bf16.mxu0 0
      %1176 = vmatpush1.bf16.msra.mxu0 0
      %1177 = vmatprep.mubr.bf16.mxu0 0
      %1178 = vmatmul.mubr.bf16.gmra.mrb[0].mxu0 %v1076
      %v1179 = vpop.f32.mrb[0].mxu0
      %v1180 = vadd.f32 0.0, %v1179
      %v1181 = vpop.f32.mrb[0].mxu0
      %v1182 = vpop.f32.mrb[0].mxu0
      %v1183 = vadd.f32 0.0, %v1182
      %v1184 = vpop.f32.mrb[0].mxu0
      %1185 = vmatprep.mubr.bf16.mxu0 0
      %1186 = vmatmul.mubr.bf16.gmra.mrb[0].mxu0 %v1077
      %v1187 = vpop.f32.mrb[0].mxu0
      %v1188 = vadd.f32 0.0, %v1187
      %v1189 = vpop.f32.mrb[0].mxu0
      %v1190 = vpop.f32.mrb[0].mxu0
      %v1191 = vadd.f32 0.0, %v1190
      %v1192 = vpop.f32.mrb[0].mxu0
      %1193 = vmatprep.mubr.bf16.mxu0 0
      %1194 = vmatmul.mubr.bf16.gmra.mrb[0].mxu0 %v1078
      %v1195 = vpop.f32.mrb[0].mxu0
      %v1196 = vadd.f32 0.0, %v1195
      %v1197 = vpop.f32.mrb[0].mxu0
      %v1198 = vpop.f32.mrb[0].mxu0
      %v1199 = vadd.f32 0.0, %v1198
      %v1200 = vpop.f32.mrb[0].mxu0
      %1201 = vmatprep.mubr.bf16.mxu0 0
      %1202 = vmatmul.mubr.bf16.gmra.mrb[0].mxu0 %v1079
      %v1203 = vpop.f32.mrb[0].mxu0
      %v1204 = vadd.f32 0.0, %v1203
      %v1205 = vpop.f32.mrb[0].mxu0
      %v1206 = vpop.f32.mrb[0].mxu0
      %v1207 = vadd.f32 0.0, %v1206
      %v1208 = vpop.f32.mrb[0].mxu0
      %1209 = vdwg.mxu0
      %v1210 = vadd.f32 %v1059, %v1180
      %v1211 = vadd.f32 %v1060, %v1183
      %v1212 = vadd.f32 %v1061, %v1188
      %v1213 = vadd.f32 %v1062, %v1191
      %v1214 = vadd.f32 %v1063, %v1196
      %v1215 = vadd.f32 %v1064, %v1199
      %v1216 = vadd.f32 %v1065, %v1204
      %v1217 = vadd.f32 %v1066, %v1207
      %v1218 = vld [vmem:[%s1067 + $0x1] sm:$0xff]
      %v1219 = vld [vmem:[%s1067 + $0x11] sm:$0xff]
      %v1220 = vld [vmem:[%s1067 + $0x21] sm:$0xff]
      %v1221 = vld [vmem:[%s1067 + $0x31] sm:$0xff]
      %v1222 = vld [vmem:[%s1067 + $0x41] sm:$0xff]
      %v1223 = vld [vmem:[%s1067 + $0x51] sm:$0xff]
      %v1224 = vld [vmem:[%s1067 + $0x61] sm:$0xff]
      %v1225 = vld [vmem:[%s1067 + $0x71] sm:$0xff]
      %v1226 = vpack.c.bf16 %v1219, %v1218
      %v1227 = vpack.c.bf16 %v1221, %v1220
      %v1228 = vpack.c.bf16 %v1223, %v1222
      %v1229 = vpack.c.bf16 %v1225, %v1224
      %s1230 = scalar_lea.vmem %s1, 448
      %v1231 = vld [vmem:[%s1230] sm:$0xf]
      %v1232 = vld [vmem:[%s1230 + $0x4] sm:$0xf]
      %v1233 = vld [vmem:[%s1230 + $0x8] sm:$0xf]
      %v1234 = vld [vmem:[%s1230 + $0xc] sm:$0xf]
      %v1235 = vld [vmem:[%s1230 + $0x10] sm:$0xf]
      %v1236 = vld [vmem:[%s1230 + $0x14] sm:$0xf]
      %v1237 = vld [vmem:[%s1230 + $0x18] sm:$0xf]
      %v1238 = vld [vmem:[%s1230 + $0x1c] sm:$0xf]
      %v1239 = vld [vmem:[%s1230 + $0x20] sm:$0xf]
      %v1240 = vld [vmem:[%s1230 + $0x24] sm:$0xf]
      %v1241 = vld [vmem:[%s1230 + $0x28] sm:$0xf]
      %v1242 = vld [vmem:[%s1230 + $0x2c] sm:$0xf]
      %v1243 = vld [vmem:[%s1230 + $0x30] sm:$0xf]
      %v1244 = vld [vmem:[%s1230 + $0x34] sm:$0xf]
      %v1245 = vld [vmem:[%s1230 + $0x38] sm:$0xf]
      %v1246 = vld [vmem:[%s1230 + $0x3c] sm:$0xf]
      %v1263 = vunpack.c.l.b16 %v1231
      %v1264 = vunpack.c.l.b16 %v1232
      %v1265 = vunpack.c.l.b16 %v1233
      %v1266 = vunpack.c.l.b16 %v1234
      %v1267 = vunpack.c.l.b16 %v1235
      %v1268 = vunpack.c.l.b16 %v1236
      %v1269 = vunpack.c.l.b16 %v1237
      %v1270 = vunpack.c.l.b16 %v1238
      %v1271 = vunpack.c.l.b16 %v1239
      %v1272 = vunpack.c.l.b16 %v1240
      %v1273 = vunpack.c.l.b16 %v1241
      %v1274 = vunpack.c.l.b16 %v1242
      %v1275 = vunpack.c.l.b16 %v1243
      %v1276 = vunpack.c.l.b16 %v1244
      %v1277 = vunpack.c.l.b16 %v1245
      %v1278 = vunpack.c.l.b16 %v1246
      %v1279 = vpack.c.b16 %v1264, %v1263
      %v1280 = vpack.c.b16 %v1266, %v1265
      %v1281 = vpack.c.b16 %v1268, %v1267
      %v1282 = vpack.c.b16 %v1270, %v1269
      %v1283 = vpack.c.b16 %v1272, %v1271
      %v1284 = vpack.c.b16 %v1274, %v1273
      %v1285 = vpack.c.b16 %v1276, %v1275
      %v1286 = vpack.c.b16 %v1278, %v1277
      %1295 = vmatprep.subr.bf16.mxu0 0
      %1296 = vmatpush1.bf16.msra.mxu0 %v1279
      %1297 = vmatprep.subr.bf16.mxu0 0
      %1298 = vmatpush1.bf16.msra.mxu0 %v1280
      %1299 = vmatprep.subr.bf16.mxu0 0
      %1300 = vmatpush1.bf16.msra.mxu0 %v1281
      %1301 = vmatprep.subr.bf16.mxu0 0
      %1302 = vmatpush1.bf16.msra.mxu0 %v1282
      %1303 = vmatprep.subr.bf16.mxu0 0
      %1304 = vmatpush1.bf16.msra.mxu0 %v1283
      %1305 = vmatprep.subr.bf16.mxu0 0
      %1306 = vmatpush1.bf16.msra.mxu0 %v1284
      %1307 = vmatprep.subr.bf16.mxu0 0
      %1308 = vmatpush1.bf16.msra.mxu0 %v1285
      %1309 = vmatprep.subr.bf16.mxu0 0
      %1310 = vmatpush1.bf16.msra.mxu0 %v1286
      %1311 = vmatprep.subr.bf16.mxu0 0
      %1312 = vmatpush1.bf16.msra.mxu0 0
      %1313 = vmatprep.subr.bf16.mxu0 0
      %1314 = vmatpush1.bf16.msra.mxu0 0
      %1315 = vmatprep.subr.bf16.mxu0 0
      %1316 = vmatpush1.bf16.msra.mxu0 0
      %1317 = vmatprep.subr.bf16.mxu0 0
      %1318 = vmatpush1.bf16.msra.mxu0 0
      %1319 = vmatprep.subr.bf16.mxu0 0
      %1320 = vmatpush1.bf16.msra.mxu0 0
      %1321 = vmatprep.subr.bf16.mxu0 0
      %1322 = vmatpush1.bf16.msra.mxu0 0
      %1323 = vmatprep.subr.bf16.mxu0 0
      %1324 = vmatpush1.bf16.msra.mxu0 0
      %1325 = vmatprep.subr.bf16.mxu0 0
      %1326 = vmatpush1.bf16.msra.mxu0 0
      %1327 = vmatprep.mubr.bf16.mxu0 0
      %1328 = vmatmul.mubr.bf16.gmra.mrb[0].mxu0 %v1226
      %v1329 = vpop.f32.mrb[0].mxu0
      %v1330 = vadd.f32 0.0, %v1329
      %v1331 = vpop.f32.mrb[0].mxu0
      %v1332 = vpop.f32.mrb[0].mxu0
      %v1333 = vadd.f32 0.0, %v1332
      %v1334 = vpop.f32.mrb[0].mxu0
      %1335 = vmatprep.mubr.bf16.mxu0 0
      %1336 = vmatmul.mubr.bf16.gmra.mrb[0].mxu0 %v1227
      %v1337 = vpop.f32.mrb[0].mxu0
      %v1338 = vadd.f32 0.0, %v1337
      %v1339 = vpop.f32.mrb[0].mxu0
      %v1340 = vpop.f32.mrb[0].mxu0
      %v1341 = vadd.f32 0.0, %v1340
      %v1342 = vpop.f32.mrb[0].mxu0
      %1343 = vmatprep.mubr.bf16.mxu0 0
      %1344 = vmatmul.mubr.bf16.gmra.mrb[0].mxu0 %v1228
      %v1345 = vpop.f32.mrb[0].mxu0
      %v1346 = vadd.f32 0.0, %v1345
      %v1347 = vpop.f32.mrb[0].mxu0
      %v1348 = vpop.f32.mrb[0].mxu0
      %v1349 = vadd.f32 0.0, %v1348
      %v1350 = vpop.f32.mrb[0].mxu0
      %1351 = vmatprep.mubr.bf16.mxu0 0
      %1352 = vmatmul.mubr.bf16.gmra.mrb[0].mxu0 %v1229
      %v1353 = vpop.f32.mrb[0].mxu0
      %v1354 = vadd.f32 0.0, %v1353
      %v1355 = vpop.f32.mrb[0].mxu0
      %v1356 = vpop.f32.mrb[0].mxu0
      %v1357 = vadd.f32 0.0, %v1356
      %v1358 = vpop.f32.mrb[0].mxu0
      %1359 = vdwg.mxu0
      %v1360 = vadd.f32 %v1210, %v1330
      %v1361 = vadd.f32 %v1211, %v1333
      %v1362 = vadd.f32 %v1212, %v1338
      %v1363 = vadd.f32 %v1213, %v1341
      %v1364 = vadd.f32 %v1214, %v1346
      %v1365 = vadd.f32 %v1215, %v1349
      %v1366 = vadd.f32 %v1216, %v1354
      %v1367 = vadd.f32 %v1217, %v1357
      %v1368 = vld [vmem:[%s1067 + $0x2] sm:$0xff]
      %v1369 = vld [vmem:[%s1067 + $0x12] sm:$0xff]
      %v1370 = vld [vmem:[%s1067 + $0x22] sm:$0xff]
      %v1371 = vld [vmem:[%s1067 + $0x32] sm:$0xff]
      %v1372 = vld [vmem:[%s1067 + $0x42] sm:$0xff]
      %v1373 = vld [vmem:[%s1067 + $0x52] sm:$0xff]
      %v1374 = vld [vmem:[%s1067 + $0x62] sm:$0xff]
      %v1375 = vld [vmem:[%s1067 + $0x72] sm:$0xff]
      %v1376 = vpack.c.bf16 %v1369, %v1368
      %v1377 = vpack.c.bf16 %v1371, %v1370
      %v1378 = vpack.c.bf16 %v1373, %v1372
      %v1379 = vpack.c.bf16 %v1375, %v1374
      %s1380 = scalar_lea.vmem %s1, 512
      %v1381 = vld [vmem:[%s1380] sm:$0xf]
      %v1382 = vld [vmem:[%s1380 + $0x4] sm:$0xf]
      %v1383 = vld [vmem:[%s1380 + $0x8] sm:$0xf]
      %v1384 = vld [vmem:[%s1380 + $0xc] sm:$0xf]
      %v1385 = vld [vmem:[%s1380 + $0x10] sm:$0xf]
      %v1386 = vld [vmem:[%s1380 + $0x14] sm:$0xf]
      %v1387 = vld [vmem:[%s1380 + $0x18] sm:$0xf]
      %v1388 = vld [vmem:[%s1380 + $0x1c] sm:$0xf]
      %v1389 = vld [vmem:[%s1380 + $0x20] sm:$0xf]
      %v1390 = vld [vmem:[%s1380 + $0x24] sm:$0xf]
      %v1391 = vld [vmem:[%s1380 + $0x28] sm:$0xf]
      %v1392 = vld [vmem:[%s1380 + $0x2c] sm:$0xf]
      %v1393 = vld [vmem:[%s1380 + $0x30] sm:$0xf]
      %v1394 = vld [vmem:[%s1380 + $0x34] sm:$0xf]
      %v1395 = vld [vmem:[%s1380 + $0x38] sm:$0xf]
      %v1396 = vld [vmem:[%s1380 + $0x3c] sm:$0xf]
      %v1413 = vunpack.c.l.b16 %v1381
      %v1414 = vunpack.c.l.b16 %v1382
      %v1415 = vunpack.c.l.b16 %v1383
      %v1416 = vunpack.c.l.b16 %v1384
      %v1417 = vunpack.c.l.b16 %v1385
      %v1418 = vunpack.c.l.b16 %v1386
      %v1419 = vunpack.c.l.b16 %v1387
      %v1420 = vunpack.c.l.b16 %v1388
      %v1421 = vunpack.c.l.b16 %v1389
      %v1422 = vunpack.c.l.b16 %v1390
      %v1423 = vunpack.c.l.b16 %v1391
      %v1424 = vunpack.c.l.b16 %v1392
      %v1425 = vunpack.c.l.b16 %v1393
      %v1426 = vunpack.c.l.b16 %v1394
      %v1427 = vunpack.c.l.b16 %v1395
      %v1428 = vunpack.c.l.b16 %v1396
      %v1429 = vpack.c.b16 %v1414, %v1413
      %v1430 = vpack.c.b16 %v1416, %v1415
      %v1431 = vpack.c.b16 %v1418, %v1417
      %v1432 = vpack.c.b16 %v1420, %v1419
      %v1433 = vpack.c.b16 %v1422, %v1421
      %v1434 = vpack.c.b16 %v1424, %v1423
      %v1435 = vpack.c.b16 %v1426, %v1425
      %v1436 = vpack.c.b16 %v1428, %v1427
      %1445 = vmatprep.subr.bf16.mxu0 0
      %1446 = vmatpush1.bf16.msra.mxu0 %v1429
      %1447 = vmatprep.subr.bf16.mxu0 0
      %1448 = vmatpush1.bf16.msra.mxu0 %v1430
      %1449 = vmatprep.subr.bf16.mxu0 0
      %1450 = vmatpush1.bf16.msra.mxu0 %v1431
      %1451 = vmatprep.subr.bf16.mxu0 0
      %1452 = vmatpush1.bf16.msra.mxu0 %v1432
      %1453 = vmatprep.subr.bf16.mxu0 0
      %1454 = vmatpush1.bf16.msra.mxu0 %v1433
      %1455 = vmatprep.subr.bf16.mxu0 0
      %1456 = vmatpush1.bf16.msra.mxu0 %v1434
      %1457 = vmatprep.subr.bf16.mxu0 0
      %1458 = vmatpush1.bf16.msra.mxu0 %v1435
      %1459 = vmatprep.subr.bf16.mxu0 0
      %1460 = vmatpush1.bf16.msra.mxu0 %v1436
      %1461 = vmatprep.subr.bf16.mxu0 0
      %1462 = vmatpush1.bf16.msra.mxu0 0
      %1463 = vmatprep.subr.bf16.mxu0 0
      %1464 = vmatpush1.bf16.msra.mxu0 0
      %1465 = vmatprep.subr.bf16.mxu0 0
      %1466 = vmatpush1.bf16.msra.mxu0 0
      %1467 = vmatprep.subr.bf16.mxu0 0
      %1468 = vmatpush1.bf16.msra.mxu0 0
      %1469 = vmatprep.subr.bf16.mxu0 0
      %1470 = vmatpush1.bf16.msra.mxu0 0
      %1471 = vmatprep.subr.bf16.mxu0 0
      %1472 = vmatpush1.bf16.msra.mxu0 0
      %1473 = vmatprep.subr.bf16.mxu0 0
      %1474 = vmatpush1.bf16.msra.mxu0 0
      %1475 = vmatprep.subr.bf16.mxu0 0
      %1476 = vmatpush1.bf16.msra.mxu0 0
      %1477 = vmatprep.mubr.bf16.mxu0 0
      %1478 = vmatmul.mubr.bf16.gmra.mrb[0].mxu0 %v1376
      %v1479 = vpop.f32.mrb[0].mxu0
      %v1480 = vadd.f32 0.0, %v1479
      %v1481 = vpop.f32.mrb[0].mxu0
      %v1482 = vpop.f32.mrb[0].mxu0
      %v1483 = vadd.f32 0.0, %v1482
      %v1484 = vpop.f32.mrb[0].mxu0
      %1485 = vmatprep.mubr.bf16.mxu0 0
      %1486 = vmatmul.mubr.bf16.gmra.mrb[0].mxu0 %v1377
      %v1487 = vpop.f32.mrb[0].mxu0
      %v1488 = vadd.f32 0.0, %v1487
      %v1489 = vpop.f32.mrb[0].mxu0
      %v1490 = vpop.f32.mrb[0].mxu0
      %v1491 = vadd.f32 0.0, %v1490
      %v1492 = vpop.f32.mrb[0].mxu0
      %1493 = vmatprep.mubr.bf16.mxu0 0
      %1494 = vmatmul.mubr.bf16.gmra.mrb[0].mxu0 %v1378
      %v1495 = vpop.f32.mrb[0].mxu0
      %v1496 = vadd.f32 0.0, %v1495
      %v1497 = vpop.f32.mrb[0].mxu0
      %v1498 = vpop.f32.mrb[0].mxu0
      %v1499 = vadd.f32 0.0, %v1498
      %v1500 = vpop.f32.mrb[0].mxu0
      %1501 = vmatprep.mubr.bf16.mxu0 0
      %1502 = vmatmul.mubr.bf16.gmra.mrb[0].mxu0 %v1379
      %v1503 = vpop.f32.mrb[0].mxu0
      %v1504 = vadd.f32 0.0, %v1503
      %v1505 = vpop.f32.mrb[0].mxu0
      %v1506 = vpop.f32.mrb[0].mxu0
      %v1507 = vadd.f32 0.0, %v1506
      %v1508 = vpop.f32.mrb[0].mxu0
      %1509 = vdwg.mxu0
      %v1510 = vadd.f32 %v1360, %v1480
      %v1511 = vadd.f32 %v1361, %v1483
      %v1512 = vadd.f32 %v1362, %v1488
      %v1513 = vadd.f32 %v1363, %v1491
      %v1514 = vadd.f32 %v1364, %v1496
      %v1515 = vadd.f32 %v1365, %v1499
      %v1516 = vadd.f32 %v1366, %v1504
      %v1517 = vadd.f32 %v1367, %v1507
      %1518 = vst [vmem:[%s177] sm:$0xff] %v1510
      %1519 = vst [vmem:[%s177 + $0x8] sm:$0xff] %v1511
      %1520 = vst [vmem:[%s177 + $0x10] sm:$0xff] %v1512
      %1521 = vst [vmem:[%s177 + $0x18] sm:$0xff] %v1513
      %1522 = vst [vmem:[%s177 + $0x20] sm:$0xff] %v1514
      %1523 = vst [vmem:[%s177 + $0x28] sm:$0xff] %v1515
      %1524 = vst [vmem:[%s177 + $0x30] sm:$0xff] %v1516
      %1525 = vst [vmem:[%s177 + $0x38] sm:$0xff] %v1517
      %v1526 = vadd.f32 %v1510, %v1511
      %v1527 = vadd.f32 %v1526, %v1512
      %v1528 = vadd.f32 %v1527, %v1513
      %v1529 = vadd.f32 %v1528, %v1514
      %v1530 = vadd.f32 %v1529, %v1515
      %v1531 = vadd.f32 %v1530, %v1516
      %v1532 = vadd.f32 %v1531, %v1517
      %v1533 = vrot.slane %v1532, 4
      %v1534 = vadd.f32 %v1532, %v1533
      %v1535 = vrot.slane %v1534, 2
      %v1536 = vadd.f32 %v1534, %v1535
      %v1537 = vrot.slane %v1536, 1
      %v1538 = vadd.f32 %v1536, %v1537
      %v1539 = vmul.f32 %v1510, %v1510
      %v1540 = vmul.f32 %v1511, %v1511
      %v1541 = vmul.f32 %v1512, %v1512
      %v1542 = vmul.f32 %v1513, %v1513
      %v1543 = vmul.f32 %v1514, %v1514
      %v1544 = vmul.f32 %v1515, %v1515
      %v1545 = vmul.f32 %v1516, %v1516
      %v1546 = vmul.f32 %v1517, %v1517
      %v1547 = vadd.f32 %v1539, %v1540
      %v1548 = vadd.f32 %v1547, %v1541
      %v1549 = vadd.f32 %v1548, %v1542
      %v1550 = vadd.f32 %v1549, %v1543
      %v1551 = vadd.f32 %v1550, %v1544
      %v1552 = vadd.f32 %v1551, %v1545
      %v1553 = vadd.f32 %v1552, %v1546
      %v1554 = vrot.slane %v1553, 4
      %v1555 = vadd.f32 %v1553, %v1554
      %v1556 = vrot.slane %v1555, 2
      %v1557 = vadd.f32 %v1555, %v1556
      %v1558 = vrot.slane %v1557, 1
      %v1559 = vadd.f32 %v1557, %v1558
      %vm1560 = vcmask 1040384
      %v1561 = vsel %vm1560, %v1538, %v1559
      %1562 = vst [vmem:[%s181] sm:$0x3] %v1561
      %p1563 = scmp.lt.s32.totalorder %s15, 1
      %s1564 = scalar_select %p1563, %s15, 1
      %s1565 = smul.addr %s1564, 8
      %s1566 = smul.addr %s1565, 8
      %s1567 = scalar_lea.vmem %s2, %s1566
      %p1568 = scmp.lt.s32.totalorder %s15, 1
      %s1569 = scalar_select %p1568, %s15, 1
      %s1570 = smul.addr %s1569, 2
      %s1571 = scalar_lea.vmem %s3, %s1570
      // Predicated region
      $region29: #{residual_block.6} parent=27 // pred_check
        %p1572 = pneg %p80
      $region30: #{residual_block.6} parent=27 // pred_check_branch
        %1574 = sbr.rel (%p1572) target = $region32
      $region31: #{residual_block.6} parent=27 // pred_region
        _
      $region32: #{residual_block.6} parent=27 // pred_fallthru
        _
      // Predicated region
      $region33: #{residual_block.6} parent=27 // pred_check
        %p1575 = pneg %p106
      $region34: #{residual_block.6} parent=27 // pred_check_branch
        %1577 = sbr.rel (%p1575) target = $region36
      $region35: #{residual_block.6} parent=27 // pred_region
        _
      $region36: #{residual_block.6} parent=27 // pred_fallthru
        _
    $region28: #{residual_block.6} parent=5 // pred_fallthru
      _
    %p1578 = scmp.le.s32.totalorder 2, %s10
    // Predicated region
    $region37: #{residual_block.6} parent=5 // pred_check
      %p1579 = pneg %p1578
    $region38: #{residual_block.6} parent=5 // pred_check_branch
      %1581 = sbr.rel (%p1579) target = $region40
    $region39: #{residual_block.6} parent=5 // pred_region
      %s1582 = ssub.s32 %s10, 2
      // Predicated region
      $region41: #{residual_block.6} parent=39 // pred_check
        %p1583 = pneg %p86
      $region42: #{residual_block.6} parent=39 // pred_check_branch
        %1585 = sbr.rel (%p1583) target = $region44
      $region43: #{residual_block.6} parent=39 // pred_region
        %p1586 = scmp.lt.s32.totalorder %s16, 1
        %s1587 = scalar_select %p1586, %s16, 1
        %s1588 = smul.addr %s1587, 8
        %s1589 = smul.addr %s1588, 8
        %s1590 = scalar_lea.vmem %s2, %s1589
      $region44: #{residual_block.6} parent=39 // pred_fallthru
        _
      // Predicated region
      $region45: #{residual_block.6} parent=39 // pred_check
        %p1591 = pneg %p112
      $region46: #{residual_block.6} parent=39 // pred_check_branch
        %1593 = sbr.rel (%p1591) target = $region48
      $region47: #{residual_block.6} parent=39 // pred_region
        %p1594 = scmp.lt.s32.totalorder %s16, 1
        %s1595 = scalar_select %p1594, %s16, 1
        %s1596 = smul.addr %s1595, 2
        %s1597 = scalar_lea.vmem %s3, %s1596
      $region48: #{residual_block.6} parent=39 // pred_fallthru
        _
    $region40: #{residual_block.6} parent=5 // pred_fallthru
      _
  $region6: #{residual_block.6} parent=0 // loop_footer
    %s14 = sadd.s32 1, %s10
  $region7: #{residual_block.6} parent=0 // loop_footer_branch
    %9 = sbr.rel target = $region3
  $region8: #{residual_block.6} parent=0 // loop_exit
    _

// kernel: residual_block.4
$region0: #{residual_block.4}
  #allocation0 [shape = 'u32[]', space=smem, size = 0x4, offset = 0x4, fixed_abs, tag = 'smem constant byte address 0x4 - core index']
  #allocation1 [shape = 'u32[144,128]{1,0:T(1,128)}', space=vmem, size = 0x12000, scoped, tag = 'internal scratch']
  %s0 = inlined_call_operand.vmem [shape: f32[2,9,9,128], index: 0, kind: input, shape index: {}]
  %s1 = inlined_call_operand.vmem [shape: f32[2,9,9,128], index: 1, kind: input, shape index: {}]
  %s2 = inlined_call_operand.vmem [shape: f32[2,9,9,128], index: 2, kind: input, shape index: {}]
  %s3 = inlined_call_operand.vmem [shape: f32[2,9,9,128], index: 3, kind: input, shape index: {}]
  %s4 = inlined_call_operand.vmem [shape: bf16[9,128,128], index: 4, kind: input, shape index: {}]
  %s5 = inlined_call_operand.vmem [shape: bf16[128,128], index: 5, kind: input, shape index: {}]
  %s6 = inlined_call_operand.vmem [shape: f32[2,64,128], index: 6, kind: output, shape index: {0}]
  %s7 = inlined_call_operand.vmem [shape: f32[2,2,128], index: 7, kind: output, shape index: {1}]
  %s8 = inlined_call_operand.vmem [shape: f32[2,64,128], index: 8, kind: output, shape index: {2}]
  %s9 = inlined_call_operand.vmem [shape: f32[2,2,128], index: 9, kind: output, shape index: {3}]
  %10 = xla_tuple %s6, %s7, %s8, %s9
  %s11 = sld [smem:[#allocation0]]
  $region81: #{residual_block.4} parent=0
    _
  %s13 = ssub.s32 1, %s11
  %s14 = scalar_select 0, %s13, %s11
  loop: start=0, step=1, limit=4
  $region2: #{residual_block.4} parent=0 // loop_pre_header
    _
  $region3: #{residual_block.4} parent=0 // loop_header
    %s16 = sphi 0, %s20
    %p17 = scmp.ge.s32.totalorder %s16, 4
    %s26 = sphi 0, %s28
    %s29 = sphi 0, %s26
    %s30 = sphi 0, %s29
    %s46 = sphi 0, %s30
    %s52 = sphi 0, %s54
    %s55 = sphi 0, %s52
    %s56 = sphi 0, %s55
    %s72 = sphi 0, %s56
    %s78 = sphi 0, %s80
    %s81 = sphi 0, %s78
    %s82 = sphi 0, %s81
    %s98 = sphi 0, %s82
    %s104 = sphi 0, %s106
    %s107 = sphi 0, %s104
    %s108 = sphi 0, %s107
    %s124 = sphi 0, %s108
    %s128 = sphi 0, %s128
    %s130 = sphi 0, %s128
    %s131 = sphi 0, %s130
    %s145 = sphi 0, %s131
    %s149 = sphi 0, %s149
    %s151 = sphi 0, %s149
    %s152 = sphi 0, %s151
    %s166 = sphi 0, %s152
    %s172 = sphi 0, %s174
    %s175 = sphi 0, %s172
    %s176 = sphi 0, %s175
    %s192 = sphi 0, %s176
    %s198 = sphi 0, %s200
    %s201 = sphi 0, %s198
    %s202 = sphi 0, %s201
    %s218 = sphi 0, %s202
    %s224 = sphi 0, %s226
    %s227 = sphi 0, %s224
    %s228 = sphi 0, %s227
    %s244 = sphi 0, %s228
    %s250 = sphi 0, %s252
    %s253 = sphi 0, %s250
    %s254 = sphi 0, %s253
    %s270 = sphi 0, %s254
  $region4: #{residual_block.4} parent=0 // loop_header_branch
    %19 = sbr.rel (%p17) target = $region8
  $region5: #{residual_block.4} parent=0 // loop_body
    %s21 = ssub.s32 %s16, 1
    %s22 = ssub.s32 %s16, 2
    %s23 = sadd.s32 %s16, 1
    %s24 = ssub.s32 %s16, %s23
    %p25 = scmp.eq.s32.totalorder %s24, 0
    %s27 = sadd.s32 %s26, 1
    %s28 = scalar_select %p25, %s26, %s27
    %p31 = pneg %p25
    %p32 = scmp.eq.s32.totalorder %s16, 1
    %p33 = por %p31, %p32
    %p34 = scmp.ne.s32.totalorder %s26, %s29
    %p35 = scmp.eq.s32.totalorder %s16, 0
    %p36 = por %p34, %p35
    %p37 = scmp.ne.s32.totalorder %s26, %s29
    %p38 = scmp.eq.s32.totalorder %s21, 1
    %p39 = por %p37, %p38
    %p40 = scmp.ne.s32.totalorder %s29, %s30
    %p41 = scmp.eq.s32.totalorder %s21, 0
    %p42 = por %p40, %p41
    %p43 = scmp.ne.s32.totalorder %s29, %s30
    %p44 = scmp.eq.s32.totalorder %s22, 1
    %p45 = por %p43, %p44
    %p47 = scmp.ne.s32.totalorder %s30, %s46
    %p48 = scmp.eq.s32.totalorder %s22, 0
    %p49 = por %p47, %p48
    %s50 = ssub.s32 %s16, %s23
    %p51 = scmp.eq.s32.totalorder %s50, 0
    %s53 = sadd.s32 %s52, 1
    %s54 = scalar_select %p51, %s52, %s53
    %p57 = pneg %p51
    %p58 = scmp.eq.s32.totalorder %s16, 1
    %p59 = por %p57, %p58
    %p60 = scmp.ne.s32.totalorder %s52, %s55
    %p61 = scmp.eq.s32.totalorder %s16, 0
    %p62 = por %p60, %p61
    %p63 = scmp.ne.s32.totalorder %s52, %s55
    %p64 = scmp.eq.s32.totalorder %s21, 1
    %p65 = por %p63, %p64
    %p66 = scmp.ne.s32.totalorder %s55, %s56
    %p67 = scmp.eq.s32.totalorder %s21, 0
    %p68 = por %p66, %p67
    %p69 = scmp.ne.s32.totalorder %s55, %s56
    %p70 = scmp.eq.s32.totalorder %s22, 1
    %p71 = por %p69, %p70
    %p73 = scmp.ne.s32.totalorder %s56, %s72
    %p74 = scmp.eq.s32.totalorder %s22, 0
    %p75 = por %p73, %p74
    %s76 = ssub.s32 %s16, %s23
    %p77 = scmp.eq.s32.totalorder %s76, 0
    %s79 = sadd.s32 %s78, 1
    %s80 = scalar_select %p77, %s78, %s79
    %p83 = pneg %p77
    %p84 = scmp.eq.s32.totalorder %s16, 1
    %p85 = por %p83, %p84
    %p86 = scmp.ne.s32.totalorder %s78, %s81
    %p87 = scmp.eq.s32.totalorder %s16, 0
    %p88 = por %p86, %p87
    %p89 = scmp.ne.s32.totalorder %s78, %s81
    %p90 = scmp.eq.s32.totalorder %s21, 1
    %p91 = por %p89, %p90
    %p92 = scmp.ne.s32.totalorder %s81, %s82
    %p93 = scmp.eq.s32.totalorder %s21, 0
    %p94 = por %p92, %p93
    %p95 = scmp.ne.s32.totalorder %s81, %s82
    %p96 = scmp.eq.s32.totalorder %s22, 1
    %p97 = por %p95, %p96
    %p99 = scmp.ne.s32.totalorder %s82, %s98
    %p100 = scmp.eq.s32.totalorder %s22, 0
    %p101 = por %p99, %p100
    %s102 = ssub.s32 %s16, %s23
    %p103 = scmp.eq.s32.totalorder %s102, 0
    %s105 = sadd.s32 %s104, 1
    %s106 = scalar_select %p103, %s104, %s105
    %p109 = pneg %p103
    %p110 = scmp.eq.s32.totalorder %s16, 1
    %p111 = por %p109, %p110
    %p112 = scmp.ne.s32.totalorder %s104, %s107
    %p113 = scmp.eq.s32.totalorder %s16, 0
    %p114 = por %p112, %p113
    %p115 = scmp.ne.s32.totalorder %s104, %s107
    %p116 = scmp.eq.s32.totalorder %s21, 1
    %p117 = por %p115, %p116
    %p118 = scmp.ne.s32.totalorder %s107, %s108
    %p119 = scmp.eq.s32.totalorder %s21, 0
    %p120 = por %p118, %p119
    %p121 = scmp.ne.s32.totalorder %s107, %s108
    %p122 = scmp.eq.s32.totalorder %s22, 1
    %p123 = por %p121, %p122
    %p125 = scmp.ne.s32.totalorder %s108, %s124
    %p126 = scmp.eq.s32.totalorder %s22, 0
    %p127 = por %p125, %p126
    %s129 = sadd.s32 %s128, 1
    %p132 = scmp.eq.s32.totalorder %s16, 1
    %p133 = scmp.ne.s32.totalorder %s128, %s130
    %p134 = scmp.eq.s32.totalorder %s16, 0
    %p135 = por %p133, %p134
    %p136 = scmp.ne.s32.totalorder %s128, %s130
    %p137 = scmp.eq.s32.totalorder %s21, 1
    %p138 = por %p136, %p137
    %p139 = scmp.ne.s32.totalorder %s130, %s131
    %p140 = scmp.eq.s32.totalorder %s21, 0
    %p141 = por %p139, %p140
    %p142 = scmp.ne.s32.totalorder %s130, %s131
    %p143 = scmp.eq.s32.totalorder %s22, 1
    %p144 = por %p142, %p143
    %p146 = scmp.ne.s32.totalorder %s131, %s145
    %p147 = scmp.eq.s32.totalorder %s22, 0
    %p148 = por %p146, %p147
    %s150 = sadd.s32 %s149, 1
    %p153 = scmp.eq.s32.totalorder %s16, 1
    %p154 = scmp.ne.s32.totalorder %s149, %s151
    %p155 = scmp.eq.s32.totalorder %s16, 0
    %p156 = por %p154, %p155
    %p157 = scmp.ne.s32.totalorder %s149, %s151
    %p158 = scmp.eq.s32.totalorder %s21, 1
    %p159 = por %p157, %p158
    %p160 = scmp.ne.s32.totalorder %s151, %s152
    %p161 = scmp.eq.s32.totalorder %s21, 0
    %p162 = por %p160, %p161
    %p163 = scmp.ne.s32.totalorder %s151, %s152
    %p164 = scmp.eq.s32.totalorder %s22, 1
    %p165 = por %p163, %p164
    %p167 = scmp.ne.s32.totalorder %s152, %s166
    %p168 = scmp.eq.s32.totalorder %s22, 0
    %p169 = por %p167, %p168
    %s170 = ssub.s32 %s16, %s23
    %p171 = scmp.eq.s32.totalorder %s170, 0
    %s173 = sadd.s32 %s172, 1
    %s174 = scalar_select %p171, %s172, %s173
    %p177 = pneg %p171
    %p178 = scmp.eq.s32.totalorder %s16, 1
    %p179 = por %p177, %p178
    %p180 = scmp.ne.s32.totalorder %s172, %s175
    %p181 = scmp.eq.s32.totalorder %s16, 0
    %p182 = por %p180, %p181
    %p183 = scmp.ne.s32.totalorder %s172, %s175
    %p184 = scmp.eq.s32.totalorder %s21, 1
    %p185 = por %p183, %p184
    %p186 = scmp.ne.s32.totalorder %s175, %s176
    %p187 = scmp.eq.s32.totalorder %s21, 0
    %p188 = por %p186, %p187
    %p189 = scmp.ne.s32.totalorder %s175, %s176
    %p190 = scmp.eq.s32.totalorder %s22, 1
    %p191 = por %p189, %p190
    %p193 = scmp.ne.s32.totalorder %s176, %s192
    %p194 = scmp.eq.s32.totalorder %s22, 0
    %p195 = por %p193, %p194
    %s196 = ssub.s32 %s16, %s23
    %p197 = scmp.eq.s32.totalorder %s196, 0
    %s199 = sadd.s32 %s198, 1
    %s200 = scalar_select %p197, %s198, %s199
    %p203 = pneg %p197
    %p204 = scmp.eq.s32.totalorder %s16, 1
    %p205 = por %p203, %p204
    %p206 = scmp.ne.s32.totalorder %s198, %s201
    %p207 = scmp.eq.s32.totalorder %s16, 0
    %p208 = por %p206, %p207
    %p209 = scmp.ne.s32.totalorder %s198, %s201
    %p210 = scmp.eq.s32.totalorder %s21, 1
    %p211 = por %p209, %p210
    %p212 = scmp.ne.s32.totalorder %s201, %s202
    %p213 = scmp.eq.s32.totalorder %s21, 0
    %p214 = por %p212, %p213
    %p215 = scmp.ne.s32.totalorder %s201, %s202
    %p216 = scmp.eq.s32.totalorder %s22, 1
    %p217 = por %p215, %p216
    %p219 = scmp.ne.s32.totalorder %s202, %s218
    %p220 = scmp.eq.s32.totalorder %s22, 0
    %p221 = por %p219, %p220
    %s222 = ssub.s32 %s16, %s23
    %p223 = scmp.eq.s32.totalorder %s222, 0
    %s225 = sadd.s32 %s224, 1
    %s226 = scalar_select %p223, %s224, %s225
    %p229 = pneg %p223
    %p230 = scmp.eq.s32.totalorder %s16, 1
    %p231 = por %p229, %p230
    %p232 = scmp.ne.s32.totalorder %s224, %s227
    %p233 = scmp.eq.s32.totalorder %s16, 0
    %p234 = por %p232, %p233
    %p235 = scmp.ne.s32.totalorder %s224, %s227
    %p236 = scmp.eq.s32.totalorder %s21, 1
    %p237 = por %p235, %p236
    %p238 = scmp.ne.s32.totalorder %s227, %s228
    %p239 = scmp.eq.s32.totalorder %s21, 0
    %p240 = por %p238, %p239
    %p241 = scmp.ne.s32.totalorder %s227, %s228
    %p242 = scmp.eq.s32.totalorder %s22, 1
    %p243 = por %p241, %p242
    %p245 = scmp.ne.s32.totalorder %s228, %s244
    %p246 = scmp.eq.s32.totalorder %s22, 0
    %p247 = por %p245, %p246
    %s248 = ssub.s32 %s16, %s23
    %p249 = scmp.eq.s32.totalorder %s248, 0
    %s251 = sadd.s32 %s250, 1
    %s252 = scalar_select %p249, %s250, %s251
    %p255 = pneg %p249
    %p256 = scmp.eq.s32.totalorder %s16, 1
    %p257 = por %p255, %p256
    %p258 = scmp.ne.s32.totalorder %s250, %s253
    %p259 = scmp.eq.s32.totalorder %s16, 0
    %p260 = por %p258, %p259
    %p261 = scmp.ne.s32.totalorder %s250, %s253
    %p262 = scmp.eq.s32.totalorder %s21, 1
    %p263 = por %p261, %p262
    %p264 = scmp.ne.s32.totalorder %s253, %s254
    %p265 = scmp.eq.s32.totalorder %s21, 0
    %p266 = por %p264, %p265
    %p267 = scmp.ne.s32.totalorder %s253, %s254
    %p268 = scmp.eq.s32.totalorder %s22, 1
    %p269 = por %p267, %p268
    %p271 = scmp.ne.s32.totalorder %s254, %s270
    %p272 = scmp.eq.s32.totalorder %s22, 0
    %p273 = por %p271, %p272
    %p274 = scmp.le.s32.totalorder 1, %s16
    %p275 = scmp.lt.s32.totalorder %s16, 3
    %p276 = pnand %p274, %p275
    %p277 = pneg %p276
    // Predicated region
    $region9: #{residual_block.4} parent=5 // pred_check
      _
    $region10: #{residual_block.4} parent=5 // pred_check_branch
      %279 = sbr.rel (%p276) target = $region12
    $region11: #{residual_block.4} parent=5 // pred_region
      %s280 = ssub.s32 %s16, 1
      // Predicated region
      $region13: #{residual_block.4} parent=11 // pred_check
        %p281 = pneg %p141
      $region14: #{residual_block.4} parent=11 // pred_check_branch
        %283 = sbr.rel (%p281) target = $region16
      $region15: #{residual_block.4} parent=11 // pred_region
        _
      $region16: #{residual_block.4} parent=11 // pred_fallthru
        _
      // Predicated region
      $region17: #{residual_block.4} parent=11 // pred_check
        %p284 = pneg %p162
      $region18: #{residual_block.4} parent=11 // pred_check_branch
        %286 = sbr.rel (%p284) target = $region20
      $region19: #{residual_block.4} parent=11 // pred_region
        _
      $region20: #{residual_block.4} parent=11 // pred_fallthru
        _
    $region12: #{residual_block.4} parent=5 // pred_fallthru
      _
    %p287 = scmp.lt.s32.totalorder %s16, 2
    // Predicated region
    $region21: #{residual_block.4} parent=5 // pred_check
      %p288 = pneg %p287
    $region22: #{residual_block.4} parent=5 // pred_check_branch
      %290 = sbr.rel (%p288) target = $region24
    $region23: #{residual_block.4} parent=5 // pred_region
      // Predicated region
      $region25: #{residual_block.4} parent=23 // pred_check
        %p291 = pneg %p36
      $region26: #{residual_block.4} parent=23 // pred_check_branch
        %293 = sbr.rel (%p291) target = $region28
      $region27: #{residual_block.4} parent=23 // pred_region
        %p294 = scmp.lt.s32.totalorder %s16, 1
        %s295 = scalar_select %p294, %s16, 1
        %s296 = smul.addr %s295, 18
        %s297 = smul.addr %s296, 8
        %s298 = scalar_lea.vmem %s0, %s297
      $region28: #{residual_block.4} parent=23 // pred_fallthru
        _
      // Predicated region
      $region29: #{residual_block.4} parent=23 // pred_check
        %p299 = pneg %p62
      $region30: #{residual_block.4} parent=23 // pred_check_branch
        %301 = sbr.rel (%p299) target = $region32
      $region31: #{residual_block.4} parent=23 // pred_region
        %p302 = scmp.lt.s32.totalorder %s16, 1
        %s303 = scalar_select %p302, %s16, 1
        %s304 = smul.addr %s303, 18
        %s305 = smul.addr %s304, 8
        %s306 = scalar_lea.vmem %s1, %s305
      $region32: #{residual_block.4} parent=23 // pred_fallthru
        _
      // Predicated region
      $region33: #{residual_block.4} parent=23 // pred_check
        %p307 = pneg %p88
      $region34: #{residual_block.4} parent=23 // pred_check_branch
        %309 = sbr.rel (%p307) target = $region36
      $region35: #{residual_block.4} parent=23 // pred_region
        %p310 = scmp.lt.s32.totalorder %s16, 1
        %s311 = scalar_select %p310, %s16, 1
        %s312 = smul.addr %s311, 18
        %s313 = smul.addr %s312, 8
        %s314 = scalar_lea.vmem %s2, %s313
      $region36: #{residual_block.4} parent=23 // pred_fallthru
        _
      // Predicated region
      $region37: #{residual_block.4} parent=23 // pred_check
        %p315 = pneg %p114
      $region38: #{residual_block.4} parent=23 // pred_check_branch
        %317 = sbr.rel (%p315) target = $region40
      $region39: #{residual_block.4} parent=23 // pred_region
        %p318 = scmp.lt.s32.totalorder %s16, 1
        %s319 = scalar_select %p318, %s16, 1
        %s320 = smul.addr %s319, 18
        %s321 = smul.addr %s320, 8
        %s322 = scalar_lea.vmem %s3, %s321
      $region40: #{residual_block.4} parent=23 // pred_fallthru
        _
    $region24: #{residual_block.4} parent=5 // pred_fallthru
      _
    %p323 = scmp.le.s32.totalorder 1, %s16
    %p324 = scmp.lt.s32.totalorder %s16, 3
    %p325 = pnand %p323, %p324
    %p326 = pneg %p325
    // Predicated region
    $region41: #{residual_block.4} parent=5 // pred_check
      _
    $region42: #{residual_block.4} parent=5 // pred_check_branch
      %328 = sbr.rel (%p325) target = $region44
    $region43: #{residual_block.4} parent=5 // pred_region
      %s329 = ssub.s32 %s16, 1
      %p330 = scmp.lt.s32.totalorder %s21, 1
      %s331 = scalar_select %p330, %s21, 1
      %s332 = smul.addr %s331, 18
      %s333 = smul.addr %s332, 8
      %s334 = scalar_lea.vmem %s0, %s333
      %p335 = pneg %p42
      %p336 = pneg %p39
      %p337 = scmp.lt.s32.totalorder %s21, 1
      %s338 = scalar_select %p337, %s21, 1
      %s339 = smul.addr %s338, 18
      %s340 = smul.addr %s339, 8
      %s341 = scalar_lea.vmem %s1, %s340
      %p342 = pneg %p68
      %p343 = pneg %p65
      %p344 = scmp.lt.s32.totalorder %s21, 1
      %s345 = scalar_select %p344, %s21, 1
      %s346 = smul.addr %s345, 18
      %s347 = smul.addr %s346, 8
      %s348 = scalar_lea.vmem %s2, %s347
      %p349 = pneg %p94
      %p350 = pneg %p91
      %p351 = scmp.lt.s32.totalorder %s21, 1
      %s352 = scalar_select %p351, %s21, 1
      %s353 = smul.addr %s352, 18
      %s354 = smul.addr %s353, 8
      %s355 = scalar_lea.vmem %s3, %s354
      %p356 = pneg %p120
      %p357 = pneg %p117
      %p358 = pneg %p141
      %p359 = pneg %p138
      %p360 = pneg %p162
      %p361 = pneg %p159
      %p362 = pneg %p188
      %p363 = pneg %p185
      %p364 = scmp.lt.s32.totalorder %s21, 1
      %s365 = scalar_select %p364, %s21, 1
      %s366 = smul.addr %s365, 8
      %s367 = smul.addr %s366, 8
      %s368 = scalar_lea.vmem %s6, %s367
      %p369 = pneg %p214
      %p370 = pneg %p211
      %p371 = scmp.lt.s32.totalorder %s21, 1
      %s372 = scalar_select %p371, %s21, 1
      %s373 = smul.addr %s372, 2
      %s374 = scalar_lea.vmem %s7, %s373
      %p375 = pneg %p240
      %p376 = pneg %p237
      %p377 = scmp.lt.s32.totalorder %s21, 1
      %s378 = scalar_select %p377, %s21, 1
      %s379 = smul.addr %s378, 8
      %s380 = smul.addr %s379, 8
      %s381 = scalar_lea.vmem %s8, %s380
      %p382 = pneg %p266
      %p383 = pneg %p263
      %p384 = scmp.lt.s32.totalorder %s21, 1
      %s385 = scalar_select %p384, %s21, 1
      %s386 = smul.addr %s385, 2
      %s387 = scalar_lea.vmem %s9, %s386
      %p388 = scmp.lt.s32.totalorder %s21, 1
      %s389 = scalar_select %p388, %s21, 1
      %s390 = smul.addr %s389, 18
      %s391 = smul.addr %s390, 8
      %s392 = scalar_lea.vmem %s0, %s391
      %p393 = scmp.lt.s32.totalorder %s21, 1
      %s394 = scalar_select %p393, %s21, 1
      %s395 = smul.addr %s394, 18
      %s396 = smul.addr %s395, 8
      %s397 = scalar_lea.vmem %s1, %s396
      %p398 = scmp.lt.s32.totalorder %s21, 1
      %s399 = scalar_select %p398, %s21, 1
      %s400 = smul.addr %s399, 18
      %s401 = smul.addr %s400, 8
      %s402 = scalar_lea.vmem %s2, %s401
      %p403 = scmp.lt.s32.totalorder %s21, 1
      %s404 = scalar_select %p403, %s21, 1
      %s405 = smul.addr %s404, 18
      %s406 = smul.addr %s405, 8
      %s407 = scalar_lea.vmem %s3, %s406
      %p408 = scmp.lt.s32.totalorder %s21, 1
      %s409 = scalar_select %p408, %s21, 1
      %s410 = smul.addr %s409, 8
      %s411 = smul.addr %s410, 8
      %s412 = scalar_lea.vmem %s6, %s411
      %p413 = scmp.lt.s32.totalorder %s21, 1
      %s414 = scalar_select %p413, %s21, 1
      %s415 = smul.addr %s414, 2
      %s416 = scalar_lea.vmem %s7, %s415
      %p417 = scmp.lt.s32.totalorder %s21, 1
      %s418 = scalar_select %p417, %s21, 1
      %s419 = smul.addr %s418, 8
      %s420 = smul.addr %s419, 8
      %s421 = scalar_lea.vmem %s8, %s420
      %p422 = scmp.lt.s32.totalorder %s21, 1
      %s423 = scalar_select %p422, %s21, 1
      %s424 = smul.addr %s423, 2
      %s425 = scalar_lea.vmem %s9, %s424
      %v427 = vld [vmem:[%s392] sm:$0xff]
      %v428 = vld [vmem:[%s392 + $0x10] sm:$0xff]
      %v429 = vld [vmem:[%s392 + $0x20] sm:$0xff]
      %v430 = vld [vmem:[%s392 + $0x30] sm:$0xff]
      %v431 = vld [vmem:[%s392 + $0x40] sm:$0xff]
      %v432 = vld [vmem:[%s392 + $0x50] sm:$0xff]
      %v433 = vld [vmem:[%s392 + $0x60] sm:$0xff]
      %v434 = vld [vmem:[%s392 + $0x70] sm:$0xff]
      %v435 = vpack.c.bf16 %v428, %v427
      %v436 = vpack.c.bf16 %v430, %v429
      %v437 = vpack.c.bf16 %v432, %v431
      %v438 = vpack.c.bf16 %v434, %v433
      %v439 = vld [vmem:[%s4] sm:$0xf]
      %v440 = vld [vmem:[%s4 + $0x4] sm:$0xf]
      %v441 = vld [vmem:[%s4 + $0x8] sm:$0xf]
      %v442 = vld [vmem:[%s4 + $0xc] sm:$0xf]
      %v443 = vld [vmem:[%s4 + $0x10] sm:$0xf]
      %v444 = vld [vmem:[%s4 + $0x14] sm:$0xf]
      %v445 = vld [vmem:[%s4 + $0x18] sm:$0xf]
      %v446 = vld [vmem:[%s4 + $0x1c] sm:$0xf]
      %v447 = vld [vmem:[%s4 + $0x20] sm:$0xf]
      %v448 = vld [vmem:[%s4 + $0x24] sm:$0xf]
      %v449 = vld [vmem:[%s4 + $0x28] sm:$0xf]
      %v450 = vld [vmem:[%s4 + $0x2c] sm:$0xf]
      %v451 = vld [vmem:[%s4 + $0x30] sm:$0xf]
      %v452 = vld [vmem:[%s4 + $0x34] sm:$0xf]
      %v453 = vld [vmem:[%s4 + $0x38] sm:$0xf]
      %v454 = vld [vmem:[%s4 + $0x3c] sm:$0xf]
      %v455 = vld [vmem:[%s397] sm:$0xff]
      %v456 = vld [vmem:[%s397 + $0x10] sm:$0xff]
      %v457 = vld [vmem:[%s397 + $0x20] sm:$0xff]
      %v458 = vld [vmem:[%s397 + $0x30] sm:$0xff]
      %v459 = vld [vmem:[%s397 + $0x40] sm:$0xff]
      %v460 = vld [vmem:[%s397 + $0x50] sm:$0xff]
      %v461 = vld [vmem:[%s397 + $0x60] sm:$0xff]
      %v462 = vld [vmem:[%s397 + $0x70] sm:$0xff]
      %v463 = vpack.c.bf16 %v456, %v455
      %v464 = vpack.c.bf16 %v458, %v457
      %v465 = vpack.c.bf16 %v460, %v459
      %v466 = vpack.c.bf16 %v462, %v461
      %s467 = scalar_lea.vmem %s4, 64
      %v468 = vld [vmem:[%s467] sm:$0xf]
      %v469 = vld [vmem:[%s467 + $0x4] sm:$0xf]
      %v470 = vld [vmem:[%s467 + $0x8] sm:$0xf]
      %v471 = vld [vmem:[%s467 + $0xc] sm:$0xf]
      %v472 = vld [vmem:[%s467 + $0x10] sm:$0xf]
      %v473 = vld [vmem:[%s467 + $0x14] sm:$0xf]
      %v474 = vld [vmem:[%s467 + $0x18] sm:$0xf]
      %v475 = vld [vmem:[%s467 + $0x1c] sm:$0xf]
      %v476 = vld [vmem:[%s467 + $0x20] sm:$0xf]
      %v477 = vld [vmem:[%s467 + $0x24] sm:$0xf]
      %v478 = vld [vmem:[%s467 + $0x28] sm:$0xf]
      %v479 = vld [vmem:[%s467 + $0x2c] sm:$0xf]
      %v480 = vld [vmem:[%s467 + $0x30] sm:$0xf]
      %v481 = vld [vmem:[%s467 + $0x34] sm:$0xf]
      %v482 = vld [vmem:[%s467 + $0x38] sm:$0xf]
      %v483 = vld [vmem:[%s467 + $0x3c] sm:$0xf]
      %v500 = vunpack.c.l.b16 %v468
      %v501 = vunpack.c.l.b16 %v469
      %v502 = vunpack.c.l.b16 %v470
      %v503 = vunpack.c.l.b16 %v471
      %v504 = vunpack.c.l.b16 %v472
      %v505 = vunpack.c.l.b16 %v473
      %v506 = vunpack.c.l.b16 %v474
      %v507 = vunpack.c.l.b16 %v475
      %v508 = vunpack.c.l.b16 %v476
      %v509 = vunpack.c.l.b16 %v477
      %v510 = vunpack.c.l.b16 %v478
      %v511 = vunpack.c.l.b16 %v479
      %v512 = vunpack.c.l.b16 %v480
      %v513 = vunpack.c.l.b16 %v481
      %v514 = vunpack.c.l.b16 %v482
      %v515 = vunpack.c.l.b16 %v483
      %v516 = vpack.c.b16 %v501, %v500
      %v517 = vpack.c.b16 %v503, %v502
      %v518 = vpack.c.b16 %v505, %v504
      %v519 = vpack.c.b16 %v507, %v506
      %v520 = vpack.c.b16 %v509, %v508
      %v521 = vpack.c.b16 %v511, %v510
      %v522 = vpack.c.b16 %v513, %v512
      %v523 = vpack.c.b16 %v515, %v514
      %532 = vmatprep.subr.bf16.mxu0 0
      %533 = vmatpush1.bf16.msra.mxu0 %v516
      %534 = vmatprep.subr.bf16.mxu0 0
      %535 = vmatpush1.bf16.msra.mxu0 %v517
      %536 = vmatprep.subr.bf16.mxu0 0
      %537 = vmatpush1.bf16.msra.mxu0 %v518
      %538 = vmatprep.subr.bf16.mxu0 0
      %539 = vmatpush1.bf16.msra.mxu0 %v519
      %540 = vmatprep.subr.bf16.mxu0 0
      %541 = vmatpush1.bf16.msra.mxu0 %v520
      %542 = vmatprep.subr.bf16.mxu0 0
      %543 = vmatpush1.bf16.msra.mxu0 %v521
      %544 = vmatprep.subr.bf16.mxu0 0
      %545 = vmatpush1.bf16.msra.mxu0 %v522
      %546 = vmatprep.subr.bf16.mxu0 0
      %547 = vmatpush1.bf16.msra.mxu0 %v523
      %548 = vmatprep.subr.bf16.mxu0 0
      %549 = vmatpush1.bf16.msra.mxu0 0
      %550 = vmatprep.subr.bf16.mxu0 0
      %551 = vmatpush1.bf16.msra.mxu0 0
      %552 = vmatprep.subr.bf16.mxu0 0
      %553 = vmatpush1.bf16.msra.mxu0 0
      %554 = vmatprep.subr.bf16.mxu0 0
      %555 = vmatpush1.bf16.msra.mxu0 0
      %556 = vmatprep.subr.bf16.mxu0 0
      %557 = vmatpush1.bf16.msra.mxu0 0
      %558 = vmatprep.subr.bf16.mxu0 0
      %559 = vmatpush1.bf16.msra.mxu0 0
      %560 = vmatprep.subr.bf16.mxu0 0
      %561 = vmatpush1.bf16.msra.mxu0 0
      %562 = vmatprep.subr.bf16.mxu0 0
      %563 = vmatpush1.bf16.msra.mxu0 0
      %564 = vmatprep.mubr.bf16.mxu0 0
      %565 = vmatmul.mubr.bf16.gmra.mrb[0].mxu0 %v463
      %v566 = vpop.f32.mrb[0].mxu0
      %v567 = vadd.f32 0.0, %v566
      %v568 = vpop.f32.mrb[0].mxu0
      %v569 = vpop.f32.mrb[0].mxu0
      %v570 = vadd.f32 0.0, %v569
      %v571 = vpop.f32.mrb[0].mxu0
      %572 = vmatprep.mubr.bf16.mxu0 0
      %573 = vmatmul.mubr.bf16.gmra.mrb[0].mxu0 %v464
      %v574 = vpop.f32.mrb[0].mxu0
      %v575 = vadd.f32 0.0, %v574
      %v576 = vpop.f32.mrb[0].mxu0
      %v577 = vpop.f32.mrb[0].mxu0
      %v578 = vadd.f32 0.0, %v577
      %v579 = vpop.f32.mrb[0].mxu0
      %580 = vmatprep.mubr.bf16.mxu0 0
      %581 = vmatmul.mubr.bf16.gmra.mrb[0].mxu0 %v465
      %v582 = vpop.f32.mrb[0].mxu0
      %v583 = vadd.f32 0.0, %v582
      %v584 = vpop.f32.mrb[0].mxu0
      %v585 = vpop.f32.mrb[0].mxu0
      %v586 = vadd.f32 0.0, %v585
      %v587 = vpop.f32.mrb[0].mxu0
      %588 = vmatprep.mubr.bf16.mxu0 0
      %589 = vmatmul.mubr.bf16.gmra.mrb[0].mxu0 %v466
      %v590 = vpop.f32.mrb[0].mxu0
      %v591 = vadd.f32 0.0, %v590
      %v592 = vpop.f32.mrb[0].mxu0
      %v593 = vpop.f32.mrb[0].mxu0
      %v594 = vadd.f32 0.0, %v593
      %v595 = vpop.f32.mrb[0].mxu0
      %596 = vdwg.mxu0
      %v613 = vunpack.c.l.b16 %v439
      %v614 = vunpack.c.l.b16 %v440
      %v615 = vunpack.c.l.b16 %v441
      %v616 = vunpack.c.l.b16 %v442
      %v617 = vunpack.c.l.b16 %v443
      %v618 = vunpack.c.l.b16 %v444
      %v619 = vunpack.c.l.b16 %v445
      %v620 = vunpack.c.l.b16 %v446
      %v621 = vunpack.c.l.b16 %v447
      %v622 = vunpack.c.l.b16 %v448
      %v623 = vunpack.c.l.b16 %v449
      %v624 = vunpack.c.l.b16 %v450
      %v625 = vunpack.c.l.b16 %v451
      %v626 = vunpack.c.l.b16 %v452
      %v627 = vunpack.c.l.b16 %v453
      %v628 = vunpack.c.l.b16 %v454
      %v629 = vpack.c.b16 %v614, %v613
      %v630 = vpack.c.b16 %v616, %v615
      %v631 = vpack.c.b16 %v618, %v617
      %v632 = vpack.c.b16 %v620, %v619
      %v633 = vpack.c.b16 %v622, %v621
      %v634 = vpack.c.b16 %v624, %v623
      %v635 = vpack.c.b16 %v626, %v625
      %v636 = vpack.c.b16 %v628, %v627
      %645 = vmatprep.subr.bf16.mxu0 0
      %646 = vmatpush1.bf16.msra.mxu0 %v629
      %647 = vmatprep.subr.bf16.mxu0 0
      %648 = vmatpush1.bf16.msra.mxu0 %v630
      %649 = vmatprep.subr.bf16.mxu0 0
      %650 = vmatpush1.bf16.msra.mxu0 %v631
      %651 = vmatprep.subr.bf16.mxu0 0
      %652 = vmatpush1.bf16.msra.mxu0 %v632
      %653 = vmatprep.subr.bf16.mxu0 0
      %654 = vmatpush1.bf16.msra.mxu0 %v633
      %655 = vmatprep.subr.bf16.mxu0 0
      %656 = vmatpush1.bf16.msra.mxu0 %v634
      %657 = vmatprep.subr.bf16.mxu0 0
      %658 = vmatpush1.bf16.msra.mxu0 %v635
      %659 = vmatprep.subr.bf16.mxu0 0
      %660 = vmatpush1.bf16.msra.mxu0 %v636
      %661 = vmatprep.subr.bf16.mxu0 0
      %662 = vmatpush1.bf16.msra.mxu0 0
      %663 = vmatprep.subr.bf16.mxu0 0
      %664 = vmatpush1.bf16.msra.mxu0 0
      %665 = vmatprep.subr.bf16.mxu0 0
      %666 = vmatpush1.bf16.msra.mxu0 0
      %667 = vmatprep.subr.bf16.mxu0 0
      %668 = vmatpush1.bf16.msra.mxu0 0
      %669 = vmatprep.subr.bf16.mxu0 0
      %670 = vmatpush1.bf16.msra.mxu0 0
      %671 = vmatprep.subr.bf16.mxu0 0
      %672 = vmatpush1.bf16.msra.mxu0 0
      %673 = vmatprep.subr.bf16.mxu0 0
      %674 = vmatpush1.bf16.msra.mxu0 0
      %675 = vmatprep.subr.bf16.mxu0 0
      %676 = vmatpush1.bf16.msra.mxu0 0
      %677 = vmatprep.mubr.bf16.mxu0 0
      %678 = vmatmul.mubr.bf16.gmra.mrb[0].mxu0 %v435
      %v679 = vpop.f32.mrb[0].mxu0
      %v680 = vadd.f32 %v567, %v679
      %v681 = vpop.f32.mrb[0].mxu0
      %v682 = vpop.f32.mrb[0].mxu0
      %v683 = vadd.f32 %v570, %v682
      %v684 = vpop.f32.mrb[0].mxu0
      %685 = vmatprep.mubr.bf16.mxu0 0
      %686 = vmatmul.mubr.bf16.gmra.mrb[0].mxu0 %v436
      %v687 = vpop.f32.mrb[0].mxu0
      %v688 = vadd.f32 %v575, %v687
      %v689 = vpop.f32.mrb[0].mxu0
      %v690 = vpop.f32.mrb[0].mxu0
      %v691 = vadd.f32 %v578, %v690
      %v692 = vpop.f32.mrb[0].mxu0
      %693 = vmatprep.mubr.bf16.mxu0 0
      %694 = vmatmul.mubr.bf16.gmra.mrb[0].mxu0 %v437
      %v695 = vpop.f32.mrb[0].mxu0
      %v696 = vadd.f32 %v583, %v695
      %v697 = vpop.f32.mrb[0].mxu0
      %v698 = vpop.f32.mrb[0].mxu0
      %v699 = vadd.f32 %v586, %v698
      %v700 = vpop.f32.mrb[0].mxu0
      %701 = vmatprep.mubr.bf16.mxu0 0
      %702 = vmatmul.mubr.bf16.gmra.mrb[0].mxu0 %v438
      %v703 = vpop.f32.mrb[0].mxu0
      %v704 = vadd.f32 %v591, %v703
      %v705 = vpop.f32.mrb[0].mxu0
      %v706 = vpop.f32.mrb[0].mxu0
      %v707 = vadd.f32 %v594, %v706
      %v708 = vpop.f32.mrb[0].mxu0
      %709 = vdwg.mxu0
      %v710 = vld [vmem:[%s392 + $0x1] sm:$0xff]
      %v711 = vld [vmem:[%s392 + $0x11] sm:$0xff]
      %v712 = vld [vmem:[%s392 + $0x21] sm:$0xff]
      %v713 = vld [vmem:[%s392 + $0x31] sm:$0xff]
      %v714 = vld [vmem:[%s392 + $0x41] sm:$0xff]
      %v715 = vld [vmem:[%s392 + $0x51] sm:$0xff]
      %v716 = vld [vmem:[%s392 + $0x61] sm:$0xff]
      %v717 = vld [vmem:[%s392 + $0x71] sm:$0xff]
      %v718 = vpack.c.bf16 %v711, %v710
      %v719 = vpack.c.bf16 %v713, %v712
      %v720 = vpack.c.bf16 %v715, %v714
      %v721 = vpack.c.bf16 %v717, %v716
      %s722 = scalar_lea.vmem %s4, 128
      %v723 = vld [vmem:[%s722] sm:$0xf]
      %v724 = vld [vmem:[%s722 + $0x4] sm:$0xf]
      %v725 = vld [vmem:[%s722 + $0x8] sm:$0xf]
      %v726 = vld [vmem:[%s722 + $0xc] sm:$0xf]
      %v727 = vld [vmem:[%s722 + $0x10] sm:$0xf]
      %v728 = vld [vmem:[%s722 + $0x14] sm:$0xf]
      %v729 = vld [vmem:[%s722 + $0x18] sm:$0xf]
      %v730 = vld [vmem:[%s722 + $0x1c] sm:$0xf]
      %v731 = vld [vmem:[%s722 + $0x20] sm:$0xf]
      %v732 = vld [vmem:[%s722 + $0x24] sm:$0xf]
      %v733 = vld [vmem:[%s722 + $0x28] sm:$0xf]
      %v734 = vld [vmem:[%s722 + $0x2c] sm:$0xf]
      %v735 = vld [vmem:[%s722 + $0x30] sm:$0xf]
      %v736 = vld [vmem:[%s722 + $0x34] sm:$0xf]
      %v737 = vld [vmem:[%s722 + $0x38] sm:$0xf]
      %v738 = vld [vmem:[%s722 + $0x3c] sm:$0xf]
      %v755 = vunpack.c.l.b16 %v723
      %v756 = vunpack.c.l.b16 %v724
      %v757 = vunpack.c.l.b16 %v725
      %v758 = vunpack.c.l.b16 %v726
      %v759 = vunpack.c.l.b16 %v727
      %v760 = vunpack.c.l.b16 %v728
      %v761 = vunpack.c.l.b16 %v729
      %v762 = vunpack.c.l.b16 %v730
      %v763 = vunpack.c.l.b16 %v731
      %v764 = vunpack.c.l.b16 %v732
      %v765 = vunpack.c.l.b16 %v733
      %v766 = vunpack.c.l.b16 %v734
      %v767 = vunpack.c.l.b16 %v735
      %v768 = vunpack.c.l.b16 %v736
      %v769 = vunpack.c.l.b16 %v737
      %v770 = vunpack.c.l.b16 %v738
      %v771 = vpack.c.b16 %v756, %v755
      %v772 = vpack.c.b16 %v758, %v757
      %v773 = vpack.c.b16 %v760, %v759
      %v774 = vpack.c.b16 %v762, %v761
      %v775 = vpack.c.b16 %v764, %v763
      %v776 = vpack.c.b16 %v766, %v765
      %v777 = vpack.c.b16 %v768, %v767
      %v778 = vpack.c.b16 %v770, %v769
      %787 = vmatprep.subr.bf16.mxu0 0
      %788 = vmatpush1.bf16.msra.mxu0 %v771
      %789 = vmatprep.subr.bf16.mxu0 0
      %790 = vmatpush1.bf16.msra.mxu0 %v772
      %791 = vmatprep.subr.bf16.mxu0 0
      %792 = vmatpush1.bf16.msra.mxu0 %v773
      %793 = vmatprep.subr.bf16.mxu0 0
      %794 = vmatpush1.bf16.msra.mxu0 %v774
      %795 = vmatprep.subr.bf16.mxu0 0
      %796 = vmatpush1.bf16.msra.mxu0 %v775
      %797 = vmatprep.subr.bf16.mxu0 0
      %798 = vmatpush1.bf16.msra.mxu0 %v776
      %799 = vmatprep.subr.bf16.mxu0 0
      %800 = vmatpush1.bf16.msra.mxu0 %v777
      %801 = vmatprep.subr.bf16.mxu0 0
      %802 = vmatpush1.bf16.msra.mxu0 %v778
      %803 = vmatprep.subr.bf16.mxu0 0
      %804 = vmatpush1.bf16.msra.mxu0 0
      %805 = vmatprep.subr.bf16.mxu0 0
      %806 = vmatpush1.bf16.msra.mxu0 0
      %807 = vmatprep.subr.bf16.mxu0 0
      %808 = vmatpush1.bf16.msra.mxu0 0
      %809 = vmatprep.subr.bf16.mxu0 0
      %810 = vmatpush1.bf16.msra.mxu0 0
      %811 = vmatprep.subr.bf16.mxu0 0
      %812 = vmatpush1.bf16.msra.mxu0 0
      %813 = vmatprep.subr.bf16.mxu0 0
      %814 = vmatpush1.bf16.msra.mxu0 0
      %815 = vmatprep.subr.bf16.mxu0 0
      %816 = vmatpush1.bf16.msra.mxu0 0
      %817 = vmatprep.subr.bf16.mxu0 0
      %818 = vmatpush1.bf16.msra.mxu0 0
      %819 = vmatprep.mubr.bf16.mxu0 0
      %820 = vmatmul.mubr.bf16.gmra.mrb[0].mxu0 %v718
      %v821 = vpop.f32.mrb[0].mxu0
      %v822 = vadd.f32 0.0, %v821
      %v823 = vpop.f32.mrb[0].mxu0
      %v824 = vpop.f32.mrb[0].mxu0
      %v825 = vadd.f32 0.0, %v824
      %v826 = vpop.f32.mrb[0].mxu0
      %827 = vmatprep.mubr.bf16.mxu0 0
      %828 = vmatmul.mubr.bf16.gmra.mrb[0].mxu0 %v719
      %v829 = vpop.f32.mrb[0].mxu0
      %v830 = vadd.f32 0.0, %v829
      %v831 = vpop.f32.mrb[0].mxu0
      %v832 = vpop.f32.mrb[0].mxu0
      %v833 = vadd.f32 0.0, %v832
      %v834 = vpop.f32.mrb[0].mxu0
      %835 = vmatprep.mubr.bf16.mxu0 0
      %836 = vmatmul.mubr.bf16.gmra.mrb[0].mxu0 %v720
      %v837 = vpop.f32.mrb[0].mxu0
      %v838 = vadd.f32 0.0, %v837
      %v839 = vpop.f32.mrb[0].mxu0
      %v840 = vpop.f32.mrb[0].mxu0
      %v841 = vadd.f32 0.0, %v840
      %v842 = vpop.f32.mrb[0].mxu0
      %843 = vmatprep.mubr.bf16.mxu0 0
      %844 = vmatmul.mubr.bf16.gmra.mrb[0].mxu0 %v721
      %v845 = vpop.f32.mrb[0].mxu0
      %v846 = vadd.f32 0.0, %v845
      %v847 = vpop.f32.mrb[0].mxu0
      %v848 = vpop.f32.mrb[0].mxu0
      %v849 = vadd.f32 0.0, %v848
      %v850 = vpop.f32.mrb[0].mxu0
      %851 = vdwg.mxu0
      %v852 = vadd.f32 %v680, %v822
      %v853 = vadd.f32 %v683, %v825
      %v854 = vadd.f32 %v688, %v830
      %v855 = vadd.f32 %v691, %v833
      %v856 = vadd.f32 %v696, %v838
      %v857 = vadd.f32 %v699, %v841
      %v858 = vadd.f32 %v704, %v846
      %v859 = vadd.f32 %v707, %v849
      %v860 = vld [vmem:[%s402] sm:$0xff]
      %v861 = vld [vmem:[%s402 + $0x10] sm:$0xff]
      %v862 = vld [vmem:[%s402 + $0x20] sm:$0xff]
      %v863 = vld [vmem:[%s402 + $0x30] sm:$0xff]
      %v864 = vld [vmem:[%s402 + $0x40] sm:$0xff]
      %v865 = vld [vmem:[%s402 + $0x50] sm:$0xff]
      %v866 = vld [vmem:[%s402 + $0x60] sm:$0xff]
      %v867 = vld [vmem:[%s402 + $0x70] sm:$0xff]
      %v868 = vpack.c.bf16 %v861, %v860
      %v869 = vpack.c.bf16 %v863, %v862
      %v870 = vpack.c.bf16 %v865, %v864
      %v871 = vpack.c.bf16 %v867, %v866
      %s872 = scalar_lea.vmem %s4, 192
      %v873 = vld [vmem:[%s872] sm:$0xf]
      %v874 = vld [vmem:[%s872 + $0x4] sm:$0xf]
      %v875 = vld [vmem:[%s872 + $0x8] sm:$0xf]
      %v876 = vld [vmem:[%s872 + $0xc] sm:$0xf]
      %v877 = vld [vmem:[%s872 + $0x10] sm:$0xf]
      %v878 = vld [vmem:[%s872 + $0x14] sm:$0xf]
      %v879 = vld [vmem:[%s872 + $0x18] sm:$0xf]
      %v880 = vld [vmem:[%s872 + $0x1c] sm:$0xf]
      %v881 = vld [vmem:[%s872 + $0x20] sm:$0xf]
      %v882 = vld [vmem:[%s872 + $0x24] sm:$0xf]
      %v883 = vld [vmem:[%s872 + $0x28] sm:$0xf]
      %v884 = vld [vmem:[%s872 + $0x2c] sm:$0xf]
      %v885 = vld [vmem:[%s872 + $0x30] sm:$0xf]
      %v886 = vld [vmem:[%s872 + $0x34] sm:$0xf]
      %v887 = vld [vmem:[%s872 + $0x38] sm:$0xf]
      %v888 = vld [vmem:[%s872 + $0x3c] sm:$0xf]
      %v905 = vunpack.c.l.b16 %v873
      %v906 = vunpack.c.l.b16 %v874
      %v907 = vunpack.c.l.b16 %v875
      %v908 = vunpack.c.l.b16 %v876
      %v909 = vunpack.c.l.b16 %v877
      %v910 = vunpack.c.l.b16 %v878
      %v911 = vunpack.c.l.b16 %v879
      %v912 = vunpack.c.l.b16 %v880
      %v913 = vunpack.c.l.b16 %v881
      %v914 = vunpack.c.l.b16 %v882
      %v915 = vunpack.c.l.b16 %v883
      %v916 = vunpack.c.l.b16 %v884
      %v917 = vunpack.c.l.b16 %v885
      %v918 = vunpack.c.l.b16 %v886
      %v919 = vunpack.c.l.b16 %v887
      %v920 = vunpack.c.l.b16 %v888
      %v921 = vpack.c.b16 %v906, %v905
      %v922 = vpack.c.b16 %v908, %v907
      %v923 = vpack.c.b16 %v910, %v909
      %v924 = vpack.c.b16 %v912, %v911
      %v925 = vpack.c.b16 %v914, %v913
      %v926 = vpack.c.b16 %v916, %v915
      %v927 = vpack.c.b16 %v918, %v917
      %v928 = vpack.c.b16 %v920, %v919
      %937 = vmatprep.subr.bf16.mxu0 0
      %938 = vmatpush1.bf16.msra.mxu0 %v921
      %939 = vmatprep.subr.bf16.mxu0 0
      %940 = vmatpush1.bf16.msra.mxu0 %v922
      %941 = vmatprep.subr.bf16.mxu0 0
      %942 = vmatpush1.bf16.msra.mxu0 %v923
      %943 = vmatprep.subr.bf16.mxu0 0
      %944 = vmatpush1.bf16.msra.mxu0 %v924
      %945 = vmatprep.subr.bf16.mxu0 0
      %946 = vmatpush1.bf16.msra.mxu0 %v925
      %947 = vmatprep.subr.bf16.mxu0 0
      %948 = vmatpush1.bf16.msra.mxu0 %v926
      %949 = vmatprep.subr.bf16.mxu0 0
      %950 = vmatpush1.bf16.msra.mxu0 %v927
      %951 = vmatprep.subr.bf16.mxu0 0
      %952 = vmatpush1.bf16.msra.mxu0 %v928
      %953 = vmatprep.subr.bf16.mxu0 0
      %954 = vmatpush1.bf16.msra.mxu0 0
      %955 = vmatprep.subr.bf16.mxu0 0
      %956 = vmatpush1.bf16.msra.mxu0 0
      %957 = vmatprep.subr.bf16.mxu0 0
      %958 = vmatpush1.bf16.msra.mxu0 0
      %959 = vmatprep.subr.bf16.mxu0 0
      %960 = vmatpush1.bf16.msra.mxu0 0
      %961 = vmatprep.subr.bf16.mxu0 0
      %962 = vmatpush1.bf16.msra.mxu0 0
      %963 = vmatprep.subr.bf16.mxu0 0
      %964 = vmatpush1.bf16.msra.mxu0 0
      %965 = vmatprep.subr.bf16.mxu0 0
      %966 = vmatpush1.bf16.msra.mxu0 0
      %967 = vmatprep.subr.bf16.mxu0 0
      %968 = vmatpush1.bf16.msra.mxu0 0
      %969 = vmatprep.mubr.bf16.mxu0 0
      %970 = vmatmul.mubr.bf16.gmra.mrb[0].mxu0 %v868
      %v971 = vpop.f32.mrb[0].mxu0
      %v972 = vadd.f32 0.0, %v971
      %v973 = vpop.f32.mrb[0].mxu0
      %v974 = vpop.f32.mrb[0].mxu0
      %v975 = vadd.f32 0.0, %v974
      %v976 = vpop.f32.mrb[0].mxu0
      %977 = vmatprep.mubr.bf16.mxu0 0
      %978 = vmatmul.mubr.bf16.gmra.mrb[0].mxu0 %v869
      %v979 = vpop.f32.mrb[0].mxu0
      %v980 = vadd.f32 0.0, %v979
      %v981 = vpop.f32.mrb[0].mxu0
      %v982 = vpop.f32.mrb[0].mxu0
      %v983 = vadd.f32 0.0, %v982
      %v984 = vpop.f32.mrb[0].mxu0
      %985 = vmatprep.mubr.bf16.mxu0 0
      %986 = vmatmul.mubr.bf16.gmra.mrb[0].mxu0 %v870
      %v987 = vpop.f32.mrb[0].mxu0
      %v988 = vadd.f32 0.0, %v987
      %v989 = vpop.f32.mrb[0].mxu0
      %v990 = vpop.f32.mrb[0].mxu0
      %v991 = vadd.f32 0.0, %v990
      %v992 = vpop.f32.mrb[0].mxu0
      %993 = vmatprep.mubr.bf16.mxu0 0
      %994 = vmatmul.mubr.bf16.gmra.mrb[0].mxu0 %v871
      %v995 = vpop.f32.mrb[0].mxu0
      %v996 = vadd.f32 0.0, %v995
      %v997 = vpop.f32.mrb[0].mxu0
      %v998 = vpop.f32.mrb[0].mxu0
      %v999 = vadd.f32 0.0, %v998
      %v1000 = vpop.f32.mrb[0].mxu0
      %1001 = vdwg.mxu0
      %v1002 = vadd.f32 %v852, %v972
      %v1003 = vadd.f32 %v853, %v975
      %v1004 = vadd.f32 %v854, %v980
      %v1005 = vadd.f32 %v855, %v983
      %v1006 = vadd.f32 %v856, %v988
      %v1007 = vadd.f32 %v857, %v991
      %v1008 = vadd.f32 %v858, %v996
      %v1009 = vadd.f32 %v859, %v999
      %v1010 = vld [vmem:[%s407] sm:$0xff]
      %v1011 = vld [vmem:[%s407 + $0x10] sm:$0xff]
      %v1012 = vld [vmem:[%s407 + $0x20] sm:$0xff]
      %v1013 = vld [vmem:[%s407 + $0x30] sm:$0xff]
      %v1014 = vld [vmem:[%s407 + $0x40] sm:$0xff]
      %v1015 = vld [vmem:[%s407 + $0x50] sm:$0xff]
      %v1016 = vld [vmem:[%s407 + $0x60] sm:$0xff]
      %v1017 = vld [vmem:[%s407 + $0x70] sm:$0xff]
      %v1018 = vpack.c.bf16 %v1011, %v1010
      %v1019 = vpack.c.bf16 %v1013, %v1012
      %v1020 = vpack.c.bf16 %v1015, %v1014
      %v1021 = vpack.c.bf16 %v1017, %v1016
      %s1022 = scalar_lea.vmem %s4, 256
      %v1023 = vld [vmem:[%s1022] sm:$0xf]
      %v1024 = vld [vmem:[%s1022 + $0x4] sm:$0xf]
      %v1025 = vld [vmem:[%s1022 + $0x8] sm:$0xf]
      %v1026 = vld [vmem:[%s1022 + $0xc] sm:$0xf]
      %v1027 = vld [vmem:[%s1022 + $0x10] sm:$0xf]
      %v1028 = vld [vmem:[%s1022 + $0x14] sm:$0xf]
      %v1029 = vld [vmem:[%s1022 + $0x18] sm:$0xf]
      %v1030 = vld [vmem:[%s1022 + $0x1c] sm:$0xf]
      %v1031 = vld [vmem:[%s1022 + $0x20] sm:$0xf]
      %v1032 = vld [vmem:[%s1022 + $0x24] sm:$0xf]
      %v1033 = vld [vmem:[%s1022 + $0x28] sm:$0xf]
      %v1034 = vld [vmem:[%s1022 + $0x2c] sm:$0xf]
      %v1035 = vld [vmem:[%s1022 + $0x30] sm:$0xf]
      %v1036 = vld [vmem:[%s1022 + $0x34] sm:$0xf]
      %v1037 = vld [vmem:[%s1022 + $0x38] sm:$0xf]
      %v1038 = vld [vmem:[%s1022 + $0x3c] sm:$0xf]
      %v1055 = vunpack.c.l.b16 %v1023
      %v1056 = vunpack.c.l.b16 %v1024
      %v1057 = vunpack.c.l.b16 %v1025
      %v1058 = vunpack.c.l.b16 %v1026
      %v1059 = vunpack.c.l.b16 %v1027
      %v1060 = vunpack.c.l.b16 %v1028
      %v1061 = vunpack.c.l.b16 %v1029
      %v1062 = vunpack.c.l.b16 %v1030
      %v1063 = vunpack.c.l.b16 %v1031
      %v1064 = vunpack.c.l.b16 %v1032
      %v1065 = vunpack.c.l.b16 %v1033
      %v1066 = vunpack.c.l.b16 %v1034
      %v1067 = vunpack.c.l.b16 %v1035
      %v1068 = vunpack.c.l.b16 %v1036
      %v1069 = vunpack.c.l.b16 %v1037
      %v1070 = vunpack.c.l.b16 %v1038
      %v1071 = vpack.c.b16 %v1056, %v1055
      %v1072 = vpack.c.b16 %v1058, %v1057
      %v1073 = vpack.c.b16 %v1060, %v1059
      %v1074 = vpack.c.b16 %v1062, %v1061
      %v1075 = vpack.c.b16 %v1064, %v1063
      %v1076 = vpack.c.b16 %v1066, %v1065
      %v1077 = vpack.c.b16 %v1068, %v1067
      %v1078 = vpack.c.b16 %v1070, %v1069
      %1087 = vmatprep.subr.bf16.mxu0 0
      %1088 = vmatpush1.bf16.msra.mxu0 %v1071
      %1089 = vmatprep.subr.bf16.mxu0 0
      %1090 = vmatpush1.bf16.msra.mxu0 %v1072
      %1091 = vmatprep.subr.bf16.mxu0 0
      %1092 = vmatpush1.bf16.msra.mxu0 %v1073
      %1093 = vmatprep.subr.bf16.mxu0 0
      %1094 = vmatpush1.bf16.msra.mxu0 %v1074
      %1095 = vmatprep.subr.bf16.mxu0 0
      %1096 = vmatpush1.bf16.msra.mxu0 %v1075
      %1097 = vmatprep.subr.bf16.mxu0 0
      %1098 = vmatpush1.bf16.msra.mxu0 %v1076
      %1099 = vmatprep.subr.bf16.mxu0 0
      %1100 = vmatpush1.bf16.msra.mxu0 %v1077
      %1101 = vmatprep.subr.bf16.mxu0 0
      %1102 = vmatpush1.bf16.msra.mxu0 %v1078
      %1103 = vmatprep.subr.bf16.mxu0 0
      %1104 = vmatpush1.bf16.msra.mxu0 0
      %1105 = vmatprep.subr.bf16.mxu0 0
      %1106 = vmatpush1.bf16.msra.mxu0 0
      %1107 = vmatprep.subr.bf16.mxu0 0
      %1108 = vmatpush1.bf16.msra.mxu0 0
      %1109 = vmatprep.subr.bf16.mxu0 0
      %1110 = vmatpush1.bf16.msra.mxu0 0
      %1111 = vmatprep.subr.bf16.mxu0 0
      %1112 = vmatpush1.bf16.msra.mxu0 0
      %1113 = vmatprep.subr.bf16.mxu0 0
      %1114 = vmatpush1.bf16.msra.mxu0 0
      %1115 = vmatprep.subr.bf16.mxu0 0
      %1116 = vmatpush1.bf16.msra.mxu0 0
      %1117 = vmatprep.subr.bf16.mxu0 0
      %1118 = vmatpush1.bf16.msra.mxu0 0
      %1119 = vmatprep.mubr.bf16.mxu0 0
      %1120 = vmatmul.mubr.bf16.gmra.mrb[0].mxu0 %v1018
      %v1121 = vpop.f32.mrb[0].mxu0
      %v1122 = vadd.f32 0.0, %v1121
      %v1123 = vpop.f32.mrb[0].mxu0
      %v1124 = vpop.f32.mrb[0].mxu0
      %v1125 = vadd.f32 0.0, %v1124
      %v1126 = vpop.f32.mrb[0].mxu0
      %1127 = vmatprep.mubr.bf16.mxu0 0
      %1128 = vmatmul.mubr.bf16.gmra.mrb[0].mxu0 %v1019
      %v1129 = vpop.f32.mrb[0].mxu0
      %v1130 = vadd.f32 0.0, %v1129
      %v1131 = vpop.f32.mrb[0].mxu0
      %v1132 = vpop.f32.mrb[0].mxu0
      %v1133 = vadd.f32 0.0, %v1132
      %v1134 = vpop.f32.mrb[0].mxu0
      %1135 = vmatprep.mubr.bf16.mxu0 0
      %1136 = vmatmul.mubr.bf16.gmra.mrb[0].mxu0 %v1020
      %v1137 = vpop.f32.mrb[0].mxu0
      %v1138 = vadd.f32 0.0, %v1137
      %v1139 = vpop.f32.mrb[0].mxu0
      %v1140 = vpop.f32.mrb[0].mxu0
      %v1141 = vadd.f32 0.0, %v1140
      %v1142 = vpop.f32.mrb[0].mxu0
      %1143 = vmatprep.mubr.bf16.mxu0 0
      %1144 = vmatmul.mubr.bf16.gmra.mrb[0].mxu0 %v1021
      %v1145 = vpop.f32.mrb[0].mxu0
      %v1146 = vadd.f32 0.0, %v1145
      %v1147 = vpop.f32.mrb[0].mxu0
      %v1148 = vpop.f32.mrb[0].mxu0
      %v1149 = vadd.f32 0.0, %v1148
      %v1150 = vpop.f32.mrb[0].mxu0
      %1151 = vdwg.mxu0
      %v1152 = vadd.f32 %v1002, %v1122
      %v1153 = vadd.f32 %v1003, %v1125
      %v1154 = vadd.f32 %v1004, %v1130
      %v1155 = vadd.f32 %v1005, %v1133
      %v1156 = vadd.f32 %v1006, %v1138
      %v1157 = vadd.f32 %v1007, %v1141
      %v1158 = vadd.f32 %v1008, %v1146
      %v1159 = vadd.f32 %v1009, %v1149
      %v1160 = vld [vmem:[%s402 + $0x1] sm:$0xff]
      %v1161 = vld [vmem:[%s402 + $0x11] sm:$0xff]
      %v1162 = vld [vmem:[%s402 + $0x21] sm:$0xff]
      %v1163 = vld [vmem:[%s402 + $0x31] sm:$0xff]
      %v1164 = vld [vmem:[%s402 + $0x41] sm:$0xff]
      %v1165 = vld [vmem:[%s402 + $0x51] sm:$0xff]
      %v1166 = vld [vmem:[%s402 + $0x61] sm:$0xff]
      %v1167 = vld [vmem:[%s402 + $0x71] sm:$0xff]
      %v1168 = vpack.c.bf16 %v1161, %v1160
      %v1169 = vpack.c.bf16 %v1163, %v1162
      %v1170 = vpack.c.bf16 %v1165, %v1164
      %v1171 = vpack.c.bf16 %v1167, %v1166
      %s1172 = scalar_lea.vmem %s4, 320
      %v1173 = vld [vmem:[%s1172] sm:$0xf]
      %v1174 = vld [vmem:[%s1172 + $0x4] sm:$0xf]
      %v1175 = vld [vmem:[%s1172 + $0x8] sm:$0xf]
      %v1176 = vld [vmem:[%s1172 + $0xc] sm:$0xf]
      %v1177 = vld [vmem:[%s1172 + $0x10] sm:$0xf]
      %v1178 = vld [vmem:[%s1172 + $0x14] sm:$0xf]
      %v1179 = vld [vmem:[%s1172 + $0x18] sm:$0xf]
      %v1180 = vld [vmem:[%s1172 + $0x1c] sm:$0xf]
      %v1181 = vld [vmem:[%s1172 + $0x20] sm:$0xf]
      %v1182 = vld [vmem:[%s1172 + $0x24] sm:$0xf]
      %v1183 = vld [vmem:[%s1172 + $0x28] sm:$0xf]
      %v1184 = vld [vmem:[%s1172 + $0x2c] sm:$0xf]
      %v1185 = vld [vmem:[%s1172 + $0x30] sm:$0xf]
      %v1186 = vld [vmem:[%s1172 + $0x34] sm:$0xf]
      %v1187 = vld [vmem:[%s1172 + $0x38] sm:$0xf]
      %v1188 = vld [vmem:[%s1172 + $0x3c] sm:$0xf]
      %v1205 = vunpack.c.l.b16 %v1173
      %v1206 = vunpack.c.l.b16 %v1174
      %v1207 = vunpack.c.l.b16 %v1175
      %v1208 = vunpack.c.l.b16 %v1176
      %v1209 = vunpack.c.l.b16 %v1177
      %v1210 = vunpack.c.l.b16 %v1178
      %v1211 = vunpack.c.l.b16 %v1179
      %v1212 = vunpack.c.l.b16 %v1180
      %v1213 = vunpack.c.l.b16 %v1181
      %v1214 = vunpack.c.l.b16 %v1182
      %v1215 = vunpack.c.l.b16 %v1183
      %v1216 = vunpack.c.l.b16 %v1184
      %v1217 = vunpack.c.l.b16 %v1185
      %v1218 = vunpack.c.l.b16 %v1186
      %v1219 = vunpack.c.l.b16 %v1187
      %v1220 = vunpack.c.l.b16 %v1188
      %v1221 = vpack.c.b16 %v1206, %v1205
      %v1222 = vpack.c.b16 %v1208, %v1207
      %v1223 = vpack.c.b16 %v1210, %v1209
      %v1224 = vpack.c.b16 %v1212, %v1211
      %v1225 = vpack.c.b16 %v1214, %v1213
      %v1226 = vpack.c.b16 %v1216, %v1215
      %v1227 = vpack.c.b16 %v1218, %v1217
      %v1228 = vpack.c.b16 %v1220, %v1219
      %1237 = vmatprep.subr.bf16.mxu0 0
      %1238 = vmatpush1.bf16.msra.mxu0 %v1221
      %1239 = vmatprep.subr.bf16.mxu0 0
      %1240 = vmatpush1.bf16.msra.mxu0 %v1222
      %1241 = vmatprep.subr.bf16.mxu0 0
      %1242 = vmatpush1.bf16.msra.mxu0 %v1223
      %1243 = vmatprep.subr.bf16.mxu0 0
      %1244 = vmatpush1.bf16.msra.mxu0 %v1224
      %1245 = vmatprep.subr.bf16.mxu0 0
      %1246 = vmatpush1.bf16.msra.mxu0 %v1225
      %1247 = vmatprep.subr.bf16.mxu0 0
      %1248 = vmatpush1.bf16.msra.mxu0 %v1226
      %1249 = vmatprep.subr.bf16.mxu0 0
      %1250 = vmatpush1.bf16.msra.mxu0 %v1227
      %1251 = vmatprep.subr.bf16.mxu0 0
      %1252 = vmatpush1.bf16.msra.mxu0 %v1228
      %1253 = vmatprep.subr.bf16.mxu0 0
      %1254 = vmatpush1.bf16.msra.mxu0 0
      %1255 = vmatprep.subr.bf16.mxu0 0
      %1256 = vmatpush1.bf16.msra.mxu0 0
      %1257 = vmatprep.subr.bf16.mxu0 0
      %1258 = vmatpush1.bf16.msra.mxu0 0
      %1259 = vmatprep.subr.bf16.mxu0 0
      %1260 = vmatpush1.bf16.msra.mxu0 0
      %1261 = vmatprep.subr.bf16.mxu0 0
      %1262 = vmatpush1.bf16.msra.mxu0 0
      %1263 = vmatprep.subr.bf16.mxu0 0
      %1264 = vmatpush1.bf16.msra.mxu0 0
      %1265 = vmatprep.subr.bf16.mxu0 0
      %1266 = vmatpush1.bf16.msra.mxu0 0
      %1267 = vmatprep.subr.bf16.mxu0 0
      %1268 = vmatpush1.bf16.msra.mxu0 0
      %1269 = vmatprep.mubr.bf16.mxu0 0
      %1270 = vmatmul.mubr.bf16.gmra.mrb[0].mxu0 %v1168
      %v1271 = vpop.f32.mrb[0].mxu0
      %v1272 = vadd.f32 0.0, %v1271
      %v1273 = vpop.f32.mrb[0].mxu0
      %v1274 = vpop.f32.mrb[0].mxu0
      %v1275 = vadd.f32 0.0, %v1274
      %v1276 = vpop.f32.mrb[0].mxu0
      %1277 = vmatprep.mubr.bf16.mxu0 0
      %1278 = vmatmul.mubr.bf16.gmra.mrb[0].mxu0 %v1169
      %v1279 = vpop.f32.mrb[0].mxu0
      %v1280 = vadd.f32 0.0, %v1279
      %v1281 = vpop.f32.mrb[0].mxu0
      %v1282 = vpop.f32.mrb[0].mxu0
      %v1283 = vadd.f32 0.0, %v1282
      %v1284 = vpop.f32.mrb[0].mxu0
      %1285 = vmatprep.mubr.bf16.mxu0 0
      %1286 = vmatmul.mubr.bf16.gmra.mrb[0].mxu0 %v1170
      %v1287 = vpop.f32.mrb[0].mxu0
      %v1288 = vadd.f32 0.0, %v1287
      %v1289 = vpop.f32.mrb[0].mxu0
      %v1290 = vpop.f32.mrb[0].mxu0
      %v1291 = vadd.f32 0.0, %v1290
      %v1292 = vpop.f32.mrb[0].mxu0
      %1293 = vmatprep.mubr.bf16.mxu0 0
      %1294 = vmatmul.mubr.bf16.gmra.mrb[0].mxu0 %v1171
      %v1295 = vpop.f32.mrb[0].mxu0
      %v1296 = vadd.f32 0.0, %v1295
      %v1297 = vpop.f32.mrb[0].mxu0
      %v1298 = vpop.f32.mrb[0].mxu0
      %v1299 = vadd.f32 0.0, %v1298
      %v1300 = vpop.f32.mrb[0].mxu0
      %1301 = vdwg.mxu0
      %v1302 = vadd.f32 %v1152, %v1272
      %v1303 = vadd.f32 %v1153, %v1275
      %v1304 = vadd.f32 %v1154, %v1280
      %v1305 = vadd.f32 %v1155, %v1283
      %v1306 = vadd.f32 %v1156, %v1288
      %v1307 = vadd.f32 %v1157, %v1291
      %v1308 = vadd.f32 %v1158, %v1296
      %v1309 = vadd.f32 %v1159, %v1299
      %s1310 = scalar_lea.vmem %s392, 16
      %v1311 = vld [vmem:[%s1310] sm:$0xff]
      %v1312 = vld [vmem:[%s1310 + $0x10] sm:$0xff]
      %v1313 = vld [vmem:[%s1310 + $0x20] sm:$0xff]
      %v1314 = vld [vmem:[%s1310 + $0x30] sm:$0xff]
      %v1315 = vld [vmem:[%s1310 + $0x40] sm:$0xff]
      %v1316 = vld [vmem:[%s1310 + $0x50] sm:$0xff]
      %v1317 = vld [vmem:[%s1310 + $0x60] sm:$0xff]
      %v1318 = vld [vmem:[%s1310 + $0x70] sm:$0xff]
      %v1319 = vpack.c.bf16 %v1312, %v1311
      %v1320 = vpack.c.bf16 %v1314, %v1313
      %v1321 = vpack.c.bf16 %v1316, %v1315
      %v1322 = vpack.c.bf16 %v1318, %v1317
      %s1323 = scalar_lea.vmem %s4, 384
      %v1324 = vld [vmem:[%s1323] sm:$0xf]
      %v1325 = vld [vmem:[%s1323 + $0x4] sm:$0xf]
      %v1326 = vld [vmem:[%s1323 + $0x8] sm:$0xf]
      %v1327 = vld [vmem:[%s1323 + $0xc] sm:$0xf]
      %v1328 = vld [vmem:[%s1323 + $0x10] sm:$0xf]
      %v1329 = vld [vmem:[%s1323 + $0x14] sm:$0xf]
      %v1330 = vld [vmem:[%s1323 + $0x18] sm:$0xf]
      %v1331 = vld [vmem:[%s1323 + $0x1c] sm:$0xf]
      %v1332 = vld [vmem:[%s1323 + $0x20] sm:$0xf]
      %v1333 = vld [vmem:[%s1323 + $0x24] sm:$0xf]
      %v1334 = vld [vmem:[%s1323 + $0x28] sm:$0xf]
      %v1335 = vld [vmem:[%s1323 + $0x2c] sm:$0xf]
      %v1336 = vld [vmem:[%s1323 + $0x30] sm:$0xf]
      %v1337 = vld [vmem:[%s1323 + $0x34] sm:$0xf]
      %v1338 = vld [vmem:[%s1323 + $0x38] sm:$0xf]
      %v1339 = vld [vmem:[%s1323 + $0x3c] sm:$0xf]
      %v1356 = vunpack.c.l.b16 %v1324
      %v1357 = vunpack.c.l.b16 %v1325
      %v1358 = vunpack.c.l.b16 %v1326
      %v1359 = vunpack.c.l.b16 %v1327
      %v1360 = vunpack.c.l.b16 %v1328
      %v1361 = vunpack.c.l.b16 %v1329
      %v1362 = vunpack.c.l.b16 %v1330
      %v1363 = vunpack.c.l.b16 %v1331
      %v1364 = vunpack.c.l.b16 %v1332
      %v1365 = vunpack.c.l.b16 %v1333
      %v1366 = vunpack.c.l.b16 %v1334
      %v1367 = vunpack.c.l.b16 %v1335
      %v1368 = vunpack.c.l.b16 %v1336
      %v1369 = vunpack.c.l.b16 %v1337
      %v1370 = vunpack.c.l.b16 %v1338
      %v1371 = vunpack.c.l.b16 %v1339
      %v1372 = vpack.c.b16 %v1357, %v1356
      %v1373 = vpack.c.b16 %v1359, %v1358
      %v1374 = vpack.c.b16 %v1361, %v1360
      %v1375 = vpack.c.b16 %v1363, %v1362
      %v1376 = vpack.c.b16 %v1365, %v1364
      %v1377 = vpack.c.b16 %v1367, %v1366
      %v1378 = vpack.c.b16 %v1369, %v1368
      %v1379 = vpack.c.b16 %v1371, %v1370
      %1388 = vmatprep.subr.bf16.mxu0 0
      %1389 = vmatpush1.bf16.msra.mxu0 %v1372
      %1390 = vmatprep.subr.bf16.mxu0 0
      %1391 = vmatpush1.bf16.msra.mxu0 %v1373
      %1392 = vmatprep.subr.bf16.mxu0 0
      %1393 = vmatpush1.bf16.msra.mxu0 %v1374
      %1394 = vmatprep.subr.bf16.mxu0 0
      %1395 = vmatpush1.bf16.msra.mxu0 %v1375
      %1396 = vmatprep.subr.bf16.mxu0 0
      %1397 = vmatpush1.bf16.msra.mxu0 %v1376
      %1398 = vmatprep.subr.bf16.mxu0 0
      %1399 = vmatpush1.bf16.msra.mxu0 %v1377
      %1400 = vmatprep.subr.bf16.mxu0 0
      %1401 = vmatpush1.bf16.msra.mxu0 %v1378
      %1402 = vmatprep.subr.bf16.mxu0 0
      %1403 = vmatpush1.bf16.msra.mxu0 %v1379
      %1404 = vmatprep.subr.bf16.mxu0 0
      %1405 = vmatpush1.bf16.msra.mxu0 0
      %1406 = vmatprep.subr.bf16.mxu0 0
      %1407 = vmatpush1.bf16.msra.mxu0 0
      %1408 = vmatprep.subr.bf16.mxu0 0
      %1409 = vmatpush1.bf16.msra.mxu0 0
      %1410 = vmatprep.subr.bf16.mxu0 0
      %1411 = vmatpush1.bf16.msra.mxu0 0
      %1412 = vmatprep.subr.bf16.mxu0 0
      %1413 = vmatpush1.bf16.msra.mxu0 0
      %1414 = vmatprep.subr.bf16.mxu0 0
      %1415 = vmatpush1.bf16.msra.mxu0 0
      %1416 = vmatprep.subr.bf16.mxu0 0
      %1417 = vmatpush1.bf16.msra.mxu0 0
      %1418 = vmatprep.subr.bf16.mxu0 0
      %1419 = vmatpush1.bf16.msra.mxu0 0
      %1420 = vmatprep.mubr.bf16.mxu0 0
      %1421 = vmatmul.mubr.bf16.gmra.mrb[0].mxu0 %v1319
      %v1422 = vpop.f32.mrb[0].mxu0
      %v1423 = vadd.f32 0.0, %v1422
      %v1424 = vpop.f32.mrb[0].mxu0
      %v1425 = vpop.f32.mrb[0].mxu0
      %v1426 = vadd.f32 0.0, %v1425
      %v1427 = vpop.f32.mrb[0].mxu0
      %1428 = vmatprep.mubr.bf16.mxu0 0
      %1429 = vmatmul.mubr.bf16.gmra.mrb[0].mxu0 %v1320
      %v1430 = vpop.f32.mrb[0].mxu0
      %v1431 = vadd.f32 0.0, %v1430
      %v1432 = vpop.f32.mrb[0].mxu0
      %v1433 = vpop.f32.mrb[0].mxu0
      %v1434 = vadd.f32 0.0, %v1433
      %v1435 = vpop.f32.mrb[0].mxu0
      %1436 = vmatprep.mubr.bf16.mxu0 0
      %1437 = vmatmul.mubr.bf16.gmra.mrb[0].mxu0 %v1321
      %v1438 = vpop.f32.mrb[0].mxu0
      %v1439 = vadd.f32 0.0, %v1438
      %v1440 = vpop.f32.mrb[0].mxu0
      %v1441 = vpop.f32.mrb[0].mxu0
      %v1442 = vadd.f32 0.0, %v1441
      %v1443 = vpop.f32.mrb[0].mxu0
      %1444 = vmatprep.mubr.bf16.mxu0 0
      %1445 = vmatmul.mubr.bf16.gmra.mrb[0].mxu0 %v1322
      %v1446 = vpop.f32.mrb[0].mxu0
      %v1447 = vadd.f32 0.0, %v1446
      %v1448 = vpop.f32.mrb[0].mxu0
      %v1449 = vpop.f32.mrb[0].mxu0
      %v1450 = vadd.f32 0.0, %v1449
      %v1451 = vpop.f32.mrb[0].mxu0
      %1452 = vdwg.mxu0
      %v1453 = vadd.f32 %v1302, %v1423
      %v1454 = vadd.f32 %v1303, %v1426
      %v1455 = vadd.f32 %v1304, %v1431
      %v1456 = vadd.f32 %v1305, %v1434
      %v1457 = vadd.f32 %v1306, %v1439
      %v1458 = vadd.f32 %v1307, %v1442
      %v1459 = vadd.f32 %v1308, %v1447
      %v1460 = vadd.f32 %v1309, %v1450
      %s1461 = scalar_lea.vmem %s397, 16
      %v1462 = vld [vmem:[%s1461] sm:$0xff]
      %v1463 = vld [vmem:[%s1461 + $0x10] sm:$0xff]
      %v1464 = vld [vmem:[%s1461 + $0x20] sm:$0xff]
      %v1465 = vld [vmem:[%s1461 + $0x30] sm:$0xff]
      %v1466 = vld [vmem:[%s1461 + $0x40] sm:$0xff]
      %v1467 = vld [vmem:[%s1461 + $0x50] sm:$0xff]
      %v1468 = vld [vmem:[%s1461 + $0x60] sm:$0xff]
      %v1469 = vld [vmem:[%s1461 + $0x70] sm:$0xff]
      %v1470 = vpack.c.bf16 %v1463, %v1462
      %v1471 = vpack.c.bf16 %v1465, %v1464
      %v1472 = vpack.c.bf16 %v1467, %v1466
      %v1473 = vpack.c.bf16 %v1469, %v1468
      %s1474 = scalar_lea.vmem %s4, 448
      %v1475 = vld [vmem:[%s1474] sm:$0xf]
      %v1476 = vld [vmem:[%s1474 + $0x4] sm:$0xf]
      %v1477 = vld [vmem:[%s1474 + $0x8] sm:$0xf]
      %v1478 = vld [vmem:[%s1474 + $0xc] sm:$0xf]
      %v1479 = vld [vmem:[%s1474 + $0x10] sm:$0xf]
      %v1480 = vld [vmem:[%s1474 + $0x14] sm:$0xf]
      %v1481 = vld [vmem:[%s1474 + $0x18] sm:$0xf]
      %v1482 = vld [vmem:[%s1474 + $0x1c] sm:$0xf]
      %v1483 = vld [vmem:[%s1474 + $0x20] sm:$0xf]
      %v1484 = vld [vmem:[%s1474 + $0x24] sm:$0xf]
      %v1485 = vld [vmem:[%s1474 + $0x28] sm:$0xf]
      %v1486 = vld [vmem:[%s1474 + $0x2c] sm:$0xf]
      %v1487 = vld [vmem:[%s1474 + $0x30] sm:$0xf]
      %v1488 = vld [vmem:[%s1474 + $0x34] sm:$0xf]
      %v1489 = vld [vmem:[%s1474 + $0x38] sm:$0xf]
      %v1490 = vld [vmem:[%s1474 + $0x3c] sm:$0xf]
      %v1507 = vunpack.c.l.b16 %v1475
      %v1508 = vunpack.c.l.b16 %v1476
      %v1509 = vunpack.c.l.b16 %v1477
      %v1510 = vunpack.c.l.b16 %v1478
      %v1511 = vunpack.c.l.b16 %v1479
      %v1512 = vunpack.c.l.b16 %v1480
      %v1513 = vunpack.c.l.b16 %v1481
      %v1514 = vunpack.c.l.b16 %v1482
      %v1515 = vunpack.c.l.b16 %v1483
      %v1516 = vunpack.c.l.b16 %v1484
      %v1517 = vunpack.c.l.b16 %v1485
      %v1518 = vunpack.c.l.b16 %v1486
      %v1519 = vunpack.c.l.b16 %v1487
      %v1520 = vunpack.c.l.b16 %v1488
      %v1521 = vunpack.c.l.b16 %v1489
      %v1522 = vunpack.c.l.b16 %v1490
      %v1523 = vpack.c.b16 %v1508, %v1507
      %v1524 = vpack.c.b16 %v1510, %v1509
      %v1525 = vpack.c.b16 %v1512, %v1511
      %v1526 = vpack.c.b16 %v1514, %v1513
      %v1527 = vpack.c.b16 %v1516, %v1515
      %v1528 = vpack.c.b16 %v1518, %v1517
      %v1529 = vpack.c.b16 %v1520, %v1519
      %v1530 = vpack.c.b16 %v1522, %v1521
      %1539 = vmatprep.subr.bf16.mxu0 0
      %1540 = vmatpush1.bf16.msra.mxu0 %v1523
      %1541 = vmatprep.subr.bf16.mxu0 0
      %1542 = vmatpush1.bf16.msra.mxu0 %v1524
      %1543 = vmatprep.subr.bf16.mxu0 0
      %1544 = vmatpush1.bf16.msra.mxu0 %v1525
      %1545 = vmatprep.subr.bf16.mxu0 0
      %1546 = vmatpush1.bf16.msra.mxu0 %v1526
      %1547 = vmatprep.subr.bf16.mxu0 0
      %1548 = vmatpush1.bf16.msra.mxu0 %v1527
      %1549 = vmatprep.subr.bf16.mxu0 0
      %1550 = vmatpush1.bf16.msra.mxu0 %v1528
      %1551 = vmatprep.subr.bf16.mxu0 0
      %1552 = vmatpush1.bf16.msra.mxu0 %v1529
      %1553 = vmatprep.subr.bf16.mxu0 0
      %1554 = vmatpush1.bf16.msra.mxu0 %v1530
      %1555 = vmatprep.subr.bf16.mxu0 0
      %1556 = vmatpush1.bf16.msra.mxu0 0
      %1557 = vmatprep.subr.bf16.mxu0 0
      %1558 = vmatpush1.bf16.msra.mxu0 0
      %1559 = vmatprep.subr.bf16.mxu0 0
      %1560 = vmatpush1.bf16.msra.mxu0 0
      %1561 = vmatprep.subr.bf16.mxu0 0
      %1562 = vmatpush1.bf16.msra.mxu0 0
      %1563 = vmatprep.subr.bf16.mxu0 0
      %1564 = vmatpush1.bf16.msra.mxu0 0
      %1565 = vmatprep.subr.bf16.mxu0 0
      %1566 = vmatpush1.bf16.msra.mxu0 0
      %1567 = vmatprep.subr.bf16.mxu0 0
      %1568 = vmatpush1.bf16.msra.mxu0 0
      %1569 = vmatprep.subr.bf16.mxu0 0
      %1570 = vmatpush1.bf16.msra.mxu0 0
      %1571 = vmatprep.mubr.bf16.mxu0 0
      %1572 = vmatmul.mubr.bf16.gmra.mrb[0].mxu0 %v1470
      %v1573 = vpop.f32.mrb[0].mxu0
      %v1574 = vadd.f32 0.0, %v1573
      %v1575 = vpop.f32.mrb[0].mxu0
      %v1576 = vpop.f32.mrb[0].mxu0
      %v1577 = vadd.f32 0.0, %v1576
      %v1578 = vpop.f32.mrb[0].mxu0
      %1579 = vmatprep.mubr.bf16.mxu0 0
      %1580 = vmatmul.mubr.bf16.gmra.mrb[0].mxu0 %v1471
      %v1581 = vpop.f32.mrb[0].mxu0
      %v1582 = vadd.f32 0.0, %v1581
      %v1583 = vpop.f32.mrb[0].mxu0
      %v1584 = vpop.f32.mrb[0].mxu0
      %v1585 = vadd.f32 0.0, %v1584
      %v1586 = vpop.f32.mrb[0].mxu0
      %1587 = vmatprep.mubr.bf16.mxu0 0
      %1588 = vmatmul.mubr.bf16.gmra.mrb[0].mxu0 %v1472
      %v1589 = vpop.f32.mrb[0].mxu0
      %v1590 = vadd.f32 0.0, %v1589
      %v1591 = vpop.f32.mrb[0].mxu0
      %v1592 = vpop.f32.mrb[0].mxu0
      %v1593 = vadd.f32 0.0, %v1592
      %v1594 = vpop.f32.mrb[0].mxu0
      %1595 = vmatprep.mubr.bf16.mxu0 0
      %1596 = vmatmul.mubr.bf16.gmra.mrb[0].mxu0 %v1473
      %v1597 = vpop.f32.mrb[0].mxu0
      %v1598 = vadd.f32 0.0, %v1597
      %v1599 = vpop.f32.mrb[0].mxu0
      %v1600 = vpop.f32.mrb[0].mxu0
      %v1601 = vadd.f32 0.0, %v1600
      %v1602 = vpop.f32.mrb[0].mxu0
      %1603 = vdwg.mxu0
      %v1604 = vadd.f32 %v1453, %v1574
      %v1605 = vadd.f32 %v1454, %v1577
      %v1606 = vadd.f32 %v1455, %v1582
      %v1607 = vadd.f32 %v1456, %v1585
      %v1608 = vadd.f32 %v1457, %v1590
      %v1609 = vadd.f32 %v1458, %v1593
      %v1610 = vadd.f32 %v1459, %v1598
      %v1611 = vadd.f32 %v1460, %v1601
      %v1612 = vld [vmem:[%s1310 + $0x1] sm:$0xff]
      %v1613 = vld [vmem:[%s1310 + $0x11] sm:$0xff]
      %v1614 = vld [vmem:[%s1310 + $0x21] sm:$0xff]
      %v1615 = vld [vmem:[%s1310 + $0x31] sm:$0xff]
      %v1616 = vld [vmem:[%s1310 + $0x41] sm:$0xff]
      %v1617 = vld [vmem:[%s1310 + $0x51] sm:$0xff]
      %v1618 = vld [vmem:[%s1310 + $0x61] sm:$0xff]
      %v1619 = vld [vmem:[%s1310 + $0x71] sm:$0xff]
      %v1620 = vpack.c.bf16 %v1613, %v1612
      %v1621 = vpack.c.bf16 %v1615, %v1614
      %v1622 = vpack.c.bf16 %v1617, %v1616
      %v1623 = vpack.c.bf16 %v1619, %v1618
      %s1624 = scalar_lea.vmem %s4, 512
      %v1625 = vld [vmem:[%s1624] sm:$0xf]
      %v1626 = vld [vmem:[%s1624 + $0x4] sm:$0xf]
      %v1627 = vld [vmem:[%s1624 + $0x8] sm:$0xf]
      %v1628 = vld [vmem:[%s1624 + $0xc] sm:$0xf]
      %v1629 = vld [vmem:[%s1624 + $0x10] sm:$0xf]
      %v1630 = vld [vmem:[%s1624 + $0x14] sm:$0xf]
      %v1631 = vld [vmem:[%s1624 + $0x18] sm:$0xf]
      %v1632 = vld [vmem:[%s1624 + $0x1c] sm:$0xf]
      %v1633 = vld [vmem:[%s1624 + $0x20] sm:$0xf]
      %v1634 = vld [vmem:[%s1624 + $0x24] sm:$0xf]
      %v1635 = vld [vmem:[%s1624 + $0x28] sm:$0xf]
      %v1636 = vld [vmem:[%s1624 + $0x2c] sm:$0xf]
      %v1637 = vld [vmem:[%s1624 + $0x30] sm:$0xf]
      %v1638 = vld [vmem:[%s1624 + $0x34] sm:$0xf]
      %v1639 = vld [vmem:[%s1624 + $0x38] sm:$0xf]
      %v1640 = vld [vmem:[%s1624 + $0x3c] sm:$0xf]
      %v1657 = vunpack.c.l.b16 %v1625
      %v1658 = vunpack.c.l.b16 %v1626
      %v1659 = vunpack.c.l.b16 %v1627
      %v1660 = vunpack.c.l.b16 %v1628
      %v1661 = vunpack.c.l.b16 %v1629
      %v1662 = vunpack.c.l.b16 %v1630
      %v1663 = vunpack.c.l.b16 %v1631
      %v1664 = vunpack.c.l.b16 %v1632
      %v1665 = vunpack.c.l.b16 %v1633
      %v1666 = vunpack.c.l.b16 %v1634
      %v1667 = vunpack.c.l.b16 %v1635
      %v1668 = vunpack.c.l.b16 %v1636
      %v1669 = vunpack.c.l.b16 %v1637
      %v1670 = vunpack.c.l.b16 %v1638
      %v1671 = vunpack.c.l.b16 %v1639
      %v1672 = vunpack.c.l.b16 %v1640
      %v1673 = vpack.c.b16 %v1658, %v1657
      %v1674 = vpack.c.b16 %v1660, %v1659
      %v1675 = vpack.c.b16 %v1662, %v1661
      %v1676 = vpack.c.b16 %v1664, %v1663
      %v1677 = vpack.c.b16 %v1666, %v1665
      %v1678 = vpack.c.b16 %v1668, %v1667
      %v1679 = vpack.c.b16 %v1670, %v1669
      %v1680 = vpack.c.b16 %v1672, %v1671
      %1689 = vmatprep.subr.bf16.mxu0 0
      %1690 = vmatpush1.bf16.msra.mxu0 %v1673
      %1691 = vmatprep.subr.bf16.mxu0 0
      %1692 = vmatpush1.bf16.msra.mxu0 %v1674
      %1693 = vmatprep.subr.bf16.mxu0 0
      %1694 = vmatpush1.bf16.msra.mxu0 %v1675
      %1695 = vmatprep.subr.bf16.mxu0 0
      %1696 = vmatpush1.bf16.msra.mxu0 %v1676
      %1697 = vmatprep.subr.bf16.mxu0 0
      %1698 = vmatpush1.bf16.msra.mxu0 %v1677
      %1699 = vmatprep.subr.bf16.mxu0 0
      %1700 = vmatpush1.bf16.msra.mxu0 %v1678
      %1701 = vmatprep.subr.bf16.mxu0 0
      %1702 = vmatpush1.bf16.msra.mxu0 %v1679
      %1703 = vmatprep.subr.bf16.mxu0 0
      %1704 = vmatpush1.bf16.msra.mxu0 %v1680
      %1705 = vmatprep.subr.bf16.mxu0 0
      %1706 = vmatpush1.bf16.msra.mxu0 0
      %1707 = vmatprep.subr.bf16.mxu0 0
      %1708 = vmatpush1.bf16.msra.mxu0 0
      %1709 = vmatprep.subr.bf16.mxu0 0
      %1710 = vmatpush1.bf16.msra.mxu0 0
      %1711 = vmatprep.subr.bf16.mxu0 0
      %1712 = vmatpush1.bf16.msra.mxu0 0
      %1713 = vmatprep.subr.bf16.mxu0 0
      %1714 = vmatpush1.bf16.msra.mxu0 0
      %1715 = vmatprep.subr.bf16.mxu0 0
      %1716 = vmatpush1.bf16.msra.mxu0 0
      %1717 = vmatprep.subr.bf16.mxu0 0
      %1718 = vmatpush1.bf16.msra.mxu0 0
      %1719 = vmatprep.subr.bf16.mxu0 0
      %1720 = vmatpush1.bf16.msra.mxu0 0
      %1721 = vmatprep.mubr.bf16.mxu0 0
      %1722 = vmatmul.mubr.bf16.gmra.mrb[0].mxu0 %v1620
      %v1723 = vpop.f32.mrb[0].mxu0
      %v1724 = vadd.f32 0.0, %v1723
      %v1725 = vpop.f32.mrb[0].mxu0
      %v1726 = vpop.f32.mrb[0].mxu0
      %v1727 = vadd.f32 0.0, %v1726
      %v1728 = vpop.f32.mrb[0].mxu0
      %1729 = vmatprep.mubr.bf16.mxu0 0
      %1730 = vmatmul.mubr.bf16.gmra.mrb[0].mxu0 %v1621
      %v1731 = vpop.f32.mrb[0].mxu0
      %v1732 = vadd.f32 0.0, %v1731
      %v1733 = vpop.f32.mrb[0].mxu0
      %v1734 = vpop.f32.mrb[0].mxu0
      %v1735 = vadd.f32 0.0, %v1734
      %v1736 = vpop.f32.mrb[0].mxu0
      %1737 = vmatprep.mubr.bf16.mxu0 0
      %1738 = vmatmul.mubr.bf16.gmra.mrb[0].mxu0 %v1622
      %v1739 = vpop.f32.mrb[0].mxu0
      %v1740 = vadd.f32 0.0, %v1739
      %v1741 = vpop.f32.mrb[0].mxu0
      %v1742 = vpop.f32.mrb[0].mxu0
      %v1743 = vadd.f32 0.0, %v1742
      %v1744 = vpop.f32.mrb[0].mxu0
      %1745 = vmatprep.mubr.bf16.mxu0 0
      %1746 = vmatmul.mubr.bf16.gmra.mrb[0].mxu0 %v1623
      %v1747 = vpop.f32.mrb[0].mxu0
      %v1748 = vadd.f32 0.0, %v1747
      %v1749 = vpop.f32.mrb[0].mxu0
      %v1750 = vpop.f32.mrb[0].mxu0
      %v1751 = vadd.f32 0.0, %v1750
      %v1752 = vpop.f32.mrb[0].mxu0
      %1753 = vdwg.mxu0
      %v1754 = vadd.f32 %v1604, %v1724
      %v1755 = vadd.f32 %v1605, %v1727
      %v1756 = vadd.f32 %v1606, %v1732
      %v1757 = vadd.f32 %v1607, %v1735
      %v1758 = vadd.f32 %v1608, %v1740
      %v1759 = vadd.f32 %v1609, %v1743
      %v1760 = vadd.f32 %v1610, %v1748
      %v1761 = vadd.f32 %v1611, %v1751
      %1762 = vst [vmem:[%s412] sm:$0xff] %v1754
      %1763 = vst [vmem:[%s412 + $0x8] sm:$0xff] %v1755
      %1764 = vst [vmem:[%s412 + $0x10] sm:$0xff] %v1756
      %1765 = vst [vmem:[%s412 + $0x18] sm:$0xff] %v1757
      %1766 = vst [vmem:[%s412 + $0x20] sm:$0xff] %v1758
      %1767 = vst [vmem:[%s412 + $0x28] sm:$0xff] %v1759
      %1768 = vst [vmem:[%s412 + $0x30] sm:$0xff] %v1760
      %1769 = vst [vmem:[%s412 + $0x38] sm:$0xff] %v1761
      %v1770 = vadd.f32 %v1754, %v1755
      %v1771 = vadd.f32 %v1770, %v1756
      %v1772 = vadd.f32 %v1771, %v1757
      %v1773 = vadd.f32 %v1772, %v1758
      %v1774 = vadd.f32 %v1773, %v1759
      %v1775 = vadd.f32 %v1774, %v1760
      %v1776 = vadd.f32 %v1775, %v1761
      %v1777 = vrot.slane %v1776, 4
      %v1778 = vadd.f32 %v1776, %v1777
      %v1779 = vrot.slane %v1778, 2
      %v1780 = vadd.f32 %v1778, %v1779
      %v1781 = vrot.slane %v1780, 1
      %v1782 = vadd.f32 %v1780, %v1781
      %v1783 = vmul.f32 %v1754, %v1754
      %v1784 = vmul.f32 %v1755, %v1755
      %v1785 = vmul.f32 %v1756, %v1756
      %v1786 = vmul.f32 %v1757, %v1757
      %v1787 = vmul.f32 %v1758, %v1758
      %v1788 = vmul.f32 %v1759, %v1759
      %v1789 = vmul.f32 %v1760, %v1760
      %v1790 = vmul.f32 %v1761, %v1761
      %v1791 = vadd.f32 %v1783, %v1784
      %v1792 = vadd.f32 %v1791, %v1785
      %v1793 = vadd.f32 %v1792, %v1786
      %v1794 = vadd.f32 %v1793, %v1787
      %v1795 = vadd.f32 %v1794, %v1788
      %v1796 = vadd.f32 %v1795, %v1789
      %v1797 = vadd.f32 %v1796, %v1790
      %v1798 = vrot.slane %v1797, 4
      %v1799 = vadd.f32 %v1797, %v1798
      %v1800 = vrot.slane %v1799, 2
      %v1801 = vadd.f32 %v1799, %v1800
      %v1802 = vrot.slane %v1801, 1
      %v1803 = vadd.f32 %v1801, %v1802
      %vm1804 = vcmask 1040384
      %v1805 = vsel %vm1804, %v1782, %v1803
      %1806 = vst [vmem:[%s416] sm:$0x3] %v1805
      %v1807 = vld [vmem:[%s5] sm:$0xf]
      %v1808 = vld [vmem:[%s5 + $0x4] sm:$0xf]
      %v1809 = vld [vmem:[%s5 + $0x8] sm:$0xf]
      %v1810 = vld [vmem:[%s5 + $0xc] sm:$0xf]
      %v1811 = vld [vmem:[%s5 + $0x10] sm:$0xf]
      %v1812 = vld [vmem:[%s5 + $0x14] sm:$0xf]
      %v1813 = vld [vmem:[%s5 + $0x18] sm:$0xf]
      %v1814 = vld [vmem:[%s5 + $0x1c] sm:$0xf]
      %v1815 = vld [vmem:[%s5 + $0x20] sm:$0xf]
      %v1816 = vld [vmem:[%s5 + $0x24] sm:$0xf]
      %v1817 = vld [vmem:[%s5 + $0x28] sm:$0xf]
      %v1818 = vld [vmem:[%s5 + $0x2c] sm:$0xf]
      %v1819 = vld [vmem:[%s5 + $0x30] sm:$0xf]
      %v1820 = vld [vmem:[%s5 + $0x34] sm:$0xf]
      %v1821 = vld [vmem:[%s5 + $0x38] sm:$0xf]
      %v1822 = vld [vmem:[%s5 + $0x3c] sm:$0xf]
      %v1839 = vunpack.c.l.b16 %v1807
      %v1840 = vunpack.c.l.b16 %v1808
      %v1841 = vunpack.c.l.b16 %v1809
      %v1842 = vunpack.c.l.b16 %v1810
      %v1843 = vunpack.c.l.b16 %v1811
      %v1844 = vunpack.c.l.b16 %v1812
      %v1845 = vunpack.c.l.b16 %v1813
      %v1846 = vunpack.c.l.b16 %v1814
      %v1847 = vunpack.c.l.b16 %v1815
      %v1848 = vunpack.c.l.b16 %v1816
      %v1849 = vunpack.c.l.b16 %v1817
      %v1850 = vunpack.c.l.b16 %v1818
      %v1851 = vunpack.c.l.b16 %v1819
      %v1852 = vunpack.c.l.b16 %v1820
      %v1853 = vunpack.c.l.b16 %v1821
      %v1854 = vunpack.c.l.b16 %v1822
      %v1855 = vpack.c.b16 %v1840, %v1839
      %v1856 = vpack.c.b16 %v1842, %v1841
      %v1857 = vpack.c.b16 %v1844, %v1843
      %v1858 = vpack.c.b16 %v1846, %v1845
      %v1859 = vpack.c.b16 %v1848, %v1847
      %v1860 = vpack.c.b16 %v1850, %v1849
      %v1861 = vpack.c.b16 %v1852, %v1851
      %v1862 = vpack.c.b16 %v1854, %v1853
      %1871 = vmatprep.subr.bf16.mxu0 0
      %1872 = vmatpush1.bf16.msra.mxu0 %v1855
      %1873 = vmatprep.subr.bf16.mxu0 0
      %1874 = vmatpush1.bf16.msra.mxu0 %v1856
      %1875 = vmatprep.subr.bf16.mxu0 0
      %1876 = vmatpush1.bf16.msra.mxu0 %v1857
      %1877 = vmatprep.subr.bf16.mxu0 0
      %1878 = vmatpush1.bf16.msra.mxu0 %v1858
      %1879 = vmatprep.subr.bf16.mxu0 0
      %1880 = vmatpush1.bf16.msra.mxu0 %v1859
      %1881 = vmatprep.subr.bf16.mxu0 0
      %1882 = vmatpush1.bf16.msra.mxu0 %v1860
      %1883 = vmatprep.subr.bf16.mxu0 0
      %1884 = vmatpush1.bf16.msra.mxu0 %v1861
      %1885 = vmatprep.subr.bf16.mxu0 0
      %1886 = vmatpush1.bf16.msra.mxu0 %v1862
      %1887 = vmatprep.subr.bf16.mxu0 0
      %1888 = vmatpush1.bf16.msra.mxu0 0
      %1889 = vmatprep.subr.bf16.mxu0 0
      %1890 = vmatpush1.bf16.msra.mxu0 0
      %1891 = vmatprep.subr.bf16.mxu0 0
      %1892 = vmatpush1.bf16.msra.mxu0 0
      %1893 = vmatprep.subr.bf16.mxu0 0
      %1894 = vmatpush1.bf16.msra.mxu0 0
      %1895 = vmatprep.subr.bf16.mxu0 0
      %1896 = vmatpush1.bf16.msra.mxu0 0
      %1897 = vmatprep.subr.bf16.mxu0 0
      %1898 = vmatpush1.bf16.msra.mxu0 0
      %1899 = vmatprep.subr.bf16.mxu0 0
      %1900 = vmatpush1.bf16.msra.mxu0 0
      %1901 = vmatprep.subr.bf16.mxu0 0
      %1902 = vmatpush1.bf16.msra.mxu0 0
      %1903 = vmatprep.mubr.bf16.mxu0 0
      %1904 = vmatmul.mubr.bf16.gmra.mrb[0].mxu0 %v1018
      %v1905 = vpop.f32.mrb[0].mxu0
      %v1906 = vadd.f32 0.0, %v1905
      %v1907 = vpop.f32.mrb[0].mxu0
      %v1908 = vpop.f32.mrb[0].mxu0
      %v1909 = vadd.f32 0.0, %v1908
      %v1910 = vpop.f32.mrb[0].mxu0
      %1911 = vmatprep.mubr.bf16.mxu0 0
      %1912 = vmatmul.mubr.bf16.gmra.mrb[0].mxu0 %v1019
      %v1913 = vpop.f32.mrb[0].mxu0
      %v1914 = vadd.f32 0.0, %v1913
      %v1915 = vpop.f32.mrb[0].mxu0
      %v1916 = vpop.f32.mrb[0].mxu0
      %v1917 = vadd.f32 0.0, %v1916
      %v1918 = vpop.f32.mrb[0].mxu0
      %1919 = vmatprep.mubr.bf16.mxu0 0
      %1920 = vmatmul.mubr.bf16.gmra.mrb[0].mxu0 %v1020
      %v1921 = vpop.f32.mrb[0].mxu0
      %v1922 = vadd.f32 0.0, %v1921
      %v1923 = vpop.f32.mrb[0].mxu0
      %v1924 = vpop.f32.mrb[0].mxu0
      %v1925 = vadd.f32 0.0, %v1924
      %v1926 = vpop.f32.mrb[0].mxu0
      %1927 = vmatprep.mubr.bf16.mxu0 0
      %1928 = vmatmul.mubr.bf16.gmra.mrb[0].mxu0 %v1021
      %v1929 = vpop.f32.mrb[0].mxu0
      %v1930 = vadd.f32 0.0, %v1929
      %v1931 = vpop.f32.mrb[0].mxu0
      %v1932 = vpop.f32.mrb[0].mxu0
      %v1933 = vadd.f32 0.0, %v1932
      %v1934 = vpop.f32.mrb[0].mxu0
      %1935 = vdwg.mxu0
      %1936 = vst [vmem:[%s421] sm:$0xff] %v1906
      %1937 = vst [vmem:[%s421 + $0x8] sm:$0xff] %v1909
      %1938 = vst [vmem:[%s421 + $0x10] sm:$0xff] %v1914
      %1939 = vst [vmem:[%s421 + $0x18] sm:$0xff] %v1917
      %1940 = vst [vmem:[%s421 + $0x20] sm:$0xff] %v1922
      %1941 = vst [vmem:[%s421 + $0x28] sm:$0xff] %v1925
      %1942 = vst [vmem:[%s421 + $0x30] sm:$0xff] %v1930
      %1943 = vst [vmem:[%s421 + $0x38] sm:$0xff] %v1933
      %v1944 = vadd.f32 %v1906, %v1909
      %v1945 = vadd.f32 %v1944, %v1914
      %v1946 = vadd.f32 %v1945, %v1917
      %v1947 = vadd.f32 %v1946, %v1922
      %v1948 = vadd.f32 %v1947, %v1925
      %v1949 = vadd.f32 %v1948, %v1930
      %v1950 = vadd.f32 %v1949, %v1933
      %v1951 = vrot.slane %v1950, 4
      %v1952 = vadd.f32 %v1950, %v1951
      %v1953 = vrot.slane %v1952, 2
      %v1954 = vadd.f32 %v1952, %v1953
      %v1955 = vrot.slane %v1954, 1
      %v1956 = vadd.f32 %v1954, %v1955
      %v1957 = vmul.f32 %v1906, %v1906
      %v1958 = vmul.f32 %v1909, %v1909
      %v1959 = vmul.f32 %v1914, %v1914
      %v1960 = vmul.f32 %v1917, %v1917
      %v1961 = vmul.f32 %v1922, %v1922
      %v1962 = vmul.f32 %v1925, %v1925
      %v1963 = vmul.f32 %v1930, %v1930
      %v1964 = vmul.f32 %v1933, %v1933
      %v1965 = vadd.f32 %v1957, %v1958
      %v1966 = vadd.f32 %v1965, %v1959
      %v1967 = vadd.f32 %v1966, %v1960
      %v1968 = vadd.f32 %v1967, %v1961
      %v1969 = vadd.f32 %v1968, %v1962
      %v1970 = vadd.f32 %v1969, %v1963
      %v1971 = vadd.f32 %v1970, %v1964
      %v1972 = vrot.slane %v1971, 4
      %v1973 = vadd.f32 %v1971, %v1972
      %v1974 = vrot.slane %v1973, 2
      %v1975 = vadd.f32 %v1973, %v1974
      %v1976 = vrot.slane %v1975, 1
      %v1977 = vadd.f32 %v1975, %v1976
      %v1978 = vsel %vm1804, %v1956, %v1977
      %1979 = vst [vmem:[%s425] sm:$0x3] %v1978
      %p1980 = scmp.lt.s32.totalorder %s21, 1
      %s1981 = scalar_select %p1980, %s21, 1
      %s1982 = smul.addr %s1981, 8
      %s1983 = smul.addr %s1982, 8
      %s1984 = scalar_lea.vmem %s6, %s1983
      %p1985 = scmp.lt.s32.totalorder %s21, 1
      %s1986 = scalar_select %p1985, %s21, 1
      %s1987 = smul.addr %s1986, 2
      %s1988 = scalar_lea.vmem %s7, %s1987
      %p1989 = scmp.lt.s32.totalorder %s21, 1
      %s1990 = scalar_select %p1989, %s21, 1
      %s1991 = smul.addr %s1990, 8
      %s1992 = smul.addr %s1991, 8
      %s1993 = scalar_lea.vmem %s8, %s1992
      %p1994 = scmp.lt.s32.totalorder %s21, 1
      %s1995 = scalar_select %p1994, %s21, 1
      %s1996 = smul.addr %s1995, 2
      %s1997 = scalar_lea.vmem %s9, %s1996
      // Predicated region
      $region45: #{residual_block.4} parent=43 // pred_check
        %p1998 = pneg %p185
      $region46: #{residual_block.4} parent=43 // pred_check_branch
        %2000 = sbr.rel (%p1998) target = $region48
      $region47: #{residual_block.4} parent=43 // pred_region
        _
      $region48: #{residual_block.4} parent=43 // pred_fallthru
        _
      // Predicated region
      $region49: #{residual_block.4} parent=43 // pred_check
        %p2001 = pneg %p211
      $region50: #{residual_block.4} parent=43 // pred_check_branch
        %2003 = sbr.rel (%p2001) target = $region52
      $region51: #{residual_block.4} parent=43 // pred_region
        _
      $region52: #{residual_block.4} parent=43 // pred_fallthru
        _
      // Predicated region
      $region53: #{residual_block.4} parent=43 // pred_check
        %p2004 = pneg %p237
      $region54: #{residual_block.4} parent=43 // pred_check_branch
        %2006 = sbr.rel (%p2004) target = $region56
      $region55: #{residual_block.4} parent=43 // pred_region
        _
      $region56: #{residual_block.4} parent=43 // pred_fallthru
        _
      // Predicated region
      $region57: #{residual_block.4} parent=43 // pred_check
        %p2007 = pneg %p263
      $region58: #{residual_block.4} parent=43 // pred_check_branch
        %2009 = sbr.rel (%p2007) target = $region60
      $region59: #{residual_block.4} parent=43 // pred_region
        _
      $region60: #{residual_block.4} parent=43 // pred_fallthru
        _
    $region44: #{residual_block.4} parent=5 // pred_fallthru
      _
    %p2010 = scmp.le.s32.totalorder 2, %s16
    // Predicated region
    $region61: #{residual_block.4} parent=5 // pred_check
      %p2011 = pneg %p2010
    $region62: #{residual_block.4} parent=5 // pred_check_branch
      %2013 = sbr.rel (%p2011) target = $region64
    $region63: #{residual_block.4} parent=5 // pred_region
      %s2014 = ssub.s32 %s16, 2
      // Predicated region
      $region65: #{residual_block.4} parent=63 // pred_check
        %p2015 = pneg %p191
      $region66: #{residual_block.4} parent=63 // pred_check_branch
        %2017 = sbr.rel (%p2015) target = $region68
      $region67: #{residual_block.4} parent=63 // pred_region
        %p2018 = scmp.lt.s32.totalorder %s22, 1
        %s2019 = scalar_select %p2018, %s22, 1
        %s2020 = smul.addr %s2019, 8
        %s2021 = smul.addr %s2020, 8
        %s2022 = scalar_lea.vmem %s6, %s2021
      $region68: #{residual_block.4} parent=63 // pred_fallthru
        _
      // Predicated region
      $region69: #{residual_block.4} parent=63 // pred_check
        %p2023 = pneg %p217
      $region70: #{residual_block.4} parent=63 // pred_check_branch
        %2025 = sbr.rel (%p2023) target = $region72
      $region71: #{residual_block.4} parent=63 // pred_region
        %p2026 = scmp.lt.s32.totalorder %s22, 1
        %s2027 = scalar_select %p2026, %s22, 1
        %s2028 = smul.addr %s2027, 2
        %s2029 = scalar_lea.vmem %s7, %s2028
      $region72: #{residual_block.4} parent=63 // pred_fallthru
        _
      // Predicated region
      $region73: #{residual_block.4} parent=63 // pred_check
        %p2030 = pneg %p243
      $region74: #{residual_block.4} parent=63 // pred_check_branch
        %2032 = sbr.rel (%p2030) target = $region76
      $region75: #{residual_block.4} parent=63 // pred_region
        %p2033 = scmp.lt.s32.totalorder %s22, 1
        %s2034 = scalar_select %p2033, %s22, 1
        %s2035 = smul.addr %s2034, 8
        %s2036 = smul.addr %s2035, 8
        %s2037 = scalar_lea.vmem %s8, %s2036
      $region76: #{residual_block.4} parent=63 // pred_fallthru
        _
      // Predicated region
      $region77: #{residual_block.4} parent=63 // pred_check
        %p2038 = pneg %p269
      $region78: #{residual_block.4} parent=63 // pred_check_branch
        %2040 = sbr.rel (%p2038) target = $region80
      $region79: #{residual_block.4} parent=63 // pred_region
        %p2041 = scmp.lt.s32.totalorder %s22, 1
        %s2042 = scalar_select %p2041, %s22, 1
        %s2043 = smul.addr %s2042, 2
        %s2044 = scalar_lea.vmem %s9, %s2043
      $region80: #{residual_block.4} parent=63 // pred_fallthru
        _
    $region64: #{residual_block.4} parent=5 // pred_fallthru
      _
  $region6: #{residual_block.4} parent=0 // loop_footer
    %s20 = sadd.s32 1, %s16
  $region7: #{residual_block.4} parent=0 // loop_footer_branch
    %15 = sbr.rel target = $region3
  $region8: #{residual_block.4} parent=0 // loop_exit
    _

</llo_original>
